<compile_context>
chip_gen: v7x
topology: tpu7x:2x2x1
jax: 0.10.0
libtpu: 0.0.40
codegen_flags: <defaults>
</compile_context>

<pallas_src>
import functools
import math

import numpy as np
import jax
import jax.numpy as jnp
from jax.experimental import pallas as pl
from jax.experimental.pallas import tpu as pltpu


# ----------------------------------------------------------------------------
# small helpers (host / XLA side)
# ----------------------------------------------------------------------------

def _round_up(x, m):
    return (x + m - 1) // m * m


def _layer_norm(x, gamma, beta, eps=1e-5):
    mu = jnp.mean(x, axis=-1, keepdims=True)
    var = jnp.mean((x - mu) ** 2, axis=-1, keepdims=True)
    return (x - mu) * jax.lax.rsqrt(var + eps) * gamma + beta


def window_partition(x, window_size):
    B, H, W, C = x.shape
    x = x.reshape(B, H // window_size, window_size, W // window_size, window_size, C)
    return x.transpose(0, 1, 3, 2, 4, 5).reshape(-1, window_size, window_size, C)


def window_reverse(windows, window_size, H, W):
    B = windows.shape[0] // (H * W // window_size // window_size)
    x = windows.reshape(B, H // window_size, W // window_size, window_size, window_size, -1)
    return x.transpose(0, 1, 3, 2, 4, 5).reshape(B, H, W, -1)


def _relative_position_index(window_size):
    coords_h = np.arange(window_size)
    coords_w = np.arange(window_size)
    coords = np.stack(np.meshgrid(coords_h, coords_w, indexing="ij"))      # (2, ws, ws)
    coords_flatten = coords.reshape(2, -1)                                 # (2, N)
    rel = coords_flatten[:, :, None] - coords_flatten[:, None, :]          # (2, N, N)
    rel = rel.transpose(1, 2, 0).copy()                                    # (N, N, 2)
    rel[:, :, 0] += window_size - 1
    rel[:, :, 1] += window_size - 1
    rel[:, :, 0] *= 2 * window_size - 1
    return rel.sum(-1)                                                     # (N, N) int


def _calculate_mask(H, W, window_size, shift_size):
    img_mask = np.zeros((1, H, W, 1), dtype=np.float32)
    h_slices = (slice(0, -window_size), slice(-window_size, -shift_size),
                slice(-shift_size, None))
    w_slices = (slice(0, -window_size), slice(-window_size, -shift_size),
                slice(-shift_size, None))
    cnt = 0
    for h in h_slices:
        for w in w_slices:
            img_mask[:, h, w, :] = cnt
            cnt += 1
    mw = img_mask.reshape(1, H // window_size, window_size, W // window_size, window_size, 1)
    mw = mw.transpose(0, 1, 3, 2, 4, 5).reshape(-1, window_size * window_size)
    attn_mask = mw[:, None, :] - mw[:, :, None]
    attn_mask = np.where(attn_mask != 0, -100.0, 0.0).astype(np.float32)
    return jnp.asarray(attn_mask)                                          # (nW, N, N)


# ----------------------------------------------------------------------------
# Pallas kernel 1: fused MLP  (fc1 -> GELU -> fc2), hidden-tiled with accumulator
# ----------------------------------------------------------------------------

def _gelu_exact(x):
    return 0.5 * x * (1.0 + jax.lax.erf(x * (1.0 / math.sqrt(2.0))))


def _gelu_tanh(x):
    c = math.sqrt(2.0 / math.pi)
    return 0.5 * x * (1.0 + jnp.tanh(c * (x + 0.044715 * x * x * x)))


def _mlp_kernel(x_ref, w1_ref, b1_ref, w2_ref, b2_ref, o_ref, acc_ref, *, approximate):
    k = pl.program_id(1)

    @pl.when(k == 0)
    def _init():
        acc_ref[...] = jnp.zeros_like(acc_ref)

    # fc1 chunk: (tm, in_p) @ (in_p, th) + (1, th) -> f32
    h = jnp.dot(x_ref[...], w1_ref[...], preferred_element_type=jnp.float32)
    h = h + b1_ref[...]
    # GELU in f32 (exact erf matches torch.nn.GELU default; tanh variant uses EUP)
    h = _gelu_tanh(h) if approximate else _gelu_exact(h)
    # Dropout with p=0.0 is identity.
    # fc2 contribution of this hidden chunk, accumulated in f32 VMEM
    acc_ref[...] += jnp.dot(h.astype(w2_ref.dtype), w2_ref[...],
                            preferred_element_type=jnp.float32)

    @pl.when(k == pl.num_programs(1) - 1)
    def _finalize():
        o_ref[...] = (acc_ref[...] + b2_ref[...]).astype(o_ref.dtype)


def mlp_pallas(x, w1, b1, w2, b2, *, tm=256, th=512, approximate=False):
    """x: (..., in_features); weights stored transposed: (in, hidden), (hidden, out)."""
    in_f = x.shape[-1]
    hidden = w1.shape[1]
    out_f = w2.shape[1]
    lead = x.shape[:-1]

    x2d = x.reshape(-1, in_f)
    M = x2d.shape[0]

    # Lane-dense padding (multiples of 128 on feature dims) + token padding for the tile.
    in_p = _round_up(in_f, 128)
    out_p = _round_up(out_f, 128)
    th = min(th, _round_up(hidden, 128))
    hid_p = _round_up(hidden, th)
    tm = min(tm, _round_up(M, 8))            # use 128-multiples on v5e, 256+ on v6e/v7x
    m_p = _round_up(M, tm)

    x_p = jnp.pad(x2d, ((0, m_p - M), (0, in_p - in_f)))
    w1_p = jnp.pad(w1, ((0, in_p - in_f), (0, hid_p - hidden)))
    b1_p = jnp.pad(b1, (0, hid_p - hidden)).reshape(1, hid_p)
    w2_p = jnp.pad(w2, ((0, hid_p - hidden), (0, out_p - out_f)))
    b2_p = jnp.pad(b2, (0, out_p - out_f)).reshape(1, out_p)

    grid = (m_p // tm, hid_p // th)

    cost = pl.CostEstimate(
        flops=2 * M * (in_f * hidden + hidden * out_f),
        transcendentals=M * hidden,
        bytes_accessed=4 * (x_p.size + w1_p.size + b1_p.size + w2_p.size + b2_p.size
                            + m_p * out_p),
    )

    out2d = pl.pallas_call(
        functools.partial(_mlp_kernel, approximate=approximate),
        out_shape=jax.ShapeDtypeStruct((m_p, out_p), x.dtype),
        grid_spec=pltpu.PrefetchScalarGridSpec(
            num_scalar_prefetch=0,
            grid=grid,
            in_specs=[
                pl.BlockSpec((tm, in_p), lambda i, k: (i, 0)),
                pl.BlockSpec((in_p, th), lambda i, k: (0, k)),
                pl.BlockSpec((1, th), lambda i, k: (0, k)),
                pl.BlockSpec((th, out_p), lambda i, k: (k, 0)),
                pl.BlockSpec((1, out_p), lambda i, k: (0, 0)),
            ],
            out_specs=pl.BlockSpec((tm, out_p), lambda i, k: (i, 0)),
            scratch_shapes=[pltpu.VMEM((tm, out_p), jnp.float32)],
        ),
        compiler_params=pltpu.CompilerParams(
            dimension_semantics=("parallel", "arbitrary"),
            vmem_limit_bytes=64 * 1024 * 1024,
        ),
        cost_estimate=cost,
    )(x_p, w1_p, b1_p, w2_p, b2_p)

    return out2d[:M, :out_f].reshape(*lead, out_f)


# ----------------------------------------------------------------------------
# Pallas kernel 2: window attention core (QK^T * scale + rel-pos bias + mask,
# softmax, @V), gridded over windows, per-head loop unrolled.
# ----------------------------------------------------------------------------

def _window_attn_kernel(q_ref, k_ref, v_ref, bias_ref, mask_ref, o_ref, *,
                        num_heads, head_dim, scale):
    q = q_ref[0]          # (N, C)
    k = k_ref[0]          # (N, C)
    v = v_ref[0]          # (N, C)
    m = mask_ref[0]       # (N, N)
    for h in range(num_heads):
        lo = h * head_dim
        hi = lo + head_dim
        qh = q[:, lo:hi].astype(jnp.float32) * scale
        kh = k[:, lo:hi].astype(jnp.float32)
        vh = v[:, lo:hi].astype(jnp.float32)
        # scores = qh @ kh^T
        s = jax.lax.dot_general(qh, kh, dimension_numbers=(((1,), (1,)), ((), ())),
                                preferred_element_type=jnp.float32)
        s = s + bias_ref[h] + m
        # numerically-stable softmax (mathematically identical to torch softmax)
        s = s - jnp.max(s, axis=-1, keepdims=True)
        p = jnp.exp(s)
        p = p / jnp.sum(p, axis=-1, keepdims=True)
        oh = jnp.dot(p, vh, preferred_element_type=jnp.float32)
        o_ref[0, :, lo:hi] = oh.astype(o_ref.dtype)


def window_attention_pallas(q, k, v, bias, mask, *, num_heads):
    """q/k/v: (B_, N, C) projected windows; bias: (nh, N, N); mask: (B_, N, N)."""
    B_, N, C = q.shape
    head_dim = C // num_heads
    scale = head_dim ** (-0.5)
    return pl.pallas_call(
        functools.partial(_window_attn_kernel, num_heads=num_heads,
                          head_dim=head_dim, scale=scale),
        out_shape=jax.ShapeDtypeStruct((B_, N, C), q.dtype),
        grid_spec=pltpu.PrefetchScalarGridSpec(
            num_scalar_prefetch=0,
            grid=(B_,),
            in_specs=[
                pl.BlockSpec((1, N, C), lambda b: (b, 0, 0)),
                pl.BlockSpec((1, N, C), lambda b: (b, 0, 0)),
                pl.BlockSpec((1, N, C), lambda b: (b, 0, 0)),
                pl.BlockSpec((num_heads, N, N), lambda b: (0, 0, 0)),
                pl.BlockSpec((1, N, N), lambda b: (b, 0, 0)),
            ],
            out_specs=pl.BlockSpec((1, N, C), lambda b: (b, 0, 0)),
        ),
        compiler_params=pltpu.CompilerParams(dimension_semantics=("parallel",)),
    )(q, k, v, bias, mask)


# ----------------------------------------------------------------------------
# RefSwinTransformerBlock / RefBasicLayer forward (Pallas path)
# ----------------------------------------------------------------------------

def _swin_block_pallas(lr_up, ref_down_up, ref, lr_up_size, p, *, window_size,
                       shift_size, num_heads, input_resolution, mlp_tm, mlp_th):
    H, W = lr_up_size
    B, L, C = lr_up.shape
    assert L == H * W, "input feature has wrong size"
    if min(input_resolution) <= window_size:
        shift_size = 0
        window_size = min(input_resolution)
    ws = window_size
    N = ws * ws
    hd = C // num_heads

    shortcut = lr_up
    xq = _layer_norm(lr_up, p["norm1_g"], p["norm1_b"]).reshape(B, H, W, C)
    xk = _layer_norm(ref_down_up, p["norm1_g"], p["norm1_b"]).reshape(B, H, W, C)
    xv = _layer_norm(ref, p["norm1_g"], p["norm1_b"]).reshape(B, H, W, C)
    if shift_size > 0:
        xq = jnp.roll(xq, (-shift_size, -shift_size), axis=(1, 2))
        xk = jnp.roll(xk, (-shift_size, -shift_size), axis=(1, 2))
        xv = jnp.roll(xv, (-shift_size, -shift_size), axis=(1, 2))

    qw = window_partition(xq, ws).reshape(-1, N, C)
    kw = window_partition(xk, ws).reshape(-1, N, C)
    vw = window_partition(xv, ws).reshape(-1, N, C)
    B_ = qw.shape[0]

    # q/k/v projections are small CxC GEMMs; kept in XLA (attention core + MLP are Pallas).
    q = qw @ p["q_w"] + p["q_b"]
    k = kw @ p["k_w"] + p["k_b"]
    v = vw @ p["v_w"] + p["v_b"]

    idx = _relative_position_index(ws).reshape(-1)
    bias = p["rpb_table"][jnp.asarray(idx)].reshape(N, N, num_heads).transpose(2, 0, 1)
    if shift_size > 0:
        mask = _calculate_mask(H, W, ws, shift_size)                 # (nW, N, N)
        mask_full = jnp.tile(mask, (B, 1, 1)).astype(q.dtype)        # (B_, N, N)
    else:
        mask_full = jnp.zeros((B_, N, N), dtype=q.dtype)

    attn_out = window_attention_pallas(q, k, v, bias.astype(q.dtype), mask_full,
                                       num_heads=num_heads)

    # Faithfully replicate the original module's `(attn @ v).transpose(1, 2).reshape(B_, N, C)`
    # where q/k/v carry a leading singleton dim (so that transpose swaps the window and head
    # axes, not heads and tokens).
    x = attn_out.reshape(B_, N, num_heads, hd).transpose(2, 0, 1, 3).reshape(B_, N, C)
    x = x @ p["proj_w"] + p["proj_b"]

    x = x.reshape(-1, ws, ws, C)
    x = window_reverse(x, ws, H, W)
    if shift_size > 0:
        x = jnp.roll(x, (shift_size, shift_size), axis=(1, 2))
    x = x.reshape(B, H * W, C)

    x = shortcut + x                                                  # drop_path = identity
    x = x + mlp_pallas(_layer_norm(x, p["norm2_g"], p["norm2_b"]),
                       p["fc1_w"], p["fc1_b"], p["fc2_w"], p["fc2_b"],
                       tm=mlp_tm, th=mlp_th)
    return x


def ref_basic_layer_pallas(lr_up, ref_down_up, ref, lr_up_size, block_params, *,
                           window_size, num_heads, input_resolution,
                           mlp_tm=256, mlp_th=512):
    x = lr_up
    for i, p in enumerate(block_params):
        shift = 0 if i % 2 == 0 else window_size // 2
        x = _swin_block_pallas(x, ref_down_up, ref, lr_up_size, p,
                               window_size=window_size, shift_size=shift,
                               num_heads=num_heads, input_resolution=input_resolution,
                               mlp_tm=mlp_tm, mlp_th=mlp_th)
    return x  # downsample=None in this configuration
    # TODO(synk): torch.utils.checkpoint path is training-only; forward semantics unchanged.


# ----------------------------------------------------------------------------
# Pure-JAX reference: literal translation of the PyTorch forward (for checking)
# ----------------------------------------------------------------------------

def _reference_window_attention(lr_w, rdu_w, ref_w, p, mask, *, num_heads, window_size):
    B_, N, C = lr_w.shape
    hd = C // num_heads
    scale = hd ** (-0.5)
    q = (lr_w @ p["q_w"] + p["q_b"]).reshape(B_, N, 1, num_heads, hd).transpose(2, 0, 3, 1, 4)
    k = (rdu_w @ p["k_w"] + p["k_b"]).reshape(B_, N, 1, num_heads, hd).transpose(2, 0, 3, 1, 4)
    v = (ref_w @ p["v_w"] + p["v_b"]).reshape(B_, N, 1, num_heads, hd).transpose(2, 0, 3, 1, 4)
    q = q * scale
    attn = q @ jnp.swapaxes(k, -2, -1)                               # (1, B_, nh, N, N)
    idx = _relative_position_index(window_size).reshape(-1)
    bias = p["rpb_table"][jnp.asarray(idx)].reshape(N, N, num_heads).transpose(2, 0, 1)
    attn = attn + bias[None]
    if mask is not None:
        nW = mask.shape[0]
        attn = attn.reshape(B_ // nW, nW, num_heads, N, N) + mask[None, :, None]
        attn = attn.reshape(-1, num_heads, N, N)
    attn = jax.nn.softmax(attn, axis=-1)
    x = jnp.matmul(attn, v)                                          # (1, B_, nh, N, hd)
    x = jnp.swapaxes(x, 1, 2).reshape(B_, N, C)                      # torch's transpose(1, 2)
    return x @ p["proj_w"] + p["proj_b"]


def _reference_block(lr_up, ref_down_up, ref, lr_up_size, p, *, window_size,
                     shift_size, num_heads, input_resolution):
    H, W = lr_up_size
    B, L, C = lr_up.shape
    if min(input_resolution) <= window_size:
        shift_size = 0
        window_size = min(input_resolution)
    ws = window_size
    shortcut = lr_up
    xq = _layer_norm(lr_up, p["norm1_g"], p["norm1_b"]).reshape(B, H, W, C)
    xk = _layer_norm(ref_down_up, p["norm1_g"], p["norm1_b"]).reshape(B, H, W, C)
    xv = _layer_norm(ref, p["norm1_g"], p["norm1_b"]).reshape(B, H, W, C)
    if shift_size > 0:
        xq = jnp.roll(xq, (-shift_size, -shift_size), axis=(1, 2))
        xk = jnp.roll(xk, (-shift_size, -shift_size), axis=(1, 2))
        xv = jnp.roll(xv, (-shift_size, -shift_size), axis=(1, 2))
    qw = window_partition(xq, ws).reshape(-1, ws * ws, C)
    kw = window_partition(xk, ws).reshape(-1, ws * ws, C)
    vw = window_partition(xv, ws).reshape(-1, ws * ws, C)
    mask = _calculate_mask(H, W, ws, shift_size) if shift_size > 0 else None
    aw = _reference_window_attention(qw, kw, vw, p, mask,
                                     num_heads=num_heads, window_size=ws)
    aw = aw.reshape(-1, ws, ws, C)
    x = window_reverse(aw, ws, H, W)
    if shift_size > 0:
        x = jnp.roll(x, (shift_size, shift_size), axis=(1, 2))
    x = x.reshape(B, H * W, C)
    x = shortcut + x
    h = _layer_norm(x, p["norm2_g"], p["norm2_b"])
    h = h @ p["fc1_w"] + p["fc1_b"]
    h = 0.5 * h * (1.0 + jax.lax.erf(h / math.sqrt(2.0)))
    return x + (h @ p["fc2_w"] + p["fc2_b"])


def ref_basic_layer_reference(lr_up, ref_down_up, ref, lr_up_size, block_params, *,
                              window_size, num_heads, input_resolution):
    x = lr_up
    for i, p in enumerate(block_params):
        shift = 0 if i % 2 == 0 else window_size // 2
        x = _reference_block(x, ref_down_up, ref, lr_up_size, p,
                             window_size=window_size, shift_size=shift,
                             num_heads=num_heads, input_resolution=input_resolution)
    return x


# ----------------------------------------------------------------------------
# parameter init + test
# ----------------------------------------------------------------------------

def _init_block_params(key, dim, num_heads, hidden, window_size):
    ks = jax.random.split(key, 13)

    def linear(kw, kb, fan_in, fan_out):
        bound = 1.0 / math.sqrt(fan_in)
        w = jax.random.uniform(kw, (fan_in, fan_out), minval=-bound, maxval=bound,
                               dtype=jnp.float32)
        b = jax.random.uniform(kb, (fan_out,), minval=-bound, maxval=bound,
                               dtype=jnp.float32)
        return w, b

    q_w, q_b = linear(ks[0], ks[1], dim, dim)
    k_w, k_b = linear(ks[2], ks[3], dim, dim)
    v_w, v_b = linear(ks[4], ks[5], dim, dim)
    proj_w, proj_b = linear(ks[6], ks[7], dim, dim)
    fc1_w, fc1_b = linear(ks[8], ks[9], dim, hidden)
    fc2_w, fc2_b = linear(ks[10], ks[11], hidden, dim)
    rpb = 0.02 * jax.random.normal(
        ks[12], ((2 * window_size - 1) ** 2, num_heads), dtype=jnp.float32)
    return dict(
        norm1_g=jnp.ones((dim,), jnp.float32), norm1_b=jnp.zeros((dim,), jnp.float32),
        norm2_g=jnp.ones((dim,), jnp.float32), norm2_b=jnp.zeros((dim,), jnp.float32),
        q_w=q_w, q_b=q_b, k_w=k_w, k_b=k_b, v_w=v_w, v_b=v_b,
        proj_w=proj_w, proj_b=proj_b,
        fc1_w=fc1_w, fc1_b=fc1_b, fc2_w=fc2_w, fc2_b=fc2_b,
        rpb_table=rpb,
    )


if __name__ == "__main__":
    B = 2
    H = W = 16
    C = 32
    window_size = 8
    num_heads = 4
    depth = 2                  # one W-MSA block + one shifted SW-MSA block
    mlp_ratio = 4.0
    hidden = int(C * mlp_ratio)

    key = jax.random.PRNGKey(0)
    k_in, k_par = jax.random.split(key)
    k1, k2, k3 = jax.random.split(k_in, 3)
    lr_up = jax.random.normal(k1, (B, H * W, C), dtype=jnp.float32)
    ref_down_up = jax.random.normal(k2, (B, H * W, C), dtype=jnp.float32)
    ref_img = jax.random.normal(k3, (B, H * W, C), dtype=jnp.float32)

    block_params = [
        _init_block_params(k, C, num_heads, hidden, window_size)
        for k in jax.random.split(k_par, depth)
    ]

    fwd = jax.jit(lambda a, b, c, ps: ref_basic_layer_pallas(
        a, b, c, (H, W), ps, window_size=window_size, num_heads=num_heads,
        input_resolution=(H, W)))
    out = jax.block_until_ready(fwd(lr_up, ref_down_up, ref_img, block_params))

    ref_fwd = jax.jit(lambda a, b, c, ps: ref_basic_layer_reference(
        a, b, c, (H, W), ps, window_size=window_size, num_heads=num_heads,
        input_resolution=(H, W)))
    expected = jax.block_until_ready(ref_fwd(lr_up, ref_down_up, ref_img, block_params))

    assert out.shape == (B, H * W, C)
    max_err = float(jnp.max(jnp.abs(out - expected)))
    assert jnp.allclose(out, expected, atol=2e-2, rtol=2e-2), f"max_err={max_err}"

    print("KERNEL_OK")
</pallas_src>

<mosaic_0001>
module attributes {stable_mosaic.version = 11 : i64} {
  func.func @_window_attn_kernel(%arg0: i32, %arg1: memref<1x64x32xf32, #tpu.memory_space<vmem>>, %arg2: memref<1x64x32xf32, #tpu.memory_space<vmem>>, %arg3: memref<1x64x32xf32, #tpu.memory_space<vmem>>, %arg4: memref<4x64x64xf32, #tpu.memory_space<vmem>>, %arg5: memref<1x64x64xf32, #tpu.memory_space<vmem>>, %arg6: memref<1x64x32xf32, #tpu.memory_space<vmem>>) attributes {dimension_semantics = [#tpu.dimension_semantics<parallel>], iteration_bounds = array<i64: 8>, scalar_prefetch = 0 : i64, scratch_operands = 0 : i64, tpu.core_type = #tpu.core_type<tc>, window_params = [{transform_indices = @transform_0, window_bounds = array<i64: 1, 64, 32>}, {transform_indices = @transform_1, window_bounds = array<i64: 1, 64, 32>}, {transform_indices = @transform_2, window_bounds = array<i64: 1, 64, 32>}, {pipeline_mode = #tpu.pipeline_mode<synchronous>, transform_indices = @transform_3, window_bounds = array<i64: 4, 64, 64>}, {transform_indices = @transform_4, window_bounds = array<i64: 1, 64, 64>}, {transform_indices = @transform_5, window_bounds = array<i64: 1, 64, 32>}]} {
    %c0 = arith.constant 0 : index
    %c0_0 = arith.constant 0 : index
    %c0_1 = arith.constant 0 : index
    %0 = vector.load %arg1[%c0, %c0_0, %c0_1] : memref<1x64x32xf32, #tpu.memory_space<vmem>>, vector<1x64x32xf32>
    %1 = vector.shape_cast %0 : vector<1x64x32xf32> to vector<64x32xf32>
    %c0_2 = arith.constant 0 : index
    %c0_3 = arith.constant 0 : index
    %c0_4 = arith.constant 0 : index
    %2 = vector.load %arg2[%c0_2, %c0_3, %c0_4] : memref<1x64x32xf32, #tpu.memory_space<vmem>>, vector<1x64x32xf32>
    %3 = vector.shape_cast %2 : vector<1x64x32xf32> to vector<64x32xf32>
    %c0_5 = arith.constant 0 : index
    %c0_6 = arith.constant 0 : index
    %c0_7 = arith.constant 0 : index
    %4 = vector.load %arg3[%c0_5, %c0_6, %c0_7] : memref<1x64x32xf32, #tpu.memory_space<vmem>>, vector<1x64x32xf32>
    %5 = vector.shape_cast %4 : vector<1x64x32xf32> to vector<64x32xf32>
    %c0_8 = arith.constant 0 : index
    %c0_9 = arith.constant 0 : index
    %c0_10 = arith.constant 0 : index
    %6 = vector.load %arg5[%c0_8, %c0_9, %c0_10] : memref<1x64x64xf32, #tpu.memory_space<vmem>>, vector<1x64x64xf32>
    %7 = vector.shape_cast %6 : vector<1x64x64xf32> to vector<64x64xf32>
    %8 = vector.extract_strided_slice %1 {offsets = [0, 0], sizes = [64, 8], strides = [1, 1]} : vector<64x32xf32> to vector<64x8xf32>
    %cst = arith.constant 0.353553385 : f32
    %9 = vector.broadcast %cst : f32 to vector<64x8xf32>
    %10 = arith.mulf %8, %9 : vector<64x8xf32>
    %11 = vector.extract_strided_slice %3 {offsets = [0, 0], sizes = [64, 8], strides = [1, 1]} : vector<64x32xf32> to vector<64x8xf32>
    %12 = vector.extract_strided_slice %5 {offsets = [0, 0], sizes = [64, 8], strides = [1, 1]} : vector<64x32xf32> to vector<64x8xf32>
    %cst_11 = arith.constant dense<0.000000e+00> : vector<64x64xf32>
    %13 = tpu.matmul %10, %11, %cst_11 {dimension_numbers = #tpu.dot_dimension_numbers<[1], [1], [0], [0], [0, 0, 1, 0], [], []>} : vector<64x8xf32>, vector<64x8xf32>, vector<64x64xf32> -> vector<64x64xf32>
    %c0_12 = arith.constant 0 : index
    %c0_13 = arith.constant 0 : index
    %c0_14 = arith.constant 0 : index
    %14 = vector.load %arg4[%c0_12, %c0_13, %c0_14] : memref<4x64x64xf32, #tpu.memory_space<vmem>>, vector<1x64x64xf32>
    %15 = vector.shape_cast %14 : vector<1x64x64xf32> to vector<64x64xf32>
    %16 = arith.addf %13, %15 : vector<64x64xf32>
    %17 = arith.addf %16, %7 : vector<64x64xf32>
    %cst_15 = arith.constant dense<0xFF800000> : vector<64xf32>
    %18 = vector.multi_reduction <maximumf>, %17, %cst_15 [1] : vector<64x64xf32> to vector<64xf32>
    %19 = vector.shape_cast %18 : vector<64xf32> to vector<64x1xf32>
    %20 = vector.broadcast %19 : vector<64x1xf32> to vector<64x64xf32>
    %21 = arith.subf %17, %20 : vector<64x64xf32>
    %22 = math.exp %21 : vector<64x64xf32>
    %cst_16 = arith.constant dense<0.000000e+00> : vector<64xf32>
    %23 = vector.multi_reduction <add>, %22, %cst_16 [1] : vector<64x64xf32> to vector<64xf32>
    %24 = vector.shape_cast %23 : vector<64xf32> to vector<64x1xf32>
    %25 = vector.broadcast %24 : vector<64x1xf32> to vector<64x64xf32>
    %26 = arith.divf %22, %25 : vector<64x64xf32>
    %cst_17 = arith.constant dense<0.000000e+00> : vector<64x8xf32>
    %27 = tpu.matmul %26, %12, %cst_17 {dimension_numbers = #tpu.dot_dimension_numbers<[1], [0], [0], [1], [0, 0, 1, 1], [], []>} : vector<64x64xf32>, vector<64x8xf32>, vector<64x8xf32> -> vector<64x8xf32>
    %c0_18 = arith.constant 0 : index
    %c0_19 = arith.constant 0 : index
    %c0_20 = arith.constant 0 : index
    %28 = vector.load %arg6[%c0_18, %c0_19, %c0_20] : memref<1x64x32xf32, #tpu.memory_space<vmem>>, vector<1x64x8xf32>
    %29 = vector.shape_cast %28 : vector<1x64x8xf32> to vector<64x8xf32>
    %30 = vector.shape_cast %27 : vector<64x8xf32> to vector<1x64x8xf32>
    tpu.vector_store %arg6[%c0_18, %c0_19, %c0_20], %30 {strides = array<i32>} : memref<1x64x32xf32, #tpu.memory_space<vmem>>, vector<1x64x8xf32>,
    %31 = vector.extract_strided_slice %1 {offsets = [0, 8], sizes = [64, 8], strides = [1, 1]} : vector<64x32xf32> to vector<64x8xf32>
    %cst_21 = arith.constant 0.353553385 : f32
    %32 = vector.broadcast %cst_21 : f32 to vector<64x8xf32>
    %33 = arith.mulf %31, %32 : vector<64x8xf32>
    %34 = vector.extract_strided_slice %3 {offsets = [0, 8], sizes = [64, 8], strides = [1, 1]} : vector<64x32xf32> to vector<64x8xf32>
    %35 = vector.extract_strided_slice %5 {offsets = [0, 8], sizes = [64, 8], strides = [1, 1]} : vector<64x32xf32> to vector<64x8xf32>
    %cst_22 = arith.constant dense<0.000000e+00> : vector<64x64xf32>
    %36 = tpu.matmul %33, %34, %cst_22 {dimension_numbers = #tpu.dot_dimension_numbers<[1], [1], [0], [0], [0, 0, 1, 0], [], []>} : vector<64x8xf32>, vector<64x8xf32>, vector<64x64xf32> -> vector<64x64xf32>
    %c1 = arith.constant 1 : index
    %c0_23 = arith.constant 0 : index
    %c0_24 = arith.constant 0 : index
    %37 = vector.load %arg4[%c1, %c0_23, %c0_24] : memref<4x64x64xf32, #tpu.memory_space<vmem>>, vector<1x64x64xf32>
    %38 = vector.shape_cast %37 : vector<1x64x64xf32> to vector<64x64xf32>
    %39 = arith.addf %36, %38 : vector<64x64xf32>
    %40 = arith.addf %39, %7 : vector<64x64xf32>
    %cst_25 = arith.constant dense<0xFF800000> : vector<64xf32>
    %41 = vector.multi_reduction <maximumf>, %40, %cst_25 [1] : vector<64x64xf32> to vector<64xf32>
    %42 = vector.shape_cast %41 : vector<64xf32> to vector<64x1xf32>
    %43 = vector.broadcast %42 : vector<64x1xf32> to vector<64x64xf32>
    %44 = arith.subf %40, %43 : vector<64x64xf32>
    %45 = math.exp %44 : vector<64x64xf32>
    %cst_26 = arith.constant dense<0.000000e+00> : vector<64xf32>
    %46 = vector.multi_reduction <add>, %45, %cst_26 [1] : vector<64x64xf32> to vector<64xf32>
    %47 = vector.shape_cast %46 : vector<64xf32> to vector<64x1xf32>
    %48 = vector.broadcast %47 : vector<64x1xf32> to vector<64x64xf32>
    %49 = arith.divf %45, %48 : vector<64x64xf32>
    %cst_27 = arith.constant dense<0.000000e+00> : vector<64x8xf32>
    %50 = tpu.matmul %49, %35, %cst_27 {dimension_numbers = #tpu.dot_dimension_numbers<[1], [0], [0], [1], [0, 0, 1, 1], [], []>} : vector<64x64xf32>, vector<64x8xf32>, vector<64x8xf32> -> vector<64x8xf32>
    %c0_28 = arith.constant 0 : index
    %c0_29 = arith.constant 0 : index
    %c8 = arith.constant 8 : index
    %51 = vector.load %arg6[%c0_28, %c0_29, %c8] : memref<1x64x32xf32, #tpu.memory_space<vmem>>, vector<1x64x8xf32>
    %52 = vector.shape_cast %51 : vector<1x64x8xf32> to vector<64x8xf32>
    %53 = vector.shape_cast %50 : vector<64x8xf32> to vector<1x64x8xf32>
    tpu.vector_store %arg6[%c0_28, %c0_29, %c8], %53 {strides = array<i32>} : memref<1x64x32xf32, #tpu.memory_space<vmem>>, vector<1x64x8xf32>,
    %54 = vector.extract_strided_slice %1 {offsets = [0, 16], sizes = [64, 8], strides = [1, 1]} : vector<64x32xf32> to vector<64x8xf32>
    %cst_30 = arith.constant 0.353553385 : f32
    %55 = vector.broadcast %cst_30 : f32 to vector<64x8xf32>
    %56 = arith.mulf %54, %55 : vector<64x8xf32>
    %57 = vector.extract_strided_slice %3 {offsets = [0, 16], sizes = [64, 8], strides = [1, 1]} : vector<64x32xf32> to vector<64x8xf32>
    %58 = vector.extract_strided_slice %5 {offsets = [0, 16], sizes = [64, 8], strides = [1, 1]} : vector<64x32xf32> to vector<64x8xf32>
    %cst_31 = arith.constant dense<0.000000e+00> : vector<64x64xf32>
    %59 = tpu.matmul %56, %57, %cst_31 {dimension_numbers = #tpu.dot_dimension_numbers<[1], [1], [0], [0], [0, 0, 1, 0], [], []>} : vector<64x8xf32>, vector<64x8xf32>, vector<64x64xf32> -> vector<64x64xf32>
    %c2 = arith.constant 2 : index
    %c0_32 = arith.constant 0 : index
    %c0_33 = arith.constant 0 : index
    %60 = vector.load %arg4[%c2, %c0_32, %c0_33] : memref<4x64x64xf32, #tpu.memory_space<vmem>>, vector<1x64x64xf32>
    %61 = vector.shape_cast %60 : vector<1x64x64xf32> to vector<64x64xf32>
    %62 = arith.addf %59, %61 : vector<64x64xf32>
    %63 = arith.addf %62, %7 : vector<64x64xf32>
    %cst_34 = arith.constant dense<0xFF800000> : vector<64xf32>
    %64 = vector.multi_reduction <maximumf>, %63, %cst_34 [1] : vector<64x64xf32> to vector<64xf32>
    %65 = vector.shape_cast %64 : vector<64xf32> to vector<64x1xf32>
    %66 = vector.broadcast %65 : vector<64x1xf32> to vector<64x64xf32>
    %67 = arith.subf %63, %66 : vector<64x64xf32>
    %68 = math.exp %67 : vector<64x64xf32>
    %cst_35 = arith.constant dense<0.000000e+00> : vector<64xf32>
    %69 = vector.multi_reduction <add>, %68, %cst_35 [1] : vector<64x64xf32> to vector<64xf32>
    %70 = vector.shape_cast %69 : vector<64xf32> to vector<64x1xf32>
    %71 = vector.broadcast %70 : vector<64x1xf32> to vector<64x64xf32>
    %72 = arith.divf %68, %71 : vector<64x64xf32>
    %cst_36 = arith.constant dense<0.000000e+00> : vector<64x8xf32>
    %73 = tpu.matmul %72, %58, %cst_36 {dimension_numbers = #tpu.dot_dimension_numbers<[1], [0], [0], [1], [0, 0, 1, 1], [], []>} : vector<64x64xf32>, vector<64x8xf32>, vector<64x8xf32> -> vector<64x8xf32>
    %c0_37 = arith.constant 0 : index
    %c0_38 = arith.constant 0 : index
    %c16 = arith.constant 16 : index
    %74 = vector.load %arg6[%c0_37, %c0_38, %c16] : memref<1x64x32xf32, #tpu.memory_space<vmem>>, vector<1x64x8xf32>
    %75 = vector.shape_cast %74 : vector<1x64x8xf32> to vector<64x8xf32>
    %76 = vector.shape_cast %73 : vector<64x8xf32> to vector<1x64x8xf32>
    tpu.vector_store %arg6[%c0_37, %c0_38, %c16], %76 {strides = array<i32>} : memref<1x64x32xf32, #tpu.memory_space<vmem>>, vector<1x64x8xf32>,
    %77 = vector.extract_strided_slice %1 {offsets = [0, 24], sizes = [64, 8], strides = [1, 1]} : vector<64x32xf32> to vector<64x8xf32>
    %cst_39 = arith.constant 0.353553385 : f32
    %78 = vector.broadcast %cst_39 : f32 to vector<64x8xf32>
    %79 = arith.mulf %77, %78 : vector<64x8xf32>
    %80 = vector.extract_strided_slice %3 {offsets = [0, 24], sizes = [64, 8], strides = [1, 1]} : vector<64x32xf32> to vector<64x8xf32>
    %81 = vector.extract_strided_slice %5 {offsets = [0, 24], sizes = [64, 8], strides = [1, 1]} : vector<64x32xf32> to vector<64x8xf32>
    %cst_40 = arith.constant dense<0.000000e+00> : vector<64x64xf32>
    %82 = tpu.matmul %79, %80, %cst_40 {dimension_numbers = #tpu.dot_dimension_numbers<[1], [1], [0], [0], [0, 0, 1, 0], [], []>} : vector<64x8xf32>, vector<64x8xf32>, vector<64x64xf32> -> vector<64x64xf32>
    %c3 = arith.constant 3 : index
    %c0_41 = arith.constant 0 : index
    %c0_42 = arith.constant 0 : index
    %83 = vector.load %arg4[%c3, %c0_41, %c0_42] : memref<4x64x64xf32, #tpu.memory_space<vmem>>, vector<1x64x64xf32>
    %84 = vector.shape_cast %83 : vector<1x64x64xf32> to vector<64x64xf32>
    %85 = arith.addf %82, %84 : vector<64x64xf32>
    %86 = arith.addf %85, %7 : vector<64x64xf32>
    %cst_43 = arith.constant dense<0xFF800000> : vector<64xf32>
    %87 = vector.multi_reduction <maximumf>, %86, %cst_43 [1] : vector<64x64xf32> to vector<64xf32>
    %88 = vector.shape_cast %87 : vector<64xf32> to vector<64x1xf32>
    %89 = vector.broadcast %88 : vector<64x1xf32> to vector<64x64xf32>
    %90 = arith.subf %86, %89 : vector<64x64xf32>
    %91 = math.exp %90 : vector<64x64xf32>
    %cst_44 = arith.constant dense<0.000000e+00> : vector<64xf32>
    %92 = vector.multi_reduction <add>, %91, %cst_44 [1] : vector<64x64xf32> to vector<64xf32>
    %93 = vector.shape_cast %92 : vector<64xf32> to vector<64x1xf32>
    %94 = vector.broadcast %93 : vector<64x1xf32> to vector<64x64xf32>
    %95 = arith.divf %91, %94 : vector<64x64xf32>
    %cst_45 = arith.constant dense<0.000000e+00> : vector<64x8xf32>
    %96 = tpu.matmul %95, %81, %cst_45 {dimension_numbers = #tpu.dot_dimension_numbers<[1], [0], [0], [1], [0, 0, 1, 1], [], []>} : vector<64x64xf32>, vector<64x8xf32>, vector<64x8xf32> -> vector<64x8xf32>
    %c0_46 = arith.constant 0 : index
    %c0_47 = arith.constant 0 : index
    %c24 = arith.constant 24 : index
    %97 = vector.load %arg6[%c0_46, %c0_47, %c24] : memref<1x64x32xf32, #tpu.memory_space<vmem>>, vector<1x64x8xf32>
    %98 = vector.shape_cast %97 : vector<1x64x8xf32> to vector<64x8xf32>
    %99 = vector.shape_cast %96 : vector<64x8xf32> to vector<1x64x8xf32>
    tpu.vector_store %arg6[%c0_46, %c0_47, %c24], %99 {strides = array<i32>} : memref<1x64x32xf32, #tpu.memory_space<vmem>>, vector<1x64x8xf32>,
    return
  }
  func.func @transform_0(%arg0: i32) -> (i32, i32, i32) {
    %c0_i32 = arith.constant 0 : i32
    %c0_i32_0 = arith.constant 0 : i32
    %c0_i32_1 = arith.constant 0 : i32
    return %arg0, %c0_i32, %c0_i32_0 : i32, i32, i32
  }
  func.func @transform_1(%arg0: i32) -> (i32, i32, i32) {
    %c0_i32 = arith.constant 0 : i32
    %c0_i32_0 = arith.constant 0 : i32
    %c0_i32_1 = arith.constant 0 : i32
    return %arg0, %c0_i32, %c0_i32_0 : i32, i32, i32
  }
  func.func @transform_2(%arg0: i32) -> (i32, i32, i32) {
    %c0_i32 = arith.constant 0 : i32
    %c0_i32_0 = arith.constant 0 : i32
    %c0_i32_1 = arith.constant 0 : i32
    return %arg0, %c0_i32, %c0_i32_0 : i32, i32, i32
  }
  func.func @transform_3(%arg0: i32) -> (i32, i32, i32) {
    %c0_i32 = arith.constant 0 : i32
    %c0_i32_0 = arith.constant 0 : i32
    %c0_i32_1 = arith.constant 0 : i32
    %c0_i32_2 = arith.constant 0 : i32
    return %c0_i32, %c0_i32_0, %c0_i32_1 : i32, i32, i32
  }
  func.func @transform_4(%arg0: i32) -> (i32, i32, i32) {
    %c0_i32 = arith.constant 0 : i32
    %c0_i32_0 = arith.constant 0 : i32
    %c0_i32_1 = arith.constant 0 : i32
    return %arg0, %c0_i32, %c0_i32_0 : i32, i32, i32
  }
  func.func @transform_5(%arg0: i32) -> (i32, i32, i32) {
    %c0_i32 = arith.constant 0 : i32
    %c0_i32_0 = arith.constant 0 : i32
    %c0_i32_1 = arith.constant 0 : i32
    return %arg0, %c0_i32, %c0_i32_0 : i32, i32, i32
  }
}

module attributes {stable_mosaic.version = 11 : i64} {
  func.func @_mlp_kernel(%arg0: i32, %arg1: i32, %arg2: memref<256x128xf32, #tpu.memory_space<vmem>>, %arg3: memref<128x128xf32, #tpu.memory_space<vmem>>, %arg4: memref<1x128xf32, #tpu.memory_space<vmem>>, %arg5: memref<128x128xf32, #tpu.memory_space<vmem>>, %arg6: memref<1x128xf32, #tpu.memory_space<vmem>>, %arg7: memref<256x128xf32, #tpu.memory_space<vmem>>, %arg8: memref<256x128xf32, #tpu.memory_space<vmem>>) attributes {dimension_semantics = [#tpu.dimension_semantics<parallel>, #tpu.dimension_semantics<arbitrary>], iteration_bounds = array<i64: 2, 1>, scalar_prefetch = 0 : i64, scratch_operands = 1 : i64, tpu.core_type = #tpu.core_type<tc>, window_params = [{transform_indices = @transform_0, window_bounds = array<i64: 256, 128>}, {transform_indices = @transform_1, window_bounds = array<i64: 128, 128>}, {transform_indices = @transform_2, window_bounds = array<i64: 1, 128>}, {transform_indices = @transform_3, window_bounds = array<i64: 128, 128>}, {pipeline_mode = #tpu.pipeline_mode<synchronous>, transform_indices = @transform_4, window_bounds = array<i64: 1, 128>}, {transform_indices = @transform_5, window_bounds = array<i64: 256, 128>}]} {
    %c0_i32 = arith.constant 0 : i32
    %0 = arith.cmpi eq, %arg1, %c0_i32 : i32
    %1 = arith.extui %0 : i1 to i32
    %c0_i32_0 = arith.constant 0 : i32
    %2 = arith.cmpi ne, %1, %c0_i32_0 : i32
    scf.if %2 {
      %cst_18 = arith.constant 0.000000e+00 : f32
      %25 = vector.broadcast %cst_18 : f32 to vector<256x128xf32>
      %c0_19 = arith.constant 0 : index
      %c0_20 = arith.constant 0 : index
      %26 = vector.load %arg8[%c0_19, %c0_20] : memref<256x128xf32, #tpu.memory_space<vmem>>, vector<256x128xf32>
      tpu.vector_store %arg8[%c0_19, %c0_20], %25 {strides = array<i32>} : memref<256x128xf32, #tpu.memory_space<vmem>>, vector<256x128xf32>,
    } else {
    }
    %c0 = arith.constant 0 : index
    %c0_1 = arith.constant 0 : index
    %3 = vector.load %arg2[%c0, %c0_1] : memref<256x128xf32, #tpu.memory_space<vmem>>, vector<256x128xf32>
    %c0_2 = arith.constant 0 : index
    %c0_3 = arith.constant 0 : index
    %4 = vector.load %arg3[%c0_2, %c0_3] : memref<128x128xf32, #tpu.memory_space<vmem>>, vector<128x128xf32>
    %cst = arith.constant dense<0.000000e+00> : vector<256x128xf32>
    %5 = tpu.matmul %3, %4, %cst {dimension_numbers = #tpu.dot_dimension_numbers<[1], [0], [0], [1], [0, 0, 1, 1], [], []>} : vector<256x128xf32>, vector<128x128xf32>, vector<256x128xf32> -> vector<256x128xf32>
    %c0_4 = arith.constant 0 : index
    %c0_5 = arith.constant 0 : index
    %6 = vector.load %arg4[%c0_4, %c0_5] : memref<1x128xf32, #tpu.memory_space<vmem>>, vector<1x128xf32>
    %7 = vector.broadcast %6 : vector<1x128xf32> to vector<256x128xf32>
    %8 = arith.addf %5, %7 : vector<256x128xf32>
    %cst_6 = arith.constant 5.000000e-01 : f32
    %9 = vector.broadcast %cst_6 : f32 to vector<256x128xf32>
    %10 = arith.mulf %9, %8 : vector<256x128xf32>
    %cst_7 = arith.constant 0.707106769 : f32
    %11 = vector.broadcast %cst_7 : f32 to vector<256x128xf32>
    %12 = arith.mulf %8, %11 : vector<256x128xf32>
    %13 = math.erf %12 : vector<256x128xf32>
    %cst_8 = arith.constant 1.000000e+00 : f32
    %14 = vector.broadcast %cst_8 : f32 to vector<256x128xf32>
    %15 = arith.addf %14, %13 : vector<256x128xf32>
    %16 = arith.mulf %10, %15 : vector<256x128xf32>
    %c0_9 = arith.constant 0 : index
    %c0_10 = arith.constant 0 : index
    %17 = vector.load %arg8[%c0_9, %c0_10] : memref<256x128xf32, #tpu.memory_space<vmem>>, vector<256x128xf32>
    %c0_11 = arith.constant 0 : index
    %c0_12 = arith.constant 0 : index
    %18 = vector.load %arg5[%c0_11, %c0_12] : memref<128x128xf32, #tpu.memory_space<vmem>>, vector<128x128xf32>
    %cst_13 = arith.constant dense<0.000000e+00> : vector<256x128xf32>
    %19 = tpu.matmul %16, %18, %cst_13 {dimension_numbers = #tpu.dot_dimension_numbers<[1], [0], [0], [1], [0, 0, 1, 1], [], []>} : vector<256x128xf32>, vector<128x128xf32>, vector<256x128xf32> -> vector<256x128xf32>
    %20 = arith.addf %17, %19 : vector<256x128xf32>
    %c0_14 = arith.constant 0 : index
    %c0_15 = arith.constant 0 : index
    %21 = vector.load %arg8[%c0_14, %c0_15] : memref<256x128xf32, #tpu.memory_space<vmem>>, vector<256x128xf32>
    tpu.vector_store %arg8[%c0_14, %c0_15], %20 {strides = array<i32>} : memref<256x128xf32, #tpu.memory_space<vmem>>, vector<256x128xf32>,
    %c0_i32_16 = arith.constant 0 : i32
    %22 = arith.cmpi eq, %arg1, %c0_i32_16 : i32
    %23 = arith.extui %22 : i1 to i32
    %c0_i32_17 = arith.constant 0 : i32
    %24 = arith.cmpi ne, %23, %c0_i32_17 : i32
    scf.if %24 {
      %c0_18 = arith.constant 0 : index
      %c0_19 = arith.constant 0 : index
      %25 = vector.load %arg8[%c0_18, %c0_19] : memref<256x128xf32, #tpu.memory_space<vmem>>, vector<256x128xf32>
      %c0_20 = arith.constant 0 : index
      %c0_21 = arith.constant 0 : index
      %26 = vector.load %arg6[%c0_20, %c0_21] : memref<1x128xf32, #tpu.memory_space<vmem>>, vector<1x128xf32>
      %27 = vector.broadcast %26 : vector<1x128xf32> to vector<256x128xf32>
      %28 = arith.addf %25, %27 : vector<256x128xf32>
      %c0_22 = arith.constant 0 : index
      %c0_23 = arith.constant 0 : index
      %29 = vector.load %arg7[%c0_22, %c0_23] : memref<256x128xf32, #tpu.memory_space<vmem>>, vector<256x128xf32>
      tpu.vector_store %arg7[%c0_22, %c0_23], %28 {strides = array<i32>} : memref<256x128xf32, #tpu.memory_space<vmem>>, vector<256x128xf32>,
    } else {
    }
    return
  }
  func.func @transform_0(%arg0: i32, %arg1: i32) -> (i32, i32) {
    %c0_i32 = arith.constant 0 : i32
    %c0_i32_0 = arith.constant 0 : i32
    return %arg0, %c0_i32 : i32, i32
  }
  func.func @transform_1(%arg0: i32, %arg1: i32) -> (i32, i32) {
    %c0_i32 = arith.constant 0 : i32
    %c0_i32_0 = arith.constant 0 : i32
    return %c0_i32, %arg1 : i32, i32
  }
  func.func @transform_2(%arg0: i32, %arg1: i32) -> (i32, i32) {
    %c0_i32 = arith.constant 0 : i32
    %c0_i32_0 = arith.constant 0 : i32
    return %c0_i32, %arg1 : i32, i32
  }
  func.func @transform_3(%arg0: i32, %arg1: i32) -> (i32, i32) {
    %c0_i32 = arith.constant 0 : i32
    %c0_i32_0 = arith.constant 0 : i32
    return %arg1, %c0_i32 : i32, i32
  }
  func.func @transform_4(%arg0: i32, %arg1: i32) -> (i32, i32) {
    %c0_i32 = arith.constant 0 : i32
    %c0_i32_0 = arith.constant 0 : i32
    %c0_i32_1 = arith.constant 0 : i32
    return %c0_i32, %c0_i32_0 : i32, i32
  }
  func.func @transform_5(%arg0: i32, %arg1: i32) -> (i32, i32) {
    %c0_i32 = arith.constant 0 : i32
    %c0_i32_0 = arith.constant 0 : i32
    return %arg0, %c0_i32 : i32, i32
  }
}

</mosaic_0001>

<llo_original>
// kernel: _lambda_.4
$region0: #{_lambda_.4}
  #allocation0 [shape = 'u32[]', space=smem, size = 0x4, offset = 0x4, fixed_abs, tag = 'smem constant byte address 0x4 - core index']
  #allocation1 [shape = 'u32[144,128]{1,0:T(1,128)}', space=vmem, size = 0x12000, scoped, tag = 'internal scratch']
  %s0 = inlined_call_operand.vmem [shape: f32[8,64,32], index: 0, kind: input, shape index: {}]
  %s1 = inlined_call_operand.vmem [shape: f32[8,64,32], index: 1, kind: input, shape index: {}]
  %s2 = inlined_call_operand.vmem [shape: f32[8,64,32], index: 2, kind: input, shape index: {}]
  %s3 = inlined_call_operand.vmem [shape: f32[4,64,64], index: 3, kind: input, shape index: {}]
  %s4 = inlined_call_operand.vmem [shape: f32[8,64,64], index: 4, kind: input, shape index: {}]
  %s5 = inlined_call_operand.vmem [shape: f32[8,64,32], index: 5, kind: output, shape index: {}]
  %s6 = sld [smem:[#allocation0]]
  $region53: #{_lambda_.4} parent=0
    _
  %s8 = ssub.s32 1, %s6
  %s9 = scalar_select 0, %s8, %s6
  loop: start=0, step=1, limit=10
  $region2: #{_lambda_.4} parent=0 // loop_pre_header
    _
  $region3: #{_lambda_.4} parent=0 // loop_header
    %s11 = sphi 0, %s15
    %p12 = scmp.ge.s32.totalorder %s11, 10
    %s21 = sphi 0, %s23
    %s24 = sphi 0, %s21
    %s25 = sphi 0, %s24
    %s41 = sphi 0, %s25
    %s47 = sphi 0, %s49
    %s50 = sphi 0, %s47
    %s51 = sphi 0, %s50
    %s67 = sphi 0, %s51
    %s73 = sphi 0, %s75
    %s76 = sphi 0, %s73
    %s77 = sphi 0, %s76
    %s93 = sphi 0, %s77
    %s97 = sphi 0, %s97
    %s99 = sphi 0, %s97
    %s100 = sphi 0, %s99
    %s114 = sphi 0, %s100
    %s120 = sphi 0, %s122
    %s123 = sphi 0, %s120
    %s124 = sphi 0, %s123
    %s140 = sphi 0, %s124
    %s146 = sphi 0, %s148
    %s149 = sphi 0, %s146
    %s150 = sphi 0, %s149
    %s166 = sphi 0, %s150
  $region4: #{_lambda_.4} parent=0 // loop_header_branch
    %14 = sbr.rel (%p12) target = $region8
  $region5: #{_lambda_.4} parent=0 // loop_body
    %s16 = ssub.s32 %s11, 1
    %s17 = ssub.s32 %s11, 2
    %s18 = sadd.s32 %s11, 1
    %s19 = ssub.s32 %s11, %s18
    %p20 = scmp.eq.s32.totalorder %s19, 0
    %s22 = sadd.s32 %s21, 1
    %s23 = scalar_select %p20, %s21, %s22
    %p26 = pneg %p20
    %p27 = scmp.eq.s32.totalorder %s11, 7
    %p28 = por %p26, %p27
    %p29 = scmp.ne.s32.totalorder %s21, %s24
    %p30 = scmp.eq.s32.totalorder %s11, 0
    %p31 = por %p29, %p30
    %p32 = scmp.ne.s32.totalorder %s21, %s24
    %p33 = scmp.eq.s32.totalorder %s16, 7
    %p34 = por %p32, %p33
    %p35 = scmp.ne.s32.totalorder %s24, %s25
    %p36 = scmp.eq.s32.totalorder %s16, 0
    %p37 = por %p35, %p36
    %p38 = scmp.ne.s32.totalorder %s24, %s25
    %p39 = scmp.eq.s32.totalorder %s17, 7
    %p40 = por %p38, %p39
    %p42 = scmp.ne.s32.totalorder %s25, %s41
    %p43 = scmp.eq.s32.totalorder %s17, 0
    %p44 = por %p42, %p43
    %s45 = ssub.s32 %s11, %s18
    %p46 = scmp.eq.s32.totalorder %s45, 0
    %s48 = sadd.s32 %s47, 1
    %s49 = scalar_select %p46, %s47, %s48
    %p52 = pneg %p46
    %p53 = scmp.eq.s32.totalorder %s11, 7
    %p54 = por %p52, %p53
    %p55 = scmp.ne.s32.totalorder %s47, %s50
    %p56 = scmp.eq.s32.totalorder %s11, 0
    %p57 = por %p55, %p56
    %p58 = scmp.ne.s32.totalorder %s47, %s50
    %p59 = scmp.eq.s32.totalorder %s16, 7
    %p60 = por %p58, %p59
    %p61 = scmp.ne.s32.totalorder %s50, %s51
    %p62 = scmp.eq.s32.totalorder %s16, 0
    %p63 = por %p61, %p62
    %p64 = scmp.ne.s32.totalorder %s50, %s51
    %p65 = scmp.eq.s32.totalorder %s17, 7
    %p66 = por %p64, %p65
    %p68 = scmp.ne.s32.totalorder %s51, %s67
    %p69 = scmp.eq.s32.totalorder %s17, 0
    %p70 = por %p68, %p69
    %s71 = ssub.s32 %s11, %s18
    %p72 = scmp.eq.s32.totalorder %s71, 0
    %s74 = sadd.s32 %s73, 1
    %s75 = scalar_select %p72, %s73, %s74
    %p78 = pneg %p72
    %p79 = scmp.eq.s32.totalorder %s11, 7
    %p80 = por %p78, %p79
    %p81 = scmp.ne.s32.totalorder %s73, %s76
    %p82 = scmp.eq.s32.totalorder %s11, 0
    %p83 = por %p81, %p82
    %p84 = scmp.ne.s32.totalorder %s73, %s76
    %p85 = scmp.eq.s32.totalorder %s16, 7
    %p86 = por %p84, %p85
    %p87 = scmp.ne.s32.totalorder %s76, %s77
    %p88 = scmp.eq.s32.totalorder %s16, 0
    %p89 = por %p87, %p88
    %p90 = scmp.ne.s32.totalorder %s76, %s77
    %p91 = scmp.eq.s32.totalorder %s17, 7
    %p92 = por %p90, %p91
    %p94 = scmp.ne.s32.totalorder %s77, %s93
    %p95 = scmp.eq.s32.totalorder %s17, 0
    %p96 = por %p94, %p95
    %s98 = sadd.s32 %s97, 1
    %p101 = scmp.eq.s32.totalorder %s11, 7
    %p102 = scmp.ne.s32.totalorder %s97, %s99
    %p103 = scmp.eq.s32.totalorder %s11, 0
    %p104 = por %p102, %p103
    %p105 = scmp.ne.s32.totalorder %s97, %s99
    %p106 = scmp.eq.s32.totalorder %s16, 7
    %p107 = por %p105, %p106
    %p108 = scmp.ne.s32.totalorder %s99, %s100
    %p109 = scmp.eq.s32.totalorder %s16, 0
    %p110 = por %p108, %p109
    %p111 = scmp.ne.s32.totalorder %s99, %s100
    %p112 = scmp.eq.s32.totalorder %s17, 7
    %p113 = por %p111, %p112
    %p115 = scmp.ne.s32.totalorder %s100, %s114
    %p116 = scmp.eq.s32.totalorder %s17, 0
    %p117 = por %p115, %p116
    %s118 = ssub.s32 %s11, %s18
    %p119 = scmp.eq.s32.totalorder %s118, 0
    %s121 = sadd.s32 %s120, 1
    %s122 = scalar_select %p119, %s120, %s121
    %p125 = pneg %p119
    %p126 = scmp.eq.s32.totalorder %s11, 7
    %p127 = por %p125, %p126
    %p128 = scmp.ne.s32.totalorder %s120, %s123
    %p129 = scmp.eq.s32.totalorder %s11, 0
    %p130 = por %p128, %p129
    %p131 = scmp.ne.s32.totalorder %s120, %s123
    %p132 = scmp.eq.s32.totalorder %s16, 7
    %p133 = por %p131, %p132
    %p134 = scmp.ne.s32.totalorder %s123, %s124
    %p135 = scmp.eq.s32.totalorder %s16, 0
    %p136 = por %p134, %p135
    %p137 = scmp.ne.s32.totalorder %s123, %s124
    %p138 = scmp.eq.s32.totalorder %s17, 7
    %p139 = por %p137, %p138
    %p141 = scmp.ne.s32.totalorder %s124, %s140
    %p142 = scmp.eq.s32.totalorder %s17, 0
    %p143 = por %p141, %p142
    %s144 = ssub.s32 %s11, %s18
    %p145 = scmp.eq.s32.totalorder %s144, 0
    %s147 = sadd.s32 %s146, 1
    %s148 = scalar_select %p145, %s146, %s147
    %p151 = pneg %p145
    %p152 = scmp.eq.s32.totalorder %s11, 7
    %p153 = por %p151, %p152
    %p154 = scmp.ne.s32.totalorder %s146, %s149
    %p155 = scmp.eq.s32.totalorder %s11, 0
    %p156 = por %p154, %p155
    %p157 = scmp.ne.s32.totalorder %s146, %s149
    %p158 = scmp.eq.s32.totalorder %s16, 7
    %p159 = por %p157, %p158
    %p160 = scmp.ne.s32.totalorder %s149, %s150
    %p161 = scmp.eq.s32.totalorder %s16, 0
    %p162 = por %p160, %p161
    %p163 = scmp.ne.s32.totalorder %s149, %s150
    %p164 = scmp.eq.s32.totalorder %s17, 7
    %p165 = por %p163, %p164
    %p167 = scmp.ne.s32.totalorder %s150, %s166
    %p168 = scmp.eq.s32.totalorder %s17, 0
    %p169 = por %p167, %p168
    %p170 = scmp.le.s32.totalorder 1, %s11
    %p171 = scmp.lt.s32.totalorder %s11, 9
    %p172 = pnand %p170, %p171
    %p173 = pneg %p172
    // Predicated region
    $region9: #{_lambda_.4} parent=5 // pred_check
      _
    $region10: #{_lambda_.4} parent=5 // pred_check_branch
      %175 = sbr.rel (%p172) target = $region12
    $region11: #{_lambda_.4} parent=5 // pred_region
      %s176 = ssub.s32 %s11, 1
      // Predicated region
      $region13: #{_lambda_.4} parent=11 // pred_check
        %p177 = pneg %p110
      $region14: #{_lambda_.4} parent=11 // pred_check_branch
        %179 = sbr.rel (%p177) target = $region16
      $region15: #{_lambda_.4} parent=11 // pred_region
        _
      $region16: #{_lambda_.4} parent=11 // pred_fallthru
        _
    $region12: #{_lambda_.4} parent=5 // pred_fallthru
      _
    %p180 = scmp.lt.s32.totalorder %s11, 8
    // Predicated region
    $region17: #{_lambda_.4} parent=5 // pred_check
      %p181 = pneg %p180
    $region18: #{_lambda_.4} parent=5 // pred_check_branch
      %183 = sbr.rel (%p181) target = $region20
    $region19: #{_lambda_.4} parent=5 // pred_region
      // Predicated region
      $region21: #{_lambda_.4} parent=19 // pred_check
        %p184 = pneg %p31
      $region22: #{_lambda_.4} parent=19 // pred_check_branch
        %186 = sbr.rel (%p184) target = $region24
      $region23: #{_lambda_.4} parent=19 // pred_region
        %p187 = scmp.lt.s32.totalorder %s11, 7
        %s188 = scalar_select %p187, %s11, 7
        %s189 = smul.addr %s188, 8
        %s190 = smul.addr %s189, 8
        %s191 = scalar_lea.vmem %s0, %s190
      $region24: #{_lambda_.4} parent=19 // pred_fallthru
        _
      // Predicated region
      $region25: #{_lambda_.4} parent=19 // pred_check
        %p192 = pneg %p57
      $region26: #{_lambda_.4} parent=19 // pred_check_branch
        %194 = sbr.rel (%p192) target = $region28
      $region27: #{_lambda_.4} parent=19 // pred_region
        %p195 = scmp.lt.s32.totalorder %s11, 7
        %s196 = scalar_select %p195, %s11, 7
        %s197 = smul.addr %s196, 8
        %s198 = smul.addr %s197, 8
        %s199 = scalar_lea.vmem %s1, %s198
      $region28: #{_lambda_.4} parent=19 // pred_fallthru
        _
      // Predicated region
      $region29: #{_lambda_.4} parent=19 // pred_check
        %p200 = pneg %p83
      $region30: #{_lambda_.4} parent=19 // pred_check_branch
        %202 = sbr.rel (%p200) target = $region32
      $region31: #{_lambda_.4} parent=19 // pred_region
        %p203 = scmp.lt.s32.totalorder %s11, 7
        %s204 = scalar_select %p203, %s11, 7
        %s205 = smul.addr %s204, 8
        %s206 = smul.addr %s205, 8
        %s207 = scalar_lea.vmem %s2, %s206
      $region32: #{_lambda_.4} parent=19 // pred_fallthru
        _
      // Predicated region
      $region33: #{_lambda_.4} parent=19 // pred_check
        %p208 = pneg %p130
      $region34: #{_lambda_.4} parent=19 // pred_check_branch
        %210 = sbr.rel (%p208) target = $region36
      $region35: #{_lambda_.4} parent=19 // pred_region
        %p211 = scmp.lt.s32.totalorder %s11, 7
        %s212 = scalar_select %p211, %s11, 7
        %s213 = smul.addr %s212, 8
        %s214 = smul.addr %s213, 8
        %s215 = scalar_lea.vmem %s4, %s214
      $region36: #{_lambda_.4} parent=19 // pred_fallthru
        _
    $region20: #{_lambda_.4} parent=5 // pred_fallthru
      _
    %p216 = scmp.le.s32.totalorder 1, %s11
    %p217 = scmp.lt.s32.totalorder %s11, 9
    %p218 = pnand %p216, %p217
    %p219 = pneg %p218
    // Predicated region
    $region37: #{_lambda_.4} parent=5 // pred_check
      _
    $region38: #{_lambda_.4} parent=5 // pred_check_branch
      %221 = sbr.rel (%p218) target = $region40
    $region39: #{_lambda_.4} parent=5 // pred_region
      %s222 = ssub.s32 %s11, 1
      %p223 = scmp.lt.s32.totalorder %s16, 7
      %s224 = scalar_select %p223, %s16, 7
      %s225 = smul.addr %s224, 8
      %s226 = smul.addr %s225, 8
      %s227 = scalar_lea.vmem %s0, %s226
      %p228 = pneg %p37
      %p229 = pneg %p34
      %p230 = scmp.lt.s32.totalorder %s16, 7
      %s231 = scalar_select %p230, %s16, 7
      %s232 = smul.addr %s231, 8
      %s233 = smul.addr %s232, 8
      %s234 = scalar_lea.vmem %s1, %s233
      %p235 = pneg %p63
      %p236 = pneg %p60
      %p237 = scmp.lt.s32.totalorder %s16, 7
      %s238 = scalar_select %p237, %s16, 7
      %s239 = smul.addr %s238, 8
      %s240 = smul.addr %s239, 8
      %s241 = scalar_lea.vmem %s2, %s240
      %p242 = pneg %p89
      %p243 = pneg %p86
      %p244 = pneg %p110
      %p245 = pneg %p107
      %p246 = scmp.lt.s32.totalorder %s16, 7
      %s247 = scalar_select %p246, %s16, 7
      %s248 = smul.addr %s247, 8
      %s249 = smul.addr %s248, 8
      %s250 = scalar_lea.vmem %s4, %s249
      %p251 = pneg %p136
      %p252 = pneg %p133
      %p253 = pneg %p162
      %p254 = pneg %p159
      %p255 = scmp.lt.s32.totalorder %s16, 7
      %s256 = scalar_select %p255, %s16, 7
      %s257 = smul.addr %s256, 8
      %s258 = smul.addr %s257, 8
      %s259 = scalar_lea.vmem %s5, %s258
      %p260 = scmp.lt.s32.totalorder %s16, 7
      %s261 = scalar_select %p260, %s16, 7
      %s262 = smul.addr %s261, 8
      %s263 = smul.addr %s262, 8
      %s264 = scalar_lea.vmem %s0, %s263
      %p265 = scmp.lt.s32.totalorder %s16, 7
      %s266 = scalar_select %p265, %s16, 7
      %s267 = smul.addr %s266, 8
      %s268 = smul.addr %s267, 8
      %s269 = scalar_lea.vmem %s1, %s268
      %p270 = scmp.lt.s32.totalorder %s16, 7
      %s271 = scalar_select %p270, %s16, 7
      %s272 = smul.addr %s271, 8
      %s273 = smul.addr %s272, 8
      %s274 = scalar_lea.vmem %s2, %s273
      %p275 = scmp.lt.s32.totalorder %s16, 7
      %s276 = scalar_select %p275, %s16, 7
      %s277 = smul.addr %s276, 8
      %s278 = smul.addr %s277, 8
      %s279 = scalar_lea.vmem %s4, %s278
      %p280 = scmp.lt.s32.totalorder %s16, 7
      %s281 = scalar_select %p280, %s16, 7
      %s282 = smul.addr %s281, 8
      %s283 = smul.addr %s282, 8
      %s284 = scalar_lea.vmem %s5, %s283
      %v285 = vld [vmem:[%s264] sm:$0xff]
      %v286 = vld [vmem:[%s264 + $0x8] sm:$0xff]
      %v287 = vld [vmem:[%s264 + $0x10] sm:$0xff]
      %v288 = vld [vmem:[%s264 + $0x18] sm:$0xff]
      %v289 = vld [vmem:[%s264 + $0x20] sm:$0xff]
      %v290 = vld [vmem:[%s264 + $0x28] sm:$0xff]
      %v291 = vld [vmem:[%s264 + $0x30] sm:$0xff]
      %v292 = vld [vmem:[%s264 + $0x38] sm:$0xff]
      %v293 = vld [vmem:[%s269] sm:$0xff]
      %v294 = vld [vmem:[%s269 + $0x8] sm:$0xff]
      %v295 = vld [vmem:[%s269 + $0x10] sm:$0xff]
      %v296 = vld [vmem:[%s269 + $0x18] sm:$0xff]
      %v297 = vld [vmem:[%s269 + $0x20] sm:$0xff]
      %v298 = vld [vmem:[%s269 + $0x28] sm:$0xff]
      %v299 = vld [vmem:[%s269 + $0x30] sm:$0xff]
      %v300 = vld [vmem:[%s269 + $0x38] sm:$0xff]
      %v301 = vld [vmem:[%s274] sm:$0xff]
      %v302 = vld [vmem:[%s274 + $0x8] sm:$0xff]
      %v303 = vld [vmem:[%s274 + $0x10] sm:$0xff]
      %v304 = vld [vmem:[%s274 + $0x18] sm:$0xff]
      %v305 = vld [vmem:[%s274 + $0x20] sm:$0xff]
      %v306 = vld [vmem:[%s274 + $0x28] sm:$0xff]
      %v307 = vld [vmem:[%s274 + $0x30] sm:$0xff]
      %v308 = vld [vmem:[%s274 + $0x38] sm:$0xff]
      %v309 = vld [vmem:[%s279] sm:$0xff]
      %v310 = vld [vmem:[%s279 + $0x8] sm:$0xff]
      %v311 = vld [vmem:[%s279 + $0x10] sm:$0xff]
      %v312 = vld [vmem:[%s279 + $0x18] sm:$0xff]
      %v313 = vld [vmem:[%s279 + $0x20] sm:$0xff]
      %v314 = vld [vmem:[%s279 + $0x28] sm:$0xff]
      %v315 = vld [vmem:[%s279 + $0x30] sm:$0xff]
      %v316 = vld [vmem:[%s279 + $0x38] sm:$0xff]
      %v317 = vmul.f32 %v285, 0.35355338
      %v318 = vmul.f32 %v286, 0.35355338
      %v319 = vmul.f32 %v287, 0.35355338
      %v320 = vmul.f32 %v288, 0.35355338
      %v321 = vmul.f32 %v289, 0.35355338
      %v322 = vmul.f32 %v290, 0.35355338
      %v323 = vmul.f32 %v291, 0.35355338
      %v324 = vmul.f32 %v292, 0.35355338
      %v325 = vld [vmem:[%s3] sm:$0xff]
      %v326 = vld [vmem:[%s3 + $0x8] sm:$0xff]
      %v327 = vld [vmem:[%s3 + $0x10] sm:$0xff]
      %v328 = vld [vmem:[%s3 + $0x18] sm:$0xff]
      %v329 = vld [vmem:[%s3 + $0x20] sm:$0xff]
      %v330 = vld [vmem:[%s3 + $0x28] sm:$0xff]
      %v331 = vld [vmem:[%s3 + $0x30] sm:$0xff]
      %v332 = vld [vmem:[%s3 + $0x38] sm:$0xff]
      %vm333 = vcmask 64512
      %v335 = vsel %vm333, %v317, 0
      %v338 = vsel %vm333, %v318, 0
      %v341 = vsel %vm333, %v319, 0
      %v344 = vsel %vm333, %v320, 0
      %v347 = vsel %vm333, %v321, 0
      %v350 = vsel %vm333, %v322, 0
      %v353 = vsel %vm333, %v323, 0
      %v356 = vsel %vm333, %v324, 0
      %v359 = vsel %vm333, %v293, 0
      %v362 = vsel %vm333, %v294, 0
      %v365 = vsel %vm333, %v295, 0
      %v368 = vsel %vm333, %v296, 0
      %v371 = vsel %vm333, %v297, 0
      %v374 = vsel %vm333, %v298, 0
      %v377 = vsel %vm333, %v299, 0
      %v380 = vsel %vm333, %v300, 0
      %382 = vmatprep.subr.mxu0 0.0
      %383 = vmatpush1.xpose.msra.mxu0 %v359
      %384 = vmatprep.subr.mxu0 0.0
      %385 = vmatpush1.xpose.msra.mxu0 %v362
      %386 = vmatprep.subr.mxu0 0.0
      %387 = vmatpush1.xpose.msra.mxu0 %v365
      %388 = vmatprep.subr.mxu0 0.0
      %389 = vmatpush1.xpose.msra.mxu0 %v368
      %390 = vmatprep.subr.mxu0 0.0
      %391 = vmatpush1.xpose.msra.mxu0 %v371
      %392 = vmatprep.subr.mxu0 0.0
      %393 = vmatpush1.xpose.msra.mxu0 %v374
      %394 = vmatprep.subr.mxu0 0.0
      %395 = vmatpush1.xpose.msra.mxu0 %v377
      %396 = vmatprep.subr.mxu0 0.0
      %397 = vmatpush1.xpose.msra.mxu0 %v380
      %398 = vmatprep.subr.mxu0 0.0
      %399 = vmatpush1.xpose.msra.mxu0 0.0
      %400 = vmatprep.subr.mxu0 0.0
      %401 = vmatpush1.xpose.msra.mxu0 0.0
      %402 = vmatprep.subr.mxu0 0.0
      %403 = vmatpush1.xpose.msra.mxu0 0.0
      %404 = vmatprep.subr.mxu0 0.0
      %405 = vmatpush1.xpose.msra.mxu0 0.0
      %406 = vmatprep.subr.mxu0 0.0
      %407 = vmatpush1.xpose.msra.mxu0 0.0
      %408 = vmatprep.subr.mxu0 0.0
      %409 = vmatpush1.xpose.msra.mxu0 0.0
      %410 = vmatprep.subr.mxu0 0.0
      %411 = vmatpush1.xpose.msra.mxu0 0.0
      %412 = vmatprep.subr.mxu0 0.0
      %413 = vmatpush1.xpose.msra.mxu0 0.0
      %414 = vmatprep.subr.mxu0 0.0
      %415 = vmatpush1.xpose.msra.mxu0 0.0
      %416 = vmatprep.subr.mxu0 0.0
      %417 = vmatpush1.xpose.msra.mxu0 0.0
      %418 = vmatprep.subr.mxu0 0.0
      %419 = vmatpush1.xpose.msra.mxu0 0.0
      %420 = vmatprep.subr.mxu0 0.0
      %421 = vmatpush1.xpose.msra.mxu0 0.0
      %422 = vmatprep.subr.mxu0 0.0
      %423 = vmatpush1.xpose.msra.mxu0 0.0
      %424 = vmatprep.subr.mxu0 0.0
      %425 = vmatpush1.xpose.msra.mxu0 0.0
      %426 = vmatprep.subr.mxu0 0.0
      %427 = vmatpush1.xpose.msra.mxu0 0.0
      %428 = vmatprep.subr.mxu0 0.0
      %429 = vmatpush1.xpose.msra.mxu0 0.0
      %430 = vmatprep.subr.mxu0 0.0
      %431 = vmatpush1.xpose.msra.mxu0 0.0
      %432 = vmatprep.subr.mxu0 0.0
      %433 = vmatpush1.xpose.msra.mxu0 0.0
      %434 = vmatprep.subr.mxu0 0.0
      %435 = vmatpush1.xpose.msra.mxu0 0.0
      %436 = vmatprep.subr.mxu0 0.0
      %437 = vmatpush1.xpose.msra.mxu0 0.0
      %438 = vmatprep.subr.mxu0 0.0
      %439 = vmatpush1.xpose.msra.mxu0 0.0
      %440 = vmatprep.subr.mxu0 0.0
      %441 = vmatpush1.xpose.msra.mxu0 0.0
      %442 = vmatprep.subr.mxu0 0.0
      %443 = vmatpush1.xpose.msra.mxu0 0.0
      %444 = vmatprep.subr.mxu0 0.0
      %445 = vmatpush1.xpose.msra.mxu0 0.0
      %446 = vmatprep.mubr.f32.mxu0 0.0
      %447 = vmatmul.mubr.f32.gmra.mrb[0].mxu0 %v335
      %v448 = vpop.f32.mrb[0].mxu0
      %v449 = vadd.f32 %v325, %v448
      %v450 = vpop.f32.mrb[0].mxu0
      %451 = vmatprep.mubr.f32.mxu0 0.0
      %452 = vmatmul.mubr.f32.gmra.mrb[0].mxu0 %v338
      %v453 = vpop.f32.mrb[0].mxu0
      %v454 = vadd.f32 %v326, %v453
      %v455 = vpop.f32.mrb[0].mxu0
      %456 = vmatprep.mubr.f32.mxu0 0.0
      %457 = vmatmul.mubr.f32.gmra.mrb[0].mxu0 %v341
      %v458 = vpop.f32.mrb[0].mxu0
      %v459 = vadd.f32 %v327, %v458
      %v460 = vpop.f32.mrb[0].mxu0
      %461 = vmatprep.mubr.f32.mxu0 0.0
      %462 = vmatmul.mubr.f32.gmra.mrb[0].mxu0 %v344
      %v463 = vpop.f32.mrb[0].mxu0
      %v464 = vadd.f32 %v328, %v463
      %v465 = vpop.f32.mrb[0].mxu0
      %466 = vmatprep.mubr.f32.mxu0 0.0
      %467 = vmatmul.mubr.f32.gmra.mrb[0].mxu0 %v347
      %v468 = vpop.f32.mrb[0].mxu0
      %v469 = vadd.f32 %v329, %v468
      %v470 = vpop.f32.mrb[0].mxu0
      %471 = vmatprep.mubr.f32.mxu0 0.0
      %472 = vmatmul.mubr.f32.gmra.mrb[0].mxu0 %v350
      %v473 = vpop.f32.mrb[0].mxu0
      %v474 = vadd.f32 %v330, %v473
      %v475 = vpop.f32.mrb[0].mxu0
      %476 = vmatprep.mubr.f32.mxu0 0.0
      %477 = vmatmul.mubr.f32.gmra.mrb[0].mxu0 %v353
      %v478 = vpop.f32.mrb[0].mxu0
      %v479 = vadd.f32 %v331, %v478
      %v480 = vpop.f32.mrb[0].mxu0
      %481 = vmatprep.mubr.f32.mxu0 0.0
      %482 = vmatmul.mubr.f32.gmra.mrb[0].mxu0 %v356
      %v483 = vpop.f32.mrb[0].mxu0
      %v484 = vadd.f32 %v332, %v483
      %v485 = vpop.f32.mrb[0].mxu0
      %486 = vdwg.mxu0
      %v487 = vadd.f32 %v449, %v309
      %v488 = vadd.f32 %v454, %v310
      %v489 = vadd.f32 %v459, %v311
      %v490 = vadd.f32 %v464, %v312
      %v491 = vadd.f32 %v469, %v313
      %v492 = vadd.f32 %v474, %v314
      %v493 = vadd.f32 %v479, %v315
      %v494 = vadd.f32 %v484, %v316
      %vm495 = vcmask 523264
      %v496 = vsel %vm495, %v487, -inf
      %497 = vmax.xlane.f32.xlu0 %v496
      %v498 = vpop.xlane.xlu0 %497
      %v499 = vsel %vm495, %v488, -inf
      %500 = vmax.xlane.f32.xlu0 %v499
      %v501 = vpop.xlane.xlu0 %500
      %v502 = vsel %vm495, %v489, -inf
      %503 = vmax.xlane.f32.xlu0 %v502
      %v504 = vpop.xlane.xlu0 %503
      %v505 = vsel %vm495, %v490, -inf
      %506 = vmax.xlane.f32.xlu0 %v505
      %v507 = vpop.xlane.xlu0 %506
      %v508 = vsel %vm495, %v491, -inf
      %509 = vmax.xlane.f32.xlu0 %v508
      %v510 = vpop.xlane.xlu0 %509
      %v511 = vsel %vm495, %v492, -inf
      %512 = vmax.xlane.f32.xlu0 %v511
      %v513 = vpop.xlane.xlu0 %512
      %v514 = vsel %vm495, %v493, -inf
      %515 = vmax.xlane.f32.xlu0 %v514
      %v516 = vpop.xlane.xlu0 %515
      %v517 = vsel %vm495, %v494, -inf
      %518 = vmax.xlane.f32.xlu0 %v517
      %v519 = vpop.xlane.xlu0 %518
      %v520 = vsub.f32 %v487, %v498
      %v521 = vsub.f32 %v488, %v501
      %v522 = vsub.f32 %v489, %v504
      %v523 = vsub.f32 %v490, %v507
      %v524 = vsub.f32 %v491, %v510
      %v525 = vsub.f32 %v492, %v513
      %v526 = vsub.f32 %v493, %v516
      %v527 = vsub.f32 %v494, %v519
      %v528 = vmul.f32 %v520, 1.442695
      %v529 = vpow.pop %v528
      %v530 = vmul.f32 %v521, 1.442695
      %v531 = vpow.pop %v530
      %v532 = vmul.f32 %v522, 1.442695
      %v533 = vpow.pop %v532
      %v534 = vmul.f32 %v523, 1.442695
      %v535 = vpow.pop %v534
      %v536 = vmul.f32 %v524, 1.442695
      %v537 = vpow.pop %v536
      %v538 = vmul.f32 %v525, 1.442695
      %v539 = vpow.pop %v538
      %v540 = vmul.f32 %v526, 1.442695
      %v541 = vpow.pop %v540
      %v542 = vmul.f32 %v527, 1.442695
      %v543 = vpow.pop %v542
      %v544 = vsel %vm495, %v529, 0.0
      %545 = vadd.xlane.f32.xlu0 %v544
      %v546 = vpop.xlane.xlu0 %545
      %v547 = vsel %vm495, %v531, 0.0
      %548 = vadd.xlane.f32.xlu0 %v547
      %v549 = vpop.xlane.xlu0 %548
      %v550 = vsel %vm495, %v533, 0.0
      %551 = vadd.xlane.f32.xlu0 %v550
      %v552 = vpop.xlane.xlu0 %551
      %v553 = vsel %vm495, %v535, 0.0
      %554 = vadd.xlane.f32.xlu0 %v553
      %v555 = vpop.xlane.xlu0 %554
      %v556 = vsel %vm495, %v537, 0.0
      %557 = vadd.xlane.f32.xlu0 %v556
      %v558 = vpop.xlane.xlu0 %557
      %v559 = vsel %vm495, %v539, 0.0
      %560 = vadd.xlane.f32.xlu0 %v559
      %v561 = vpop.xlane.xlu0 %560
      %v562 = vsel %vm495, %v541, 0.0
      %563 = vadd.xlane.f32.xlu0 %v562
      %v564 = vpop.xlane.xlu0 %563
      %v565 = vsel %vm495, %v543, 0.0
      %566 = vadd.xlane.f32.xlu0 %v565
      %v567 = vpop.xlane.xlu0 %566
      %v568 = vrcp.pop %v546
      %v569 = vmul.f32 %v529, %v568
      %v570 = vrcp.pop %v549
      %v571 = vmul.f32 %v531, %v570
      %v572 = vrcp.pop %v552
      %v573 = vmul.f32 %v533, %v572
      %v574 = vrcp.pop %v555
      %v575 = vmul.f32 %v535, %v574
      %v576 = vrcp.pop %v558
      %v577 = vmul.f32 %v537, %v576
      %v578 = vrcp.pop %v561
      %v579 = vmul.f32 %v539, %v578
      %v580 = vrcp.pop %v564
      %v581 = vmul.f32 %v541, %v580
      %v582 = vrcp.pop %v567
      %v583 = vmul.f32 %v543, %v582
      %v585 = vsel %vm495, %v569, 0
      %v588 = vsel %vm495, %v571, 0
      %v591 = vsel %vm495, %v573, 0
      %v594 = vsel %vm495, %v575, 0
      %v597 = vsel %vm495, %v577, 0
      %v600 = vsel %vm495, %v579, 0
      %v603 = vsel %vm495, %v581, 0
      %v606 = vsel %vm495, %v583, 0
      %608 = vmatprep.subr.mxu0 0.0
      %609 = vmatpush1.msra.mxu0 %v301
      %610 = vmatprep.subr.mxu0 0.0
      %611 = vmatpush1.msra.mxu0 %v302
      %612 = vmatprep.subr.mxu0 0.0
      %613 = vmatpush1.msra.mxu0 %v303
      %614 = vmatprep.subr.mxu0 0.0
      %615 = vmatpush1.msra.mxu0 %v304
      %616 = vmatprep.subr.mxu0 0.0
      %617 = vmatpush1.msra.mxu0 %v305
      %618 = vmatprep.subr.mxu0 0.0
      %619 = vmatpush1.msra.mxu0 %v306
      %620 = vmatprep.subr.mxu0 0.0
      %621 = vmatpush1.msra.mxu0 %v307
      %622 = vmatprep.subr.mxu0 0.0
      %623 = vmatpush1.msra.mxu0 %v308
      %624 = vmatprep.subr.mxu0 0.0
      %625 = vmatpush1.msra.mxu0 0.0
      %626 = vmatprep.subr.mxu0 0.0
      %627 = vmatpush1.msra.mxu0 0.0
      %628 = vmatprep.subr.mxu0 0.0
      %629 = vmatpush1.msra.mxu0 0.0
      %630 = vmatprep.subr.mxu0 0.0
      %631 = vmatpush1.msra.mxu0 0.0
      %632 = vmatprep.subr.mxu0 0.0
      %633 = vmatpush1.msra.mxu0 0.0
      %634 = vmatprep.subr.mxu0 0.0
      %635 = vmatpush1.msra.mxu0 0.0
      %636 = vmatprep.subr.mxu0 0.0
      %637 = vmatpush1.msra.mxu0 0.0
      %638 = vmatprep.subr.mxu0 0.0
      %639 = vmatpush1.msra.mxu0 0.0
      %640 = vmatprep.subr.mxu0 0.0
      %641 = vmatpush1.msra.mxu0 0.0
      %642 = vmatprep.subr.mxu0 0.0
      %643 = vmatpush1.msra.mxu0 0.0
      %644 = vmatprep.subr.mxu0 0.0
      %645 = vmatpush1.msra.mxu0 0.0
      %646 = vmatprep.subr.mxu0 0.0
      %647 = vmatpush1.msra.mxu0 0.0
      %648 = vmatprep.subr.mxu0 0.0
      %649 = vmatpush1.msra.mxu0 0.0
      %650 = vmatprep.subr.mxu0 0.0
      %651 = vmatpush1.msra.mxu0 0.0
      %652 = vmatprep.subr.mxu0 0.0
      %653 = vmatpush1.msra.mxu0 0.0
      %654 = vmatprep.subr.mxu0 0.0
      %655 = vmatpush1.msra.mxu0 0.0
      %656 = vmatprep.subr.mxu0 0.0
      %657 = vmatpush1.msra.mxu0 0.0
      %658 = vmatprep.subr.mxu0 0.0
      %659 = vmatpush1.msra.mxu0 0.0
      %660 = vmatprep.subr.mxu0 0.0
      %661 = vmatpush1.msra.mxu0 0.0
      %662 = vmatprep.subr.mxu0 0.0
      %663 = vmatpush1.msra.mxu0 0.0
      %664 = vmatprep.subr.mxu0 0.0
      %665 = vmatpush1.msra.mxu0 0.0
      %666 = vmatprep.subr.mxu0 0.0
      %667 = vmatpush1.msra.mxu0 0.0
      %668 = vmatprep.subr.mxu0 0.0
      %669 = vmatpush1.msra.mxu0 0.0
      %670 = vmatprep.subr.mxu0 0.0
      %671 = vmatpush1.msra.mxu0 0.0
      %672 = vmatprep.mubr.f32.mxu0 0.0
      %673 = vmatmul.mubr.f32.gmra.mrb[0].mxu0 %v585
      %v674 = vpop.f32.mrb[0].mxu0
      %v675 = vadd.f32 0.0, %v674
      %v676 = vpop.f32.mrb[0].mxu0
      %677 = vmatprep.mubr.f32.mxu0 0.0
      %678 = vmatmul.mubr.f32.gmra.mrb[0].mxu0 %v588
      %v679 = vpop.f32.mrb[0].mxu0
      %v680 = vadd.f32 0.0, %v679
      %v681 = vpop.f32.mrb[0].mxu0
      %682 = vmatprep.mubr.f32.mxu0 0.0
      %683 = vmatmul.mubr.f32.gmra.mrb[0].mxu0 %v591
      %v684 = vpop.f32.mrb[0].mxu0
      %v685 = vadd.f32 0.0, %v684
      %v686 = vpop.f32.mrb[0].mxu0
      %687 = vmatprep.mubr.f32.mxu0 0.0
      %688 = vmatmul.mubr.f32.gmra.mrb[0].mxu0 %v594
      %v689 = vpop.f32.mrb[0].mxu0
      %v690 = vadd.f32 0.0, %v689
      %v691 = vpop.f32.mrb[0].mxu0
      %692 = vmatprep.mubr.f32.mxu0 0.0
      %693 = vmatmul.mubr.f32.gmra.mrb[0].mxu0 %v597
      %v694 = vpop.f32.mrb[0].mxu0
      %v695 = vadd.f32 0.0, %v694
      %v696 = vpop.f32.mrb[0].mxu0
      %697 = vmatprep.mubr.f32.mxu0 0.0
      %698 = vmatmul.mubr.f32.gmra.mrb[0].mxu0 %v600
      %v699 = vpop.f32.mrb[0].mxu0
      %v700 = vadd.f32 0.0, %v699
      %v701 = vpop.f32.mrb[0].mxu0
      %702 = vmatprep.mubr.f32.mxu0 0.0
      %703 = vmatmul.mubr.f32.gmra.mrb[0].mxu0 %v603
      %v704 = vpop.f32.mrb[0].mxu0
      %v705 = vadd.f32 0.0, %v704
      %v706 = vpop.f32.mrb[0].mxu0
      %707 = vmatprep.mubr.f32.mxu0 0.0
      %708 = vmatmul.mubr.f32.gmra.mrb[0].mxu0 %v606
      %v709 = vpop.f32.mrb[0].mxu0
      %v710 = vadd.f32 0.0, %v709
      %v711 = vpop.f32.mrb[0].mxu0
      %712 = vdwg.mxu0
      %713 = vst.msk [vmem:[%s284] sm:$0xff] %vm333, %v675
      %714 = vst.msk [vmem:[%s284 + $0x8] sm:$0xff] %vm333, %v680
      %715 = vst.msk [vmem:[%s284 + $0x10] sm:$0xff] %vm333, %v685
      %716 = vst.msk [vmem:[%s284 + $0x18] sm:$0xff] %vm333, %v690
      %717 = vst.msk [vmem:[%s284 + $0x20] sm:$0xff] %vm333, %v695
      %718 = vst.msk [vmem:[%s284 + $0x28] sm:$0xff] %vm333, %v700
      %719 = vst.msk [vmem:[%s284 + $0x30] sm:$0xff] %vm333, %v705
      %720 = vst.msk [vmem:[%s284 + $0x38] sm:$0xff] %vm333, %v710
      %s721 = scalar_lea.vmem %s3, 64
      %v722 = vld [vmem:[%s721] sm:$0xff]
      %v723 = vld [vmem:[%s721 + $0x8] sm:$0xff]
      %v724 = vld [vmem:[%s721 + $0x10] sm:$0xff]
      %v725 = vld [vmem:[%s721 + $0x18] sm:$0xff]
      %v726 = vld [vmem:[%s721 + $0x20] sm:$0xff]
      %v727 = vld [vmem:[%s721 + $0x28] sm:$0xff]
      %v728 = vld [vmem:[%s721 + $0x30] sm:$0xff]
      %v729 = vld [vmem:[%s721 + $0x38] sm:$0xff]
      %730 = vrot.lane.b32.xlu0 %v317, 120
      %v731 = vpop.permute.xlu0 %730
      %732 = vrot.lane.b32.xlu0 %v318, 120
      %v733 = vpop.permute.xlu0 %732
      %734 = vrot.lane.b32.xlu0 %v319, 120
      %v735 = vpop.permute.xlu0 %734
      %736 = vrot.lane.b32.xlu0 %v320, 120
      %v737 = vpop.permute.xlu0 %736
      %738 = vrot.lane.b32.xlu0 %v321, 120
      %v739 = vpop.permute.xlu0 %738
      %740 = vrot.lane.b32.xlu0 %v322, 120
      %v741 = vpop.permute.xlu0 %740
      %742 = vrot.lane.b32.xlu0 %v323, 120
      %v743 = vpop.permute.xlu0 %742
      %744 = vrot.lane.b32.xlu0 %v324, 120
      %v745 = vpop.permute.xlu0 %744
      %746 = vrot.lane.b32.xlu0 %v293, 120
      %v747 = vpop.permute.xlu0 %746
      %748 = vrot.lane.b32.xlu0 %v294, 120
      %v749 = vpop.permute.xlu0 %748
      %750 = vrot.lane.b32.xlu0 %v295, 120
      %v751 = vpop.permute.xlu0 %750
      %752 = vrot.lane.b32.xlu0 %v296, 120
      %v753 = vpop.permute.xlu0 %752
      %754 = vrot.lane.b32.xlu0 %v297, 120
      %v755 = vpop.permute.xlu0 %754
      %756 = vrot.lane.b32.xlu0 %v298, 120
      %v757 = vpop.permute.xlu0 %756
      %758 = vrot.lane.b32.xlu0 %v299, 120
      %v759 = vpop.permute.xlu0 %758
      %760 = vrot.lane.b32.xlu0 %v300, 120
      %v761 = vpop.permute.xlu0 %760
      %v762 = vsel %vm333, %v731, 0
      %v764 = vsel %vm333, %v733, 0
      %v766 = vsel %vm333, %v735, 0
      %v768 = vsel %vm333, %v737, 0
      %v770 = vsel %vm333, %v739, 0
      %v772 = vsel %vm333, %v741, 0
      %v774 = vsel %vm333, %v743, 0
      %v776 = vsel %vm333, %v745, 0
      %v778 = vsel %vm333, %v747, 0
      %v780 = vsel %vm333, %v749, 0
      %v782 = vsel %vm333, %v751, 0
      %v784 = vsel %vm333, %v753, 0
      %v786 = vsel %vm333, %v755, 0
      %v788 = vsel %vm333, %v757, 0
      %v790 = vsel %vm333, %v759, 0
      %v792 = vsel %vm333, %v761, 0
      %794 = vmatprep.subr.mxu0 0.0
      %795 = vmatpush1.xpose.msra.mxu0 %v778
      %796 = vmatprep.subr.mxu0 0.0
      %797 = vmatpush1.xpose.msra.mxu0 %v780
      %798 = vmatprep.subr.mxu0 0.0
      %799 = vmatpush1.xpose.msra.mxu0 %v782
      %800 = vmatprep.subr.mxu0 0.0
      %801 = vmatpush1.xpose.msra.mxu0 %v784
      %802 = vmatprep.subr.mxu0 0.0
      %803 = vmatpush1.xpose.msra.mxu0 %v786
      %804 = vmatprep.subr.mxu0 0.0
      %805 = vmatpush1.xpose.msra.mxu0 %v788
      %806 = vmatprep.subr.mxu0 0.0
      %807 = vmatpush1.xpose.msra.mxu0 %v790
      %808 = vmatprep.subr.mxu0 0.0
      %809 = vmatpush1.xpose.msra.mxu0 %v792
      %810 = vmatprep.subr.mxu0 0.0
      %811 = vmatpush1.xpose.msra.mxu0 0.0
      %812 = vmatprep.subr.mxu0 0.0
      %813 = vmatpush1.xpose.msra.mxu0 0.0
      %814 = vmatprep.subr.mxu0 0.0
      %815 = vmatpush1.xpose.msra.mxu0 0.0
      %816 = vmatprep.subr.mxu0 0.0
      %817 = vmatpush1.xpose.msra.mxu0 0.0
      %818 = vmatprep.subr.mxu0 0.0
      %819 = vmatpush1.xpose.msra.mxu0 0.0
      %820 = vmatprep.subr.mxu0 0.0
      %821 = vmatpush1.xpose.msra.mxu0 0.0
      %822 = vmatprep.subr.mxu0 0.0
      %823 = vmatpush1.xpose.msra.mxu0 0.0
      %824 = vmatprep.subr.mxu0 0.0
      %825 = vmatpush1.xpose.msra.mxu0 0.0
      %826 = vmatprep.subr.mxu0 0.0
      %827 = vmatpush1.xpose.msra.mxu0 0.0
      %828 = vmatprep.subr.mxu0 0.0
      %829 = vmatpush1.xpose.msra.mxu0 0.0
      %830 = vmatprep.subr.mxu0 0.0
      %831 = vmatpush1.xpose.msra.mxu0 0.0
      %832 = vmatprep.subr.mxu0 0.0
      %833 = vmatpush1.xpose.msra.mxu0 0.0
      %834 = vmatprep.subr.mxu0 0.0
      %835 = vmatpush1.xpose.msra.mxu0 0.0
      %836 = vmatprep.subr.mxu0 0.0
      %837 = vmatpush1.xpose.msra.mxu0 0.0
      %838 = vmatprep.subr.mxu0 0.0
      %839 = vmatpush1.xpose.msra.mxu0 0.0
      %840 = vmatprep.subr.mxu0 0.0
      %841 = vmatpush1.xpose.msra.mxu0 0.0
      %842 = vmatprep.subr.mxu0 0.0
      %843 = vmatpush1.xpose.msra.mxu0 0.0
      %844 = vmatprep.subr.mxu0 0.0
      %845 = vmatpush1.xpose.msra.mxu0 0.0
      %846 = vmatprep.subr.mxu0 0.0
      %847 = vmatpush1.xpose.msra.mxu0 0.0
      %848 = vmatprep.subr.mxu0 0.0
      %849 = vmatpush1.xpose.msra.mxu0 0.0
      %850 = vmatprep.subr.mxu0 0.0
      %851 = vmatpush1.xpose.msra.mxu0 0.0
      %852 = vmatprep.subr.mxu0 0.0
      %853 = vmatpush1.xpose.msra.mxu0 0.0
      %854 = vmatprep.subr.mxu0 0.0
      %855 = vmatpush1.xpose.msra.mxu0 0.0
      %856 = vmatprep.subr.mxu0 0.0
      %857 = vmatpush1.xpose.msra.mxu0 0.0
      %858 = vmatprep.mubr.f32.mxu0 0.0
      %859 = vmatmul.mubr.f32.gmra.mrb[0].mxu0 %v762
      %v860 = vpop.f32.mrb[0].mxu0
      %v861 = vadd.f32 %v722, %v860
      %v862 = vpop.f32.mrb[0].mxu0
      %863 = vmatprep.mubr.f32.mxu0 0.0
      %864 = vmatmul.mubr.f32.gmra.mrb[0].mxu0 %v764
      %v865 = vpop.f32.mrb[0].mxu0
      %v866 = vadd.f32 %v723, %v865
      %v867 = vpop.f32.mrb[0].mxu0
      %868 = vmatprep.mubr.f32.mxu0 0.0
      %869 = vmatmul.mubr.f32.gmra.mrb[0].mxu0 %v766
      %v870 = vpop.f32.mrb[0].mxu0
      %v871 = vadd.f32 %v724, %v870
      %v872 = vpop.f32.mrb[0].mxu0
      %873 = vmatprep.mubr.f32.mxu0 0.0
      %874 = vmatmul.mubr.f32.gmra.mrb[0].mxu0 %v768
      %v875 = vpop.f32.mrb[0].mxu0
      %v876 = vadd.f32 %v725, %v875
      %v877 = vpop.f32.mrb[0].mxu0
      %878 = vmatprep.mubr.f32.mxu0 0.0
      %879 = vmatmul.mubr.f32.gmra.mrb[0].mxu0 %v770
      %v880 = vpop.f32.mrb[0].mxu0
      %v881 = vadd.f32 %v726, %v880
      %v882 = vpop.f32.mrb[0].mxu0
      %883 = vmatprep.mubr.f32.mxu0 0.0
      %884 = vmatmul.mubr.f32.gmra.mrb[0].mxu0 %v772
      %v885 = vpop.f32.mrb[0].mxu0
      %v886 = vadd.f32 %v727, %v885
      %v887 = vpop.f32.mrb[0].mxu0
      %888 = vmatprep.mubr.f32.mxu0 0.0
      %889 = vmatmul.mubr.f32.gmra.mrb[0].mxu0 %v774
      %v890 = vpop.f32.mrb[0].mxu0
      %v891 = vadd.f32 %v728, %v890
      %v892 = vpop.f32.mrb[0].mxu0
      %893 = vmatprep.mubr.f32.mxu0 0.0
      %894 = vmatmul.mubr.f32.gmra.mrb[0].mxu0 %v776
      %v895 = vpop.f32.mrb[0].mxu0
      %v896 = vadd.f32 %v729, %v895
      %v897 = vpop.f32.mrb[0].mxu0
      %898 = vdwg.mxu0
      %v899 = vadd.f32 %v861, %v309
      %v900 = vadd.f32 %v866, %v310
      %v901 = vadd.f32 %v871, %v311
      %v902 = vadd.f32 %v876, %v312
      %v903 = vadd.f32 %v881, %v313
      %v904 = vadd.f32 %v886, %v314
      %v905 = vadd.f32 %v891, %v315
      %v906 = vadd.f32 %v896, %v316
      %v907 = vsel %vm495, %v899, -inf
      %908 = vmax.xlane.f32.xlu0 %v907
      %v909 = vpop.xlane.xlu0 %908
      %v910 = vsel %vm495, %v900, -inf
      %911 = vmax.xlane.f32.xlu0 %v910
      %v912 = vpop.xlane.xlu0 %911
      %v913 = vsel %vm495, %v901, -inf
      %914 = vmax.xlane.f32.xlu0 %v913
      %v915 = vpop.xlane.xlu0 %914
      %v916 = vsel %vm495, %v902, -inf
      %917 = vmax.xlane.f32.xlu0 %v916
      %v918 = vpop.xlane.xlu0 %917
      %v919 = vsel %vm495, %v903, -inf
      %920 = vmax.xlane.f32.xlu0 %v919
      %v921 = vpop.xlane.xlu0 %920
      %v922 = vsel %vm495, %v904, -inf
      %923 = vmax.xlane.f32.xlu0 %v922
      %v924 = vpop.xlane.xlu0 %923
      %v925 = vsel %vm495, %v905, -inf
      %926 = vmax.xlane.f32.xlu0 %v925
      %v927 = vpop.xlane.xlu0 %926
      %v928 = vsel %vm495, %v906, -inf
      %929 = vmax.xlane.f32.xlu0 %v928
      %v930 = vpop.xlane.xlu0 %929
      %v931 = vsub.f32 %v899, %v909
      %v932 = vsub.f32 %v900, %v912
      %v933 = vsub.f32 %v901, %v915
      %v934 = vsub.f32 %v902, %v918
      %v935 = vsub.f32 %v903, %v921
      %v936 = vsub.f32 %v904, %v924
      %v937 = vsub.f32 %v905, %v927
      %v938 = vsub.f32 %v906, %v930
      %v939 = vmul.f32 %v931, 1.442695
      %v940 = vpow.pop %v939
      %v941 = vmul.f32 %v932, 1.442695
      %v942 = vpow.pop %v941
      %v943 = vmul.f32 %v933, 1.442695
      %v944 = vpow.pop %v943
      %v945 = vmul.f32 %v934, 1.442695
      %v946 = vpow.pop %v945
      %v947 = vmul.f32 %v935, 1.442695
      %v948 = vpow.pop %v947
      %v949 = vmul.f32 %v936, 1.442695
      %v950 = vpow.pop %v949
      %v951 = vmul.f32 %v937, 1.442695
      %v952 = vpow.pop %v951
      %v953 = vmul.f32 %v938, 1.442695
      %v954 = vpow.pop %v953
      %v955 = vsel %vm495, %v940, 0.0
      %956 = vadd.xlane.f32.xlu0 %v955
      %v957 = vpop.xlane.xlu0 %956
      %v958 = vsel %vm495, %v942, 0.0
      %959 = vadd.xlane.f32.xlu0 %v958
      %v960 = vpop.xlane.xlu0 %959
      %v961 = vsel %vm495, %v944, 0.0
      %962 = vadd.xlane.f32.xlu0 %v961
      %v963 = vpop.xlane.xlu0 %962
      %v964 = vsel %vm495, %v946, 0.0
      %965 = vadd.xlane.f32.xlu0 %v964
      %v966 = vpop.xlane.xlu0 %965
      %v967 = vsel %vm495, %v948, 0.0
      %968 = vadd.xlane.f32.xlu0 %v967
      %v969 = vpop.xlane.xlu0 %968
      %v970 = vsel %vm495, %v950, 0.0
      %971 = vadd.xlane.f32.xlu0 %v970
      %v972 = vpop.xlane.xlu0 %971
      %v973 = vsel %vm495, %v952, 0.0
      %974 = vadd.xlane.f32.xlu0 %v973
      %v975 = vpop.xlane.xlu0 %974
      %v976 = vsel %vm495, %v954, 0.0
      %977 = vadd.xlane.f32.xlu0 %v976
      %v978 = vpop.xlane.xlu0 %977
      %v979 = vrcp.pop %v957
      %v980 = vmul.f32 %v940, %v979
      %v981 = vrcp.pop %v960
      %v982 = vmul.f32 %v942, %v981
      %v983 = vrcp.pop %v963
      %v984 = vmul.f32 %v944, %v983
      %v985 = vrcp.pop %v966
      %v986 = vmul.f32 %v946, %v985
      %v987 = vrcp.pop %v969
      %v988 = vmul.f32 %v948, %v987
      %v989 = vrcp.pop %v972
      %v990 = vmul.f32 %v950, %v989
      %v991 = vrcp.pop %v975
      %v992 = vmul.f32 %v952, %v991
      %v993 = vrcp.pop %v978
      %v994 = vmul.f32 %v954, %v993
      %1003 = vrot.lane.b32.xlu0 %v301, 120
      %v1004 = vpop.permute.xlu0 %1003
      %1005 = vrot.lane.b32.xlu0 %v302, 120
      %v1006 = vpop.permute.xlu0 %1005
      %1007 = vrot.lane.b32.xlu0 %v303, 120
      %v1008 = vpop.permute.xlu0 %1007
      %1009 = vrot.lane.b32.xlu0 %v304, 120
      %v1010 = vpop.permute.xlu0 %1009
      %1011 = vrot.lane.b32.xlu0 %v305, 120
      %v1012 = vpop.permute.xlu0 %1011
      %1013 = vrot.lane.b32.xlu0 %v306, 120
      %v1014 = vpop.permute.xlu0 %1013
      %1015 = vrot.lane.b32.xlu0 %v307, 120
      %v1016 = vpop.permute.xlu0 %1015
      %1017 = vrot.lane.b32.xlu0 %v308, 120
      %v1018 = vpop.permute.xlu0 %1017
      %v1028 = vsel %vm495, %v980, 0
      %v1031 = vsel %vm495, %v982, 0
      %v1034 = vsel %vm495, %v984, 0
      %v1037 = vsel %vm495, %v986, 0
      %v1040 = vsel %vm495, %v988, 0
      %v1043 = vsel %vm495, %v990, 0
      %v1046 = vsel %vm495, %v992, 0
      %v1049 = vsel %vm495, %v994, 0
      %1051 = vmatprep.subr.mxu0 0.0
      %1052 = vmatpush1.msra.mxu0 %v1004
      %1053 = vmatprep.subr.mxu0 0.0
      %1054 = vmatpush1.msra.mxu0 %v1006
      %1055 = vmatprep.subr.mxu0 0.0
      %1056 = vmatpush1.msra.mxu0 %v1008
      %1057 = vmatprep.subr.mxu0 0.0
      %1058 = vmatpush1.msra.mxu0 %v1010
      %1059 = vmatprep.subr.mxu0 0.0
      %1060 = vmatpush1.msra.mxu0 %v1012
      %1061 = vmatprep.subr.mxu0 0.0
      %1062 = vmatpush1.msra.mxu0 %v1014
      %1063 = vmatprep.subr.mxu0 0.0
      %1064 = vmatpush1.msra.mxu0 %v1016
      %1065 = vmatprep.subr.mxu0 0.0
      %1066 = vmatpush1.msra.mxu0 %v1018
      %1067 = vmatprep.subr.mxu0 0.0
      %1068 = vmatpush1.msra.mxu0 0.0
      %1069 = vmatprep.subr.mxu0 0.0
      %1070 = vmatpush1.msra.mxu0 0.0
      %1071 = vmatprep.subr.mxu0 0.0
      %1072 = vmatpush1.msra.mxu0 0.0
      %1073 = vmatprep.subr.mxu0 0.0
      %1074 = vmatpush1.msra.mxu0 0.0
      %1075 = vmatprep.subr.mxu0 0.0
      %1076 = vmatpush1.msra.mxu0 0.0
      %1077 = vmatprep.subr.mxu0 0.0
      %1078 = vmatpush1.msra.mxu0 0.0
      %1079 = vmatprep.subr.mxu0 0.0
      %1080 = vmatpush1.msra.mxu0 0.0
      %1081 = vmatprep.subr.mxu0 0.0
      %1082 = vmatpush1.msra.mxu0 0.0
      %1083 = vmatprep.subr.mxu0 0.0
      %1084 = vmatpush1.msra.mxu0 0.0
      %1085 = vmatprep.subr.mxu0 0.0
      %1086 = vmatpush1.msra.mxu0 0.0
      %1087 = vmatprep.subr.mxu0 0.0
      %1088 = vmatpush1.msra.mxu0 0.0
      %1089 = vmatprep.subr.mxu0 0.0
      %1090 = vmatpush1.msra.mxu0 0.0
      %1091 = vmatprep.subr.mxu0 0.0
      %1092 = vmatpush1.msra.mxu0 0.0
      %1093 = vmatprep.subr.mxu0 0.0
      %1094 = vmatpush1.msra.mxu0 0.0
      %1095 = vmatprep.subr.mxu0 0.0
      %1096 = vmatpush1.msra.mxu0 0.0
      %1097 = vmatprep.subr.mxu0 0.0
      %1098 = vmatpush1.msra.mxu0 0.0
      %1099 = vmatprep.subr.mxu0 0.0
      %1100 = vmatpush1.msra.mxu0 0.0
      %1101 = vmatprep.subr.mxu0 0.0
      %1102 = vmatpush1.msra.mxu0 0.0
      %1103 = vmatprep.subr.mxu0 0.0
      %1104 = vmatpush1.msra.mxu0 0.0
      %1105 = vmatprep.subr.mxu0 0.0
      %1106 = vmatpush1.msra.mxu0 0.0
      %1107 = vmatprep.subr.mxu0 0.0
      %1108 = vmatpush1.msra.mxu0 0.0
      %1109 = vmatprep.subr.mxu0 0.0
      %1110 = vmatpush1.msra.mxu0 0.0
      %1111 = vmatprep.subr.mxu0 0.0
      %1112 = vmatpush1.msra.mxu0 0.0
      %1113 = vmatprep.subr.mxu0 0.0
      %1114 = vmatpush1.msra.mxu0 0.0
      %1115 = vmatprep.mubr.f32.mxu0 0.0
      %1116 = vmatmul.mubr.f32.gmra.mrb[0].mxu0 %v1028
      %v1117 = vpop.f32.mrb[0].mxu0
      %v1118 = vadd.f32 0.0, %v1117
      %v1119 = vpop.f32.mrb[0].mxu0
      %1120 = vmatprep.mubr.f32.mxu0 0.0
      %1121 = vmatmul.mubr.f32.gmra.mrb[0].mxu0 %v1031
      %v1122 = vpop.f32.mrb[0].mxu0
      %v1123 = vadd.f32 0.0, %v1122
      %v1124 = vpop.f32.mrb[0].mxu0
      %1125 = vmatprep.mubr.f32.mxu0 0.0
      %1126 = vmatmul.mubr.f32.gmra.mrb[0].mxu0 %v1034
      %v1127 = vpop.f32.mrb[0].mxu0
      %v1128 = vadd.f32 0.0, %v1127
      %v1129 = vpop.f32.mrb[0].mxu0
      %1130 = vmatprep.mubr.f32.mxu0 0.0
      %1131 = vmatmul.mubr.f32.gmra.mrb[0].mxu0 %v1037
      %v1132 = vpop.f32.mrb[0].mxu0
      %v1133 = vadd.f32 0.0, %v1132
      %v1134 = vpop.f32.mrb[0].mxu0
      %1135 = vmatprep.mubr.f32.mxu0 0.0
      %1136 = vmatmul.mubr.f32.gmra.mrb[0].mxu0 %v1040
      %v1137 = vpop.f32.mrb[0].mxu0
      %v1138 = vadd.f32 0.0, %v1137
      %v1139 = vpop.f32.mrb[0].mxu0
      %1140 = vmatprep.mubr.f32.mxu0 0.0
      %1141 = vmatmul.mubr.f32.gmra.mrb[0].mxu0 %v1043
      %v1142 = vpop.f32.mrb[0].mxu0
      %v1143 = vadd.f32 0.0, %v1142
      %v1144 = vpop.f32.mrb[0].mxu0
      %1145 = vmatprep.mubr.f32.mxu0 0.0
      %1146 = vmatmul.mubr.f32.gmra.mrb[0].mxu0 %v1046
      %v1147 = vpop.f32.mrb[0].mxu0
      %v1148 = vadd.f32 0.0, %v1147
      %v1149 = vpop.f32.mrb[0].mxu0
      %1150 = vmatprep.mubr.f32.mxu0 0.0
      %1151 = vmatmul.mubr.f32.gmra.mrb[0].mxu0 %v1049
      %v1152 = vpop.f32.mrb[0].mxu0
      %v1153 = vadd.f32 0.0, %v1152
      %v1154 = vpop.f32.mrb[0].mxu0
      %1155 = vdwg.mxu0
      %1164 = vrot.lane.b32.xlu0 %v1118, 8
      %v1165 = vpop.permute.xlu0 %1164
      %1166 = vrot.lane.b32.xlu0 %v1123, 8
      %v1167 = vpop.permute.xlu0 %1166
      %1168 = vrot.lane.b32.xlu0 %v1128, 8
      %v1169 = vpop.permute.xlu0 %1168
      %1170 = vrot.lane.b32.xlu0 %v1133, 8
      %v1171 = vpop.permute.xlu0 %1170
      %1172 = vrot.lane.b32.xlu0 %v1138, 8
      %v1173 = vpop.permute.xlu0 %1172
      %1174 = vrot.lane.b32.xlu0 %v1143, 8
      %v1175 = vpop.permute.xlu0 %1174
      %1176 = vrot.lane.b32.xlu0 %v1148, 8
      %v1177 = vpop.permute.xlu0 %1176
      %1178 = vrot.lane.b32.xlu0 %v1153, 8
      %v1179 = vpop.permute.xlu0 %1178
      %vm1188 = vcmask 130112
      %1189 = vst.msk [vmem:[%s284] sm:$0xff] %vm1188, %v1165
      %1190 = vst.msk [vmem:[%s284 + $0x8] sm:$0xff] %vm1188, %v1167
      %1191 = vst.msk [vmem:[%s284 + $0x10] sm:$0xff] %vm1188, %v1169
      %1192 = vst.msk [vmem:[%s284 + $0x18] sm:$0xff] %vm1188, %v1171
      %1193 = vst.msk [vmem:[%s284 + $0x20] sm:$0xff] %vm1188, %v1173
      %1194 = vst.msk [vmem:[%s284 + $0x28] sm:$0xff] %vm1188, %v1175
      %1195 = vst.msk [vmem:[%s284 + $0x30] sm:$0xff] %vm1188, %v1177
      %1196 = vst.msk [vmem:[%s284 + $0x38] sm:$0xff] %vm1188, %v1179
      %s1197 = scalar_lea.vmem %s3, 128
      %v1198 = vld [vmem:[%s1197] sm:$0xff]
      %v1199 = vld [vmem:[%s1197 + $0x8] sm:$0xff]
      %v1200 = vld [vmem:[%s1197 + $0x10] sm:$0xff]
      %v1201 = vld [vmem:[%s1197 + $0x18] sm:$0xff]
      %v1202 = vld [vmem:[%s1197 + $0x20] sm:$0xff]
      %v1203 = vld [vmem:[%s1197 + $0x28] sm:$0xff]
      %v1204 = vld [vmem:[%s1197 + $0x30] sm:$0xff]
      %v1205 = vld [vmem:[%s1197 + $0x38] sm:$0xff]
      %1206 = vrot.lane.b32.xlu0 %v317, 112
      %v1207 = vpop.permute.xlu0 %1206
      %1208 = vrot.lane.b32.xlu0 %v318, 112
      %v1209 = vpop.permute.xlu0 %1208
      %1210 = vrot.lane.b32.xlu0 %v319, 112
      %v1211 = vpop.permute.xlu0 %1210
      %1212 = vrot.lane.b32.xlu0 %v320, 112
      %v1213 = vpop.permute.xlu0 %1212
      %1214 = vrot.lane.b32.xlu0 %v321, 112
      %v1215 = vpop.permute.xlu0 %1214
      %1216 = vrot.lane.b32.xlu0 %v322, 112
      %v1217 = vpop.permute.xlu0 %1216
      %1218 = vrot.lane.b32.xlu0 %v323, 112
      %v1219 = vpop.permute.xlu0 %1218
      %1220 = vrot.lane.b32.xlu0 %v324, 112
      %v1221 = vpop.permute.xlu0 %1220
      %1222 = vrot.lane.b32.xlu0 %v293, 112
      %v1223 = vpop.permute.xlu0 %1222
      %1224 = vrot.lane.b32.xlu0 %v294, 112
      %v1225 = vpop.permute.xlu0 %1224
      %1226 = vrot.lane.b32.xlu0 %v295, 112
      %v1227 = vpop.permute.xlu0 %1226
      %1228 = vrot.lane.b32.xlu0 %v296, 112
      %v1229 = vpop.permute.xlu0 %1228
      %1230 = vrot.lane.b32.xlu0 %v297, 112
      %v1231 = vpop.permute.xlu0 %1230
      %1232 = vrot.lane.b32.xlu0 %v298, 112
      %v1233 = vpop.permute.xlu0 %1232
      %1234 = vrot.lane.b32.xlu0 %v299, 112
      %v1235 = vpop.permute.xlu0 %1234
      %1236 = vrot.lane.b32.xlu0 %v300, 112
      %v1237 = vpop.permute.xlu0 %1236
      %v1238 = vsel %vm333, %v1207, 0
      %v1240 = vsel %vm333, %v1209, 0
      %v1242 = vsel %vm333, %v1211, 0
      %v1244 = vsel %vm333, %v1213, 0
      %v1246 = vsel %vm333, %v1215, 0
      %v1248 = vsel %vm333, %v1217, 0
      %v1250 = vsel %vm333, %v1219, 0
      %v1252 = vsel %vm333, %v1221, 0
      %v1254 = vsel %vm333, %v1223, 0
      %v1256 = vsel %vm333, %v1225, 0
      %v1258 = vsel %vm333, %v1227, 0
      %v1260 = vsel %vm333, %v1229, 0
      %v1262 = vsel %vm333, %v1231, 0
      %v1264 = vsel %vm333, %v1233, 0
      %v1266 = vsel %vm333, %v1235, 0
      %v1268 = vsel %vm333, %v1237, 0
      %1270 = vmatprep.subr.mxu0 0.0
      %1271 = vmatpush1.xpose.msra.mxu0 %v1254
      %1272 = vmatprep.subr.mxu0 0.0
      %1273 = vmatpush1.xpose.msra.mxu0 %v1256
      %1274 = vmatprep.subr.mxu0 0.0
      %1275 = vmatpush1.xpose.msra.mxu0 %v1258
      %1276 = vmatprep.subr.mxu0 0.0
      %1277 = vmatpush1.xpose.msra.mxu0 %v1260
      %1278 = vmatprep.subr.mxu0 0.0
      %1279 = vmatpush1.xpose.msra.mxu0 %v1262
      %1280 = vmatprep.subr.mxu0 0.0
      %1281 = vmatpush1.xpose.msra.mxu0 %v1264
      %1282 = vmatprep.subr.mxu0 0.0
      %1283 = vmatpush1.xpose.msra.mxu0 %v1266
      %1284 = vmatprep.subr.mxu0 0.0
      %1285 = vmatpush1.xpose.msra.mxu0 %v1268
      %1286 = vmatprep.subr.mxu0 0.0
      %1287 = vmatpush1.xpose.msra.mxu0 0.0
      %1288 = vmatprep.subr.mxu0 0.0
      %1289 = vmatpush1.xpose.msra.mxu0 0.0
      %1290 = vmatprep.subr.mxu0 0.0
      %1291 = vmatpush1.xpose.msra.mxu0 0.0
      %1292 = vmatprep.subr.mxu0 0.0
      %1293 = vmatpush1.xpose.msra.mxu0 0.0
      %1294 = vmatprep.subr.mxu0 0.0
      %1295 = vmatpush1.xpose.msra.mxu0 0.0
      %1296 = vmatprep.subr.mxu0 0.0
      %1297 = vmatpush1.xpose.msra.mxu0 0.0
      %1298 = vmatprep.subr.mxu0 0.0
      %1299 = vmatpush1.xpose.msra.mxu0 0.0
      %1300 = vmatprep.subr.mxu0 0.0
      %1301 = vmatpush1.xpose.msra.mxu0 0.0
      %1302 = vmatprep.subr.mxu0 0.0
      %1303 = vmatpush1.xpose.msra.mxu0 0.0
      %1304 = vmatprep.subr.mxu0 0.0
      %1305 = vmatpush1.xpose.msra.mxu0 0.0
      %1306 = vmatprep.subr.mxu0 0.0
      %1307 = vmatpush1.xpose.msra.mxu0 0.0
      %1308 = vmatprep.subr.mxu0 0.0
      %1309 = vmatpush1.xpose.msra.mxu0 0.0
      %1310 = vmatprep.subr.mxu0 0.0
      %1311 = vmatpush1.xpose.msra.mxu0 0.0
      %1312 = vmatprep.subr.mxu0 0.0
      %1313 = vmatpush1.xpose.msra.mxu0 0.0
      %1314 = vmatprep.subr.mxu0 0.0
      %1315 = vmatpush1.xpose.msra.mxu0 0.0
      %1316 = vmatprep.subr.mxu0 0.0
      %1317 = vmatpush1.xpose.msra.mxu0 0.0
      %1318 = vmatprep.subr.mxu0 0.0
      %1319 = vmatpush1.xpose.msra.mxu0 0.0
      %1320 = vmatprep.subr.mxu0 0.0
      %1321 = vmatpush1.xpose.msra.mxu0 0.0
      %1322 = vmatprep.subr.mxu0 0.0
      %1323 = vmatpush1.xpose.msra.mxu0 0.0
      %1324 = vmatprep.subr.mxu0 0.0
      %1325 = vmatpush1.xpose.msra.mxu0 0.0
      %1326 = vmatprep.subr.mxu0 0.0
      %1327 = vmatpush1.xpose.msra.mxu0 0.0
      %1328 = vmatprep.subr.mxu0 0.0
      %1329 = vmatpush1.xpose.msra.mxu0 0.0
      %1330 = vmatprep.subr.mxu0 0.0
      %1331 = vmatpush1.xpose.msra.mxu0 0.0
      %1332 = vmatprep.subr.mxu0 0.0
      %1333 = vmatpush1.xpose.msra.mxu0 0.0
      %1334 = vmatprep.mubr.f32.mxu0 0.0
      %1335 = vmatmul.mubr.f32.gmra.mrb[0].mxu0 %v1238
      %v1336 = vpop.f32.mrb[0].mxu0
      %v1337 = vadd.f32 %v1198, %v1336
      %v1338 = vpop.f32.mrb[0].mxu0
      %1339 = vmatprep.mubr.f32.mxu0 0.0
      %1340 = vmatmul.mubr.f32.gmra.mrb[0].mxu0 %v1240
      %v1341 = vpop.f32.mrb[0].mxu0
      %v1342 = vadd.f32 %v1199, %v1341
      %v1343 = vpop.f32.mrb[0].mxu0
      %1344 = vmatprep.mubr.f32.mxu0 0.0
      %1345 = vmatmul.mubr.f32.gmra.mrb[0].mxu0 %v1242
      %v1346 = vpop.f32.mrb[0].mxu0
      %v1347 = vadd.f32 %v1200, %v1346
      %v1348 = vpop.f32.mrb[0].mxu0
      %1349 = vmatprep.mubr.f32.mxu0 0.0
      %1350 = vmatmul.mubr.f32.gmra.mrb[0].mxu0 %v1244
      %v1351 = vpop.f32.mrb[0].mxu0
      %v1352 = vadd.f32 %v1201, %v1351
      %v1353 = vpop.f32.mrb[0].mxu0
      %1354 = vmatprep.mubr.f32.mxu0 0.0
      %1355 = vmatmul.mubr.f32.gmra.mrb[0].mxu0 %v1246
      %v1356 = vpop.f32.mrb[0].mxu0
      %v1357 = vadd.f32 %v1202, %v1356
      %v1358 = vpop.f32.mrb[0].mxu0
      %1359 = vmatprep.mubr.f32.mxu0 0.0
      %1360 = vmatmul.mubr.f32.gmra.mrb[0].mxu0 %v1248
      %v1361 = vpop.f32.mrb[0].mxu0
      %v1362 = vadd.f32 %v1203, %v1361
      %v1363 = vpop.f32.mrb[0].mxu0
      %1364 = vmatprep.mubr.f32.mxu0 0.0
      %1365 = vmatmul.mubr.f32.gmra.mrb[0].mxu0 %v1250
      %v1366 = vpop.f32.mrb[0].mxu0
      %v1367 = vadd.f32 %v1204, %v1366
      %v1368 = vpop.f32.mrb[0].mxu0
      %1369 = vmatprep.mubr.f32.mxu0 0.0
      %1370 = vmatmul.mubr.f32.gmra.mrb[0].mxu0 %v1252
      %v1371 = vpop.f32.mrb[0].mxu0
      %v1372 = vadd.f32 %v1205, %v1371
      %v1373 = vpop.f32.mrb[0].mxu0
      %1374 = vdwg.mxu0
      %v1375 = vadd.f32 %v1337, %v309
      %v1376 = vadd.f32 %v1342, %v310
      %v1377 = vadd.f32 %v1347, %v311
      %v1378 = vadd.f32 %v1352, %v312
      %v1379 = vadd.f32 %v1357, %v313
      %v1380 = vadd.f32 %v1362, %v314
      %v1381 = vadd.f32 %v1367, %v315
      %v1382 = vadd.f32 %v1372, %v316
      %v1383 = vsel %vm495, %v1375, -inf
      %1384 = vmax.xlane.f32.xlu0 %v1383
      %v1385 = vpop.xlane.xlu0 %1384
      %v1386 = vsel %vm495, %v1376, -inf
      %1387 = vmax.xlane.f32.xlu0 %v1386
      %v1388 = vpop.xlane.xlu0 %1387
      %v1389 = vsel %vm495, %v1377, -inf
      %1390 = vmax.xlane.f32.xlu0 %v1389
      %v1391 = vpop.xlane.xlu0 %1390
      %v1392 = vsel %vm495, %v1378, -inf
      %1393 = vmax.xlane.f32.xlu0 %v1392
      %v1394 = vpop.xlane.xlu0 %1393
      %v1395 = vsel %vm495, %v1379, -inf
      %1396 = vmax.xlane.f32.xlu0 %v1395
      %v1397 = vpop.xlane.xlu0 %1396
      %v1398 = vsel %vm495, %v1380, -inf
      %1399 = vmax.xlane.f32.xlu0 %v1398
      %v1400 = vpop.xlane.xlu0 %1399
      %v1401 = vsel %vm495, %v1381, -inf
      %1402 = vmax.xlane.f32.xlu0 %v1401
      %v1403 = vpop.xlane.xlu0 %1402
      %v1404 = vsel %vm495, %v1382, -inf
      %1405 = vmax.xlane.f32.xlu0 %v1404
      %v1406 = vpop.xlane.xlu0 %1405
      %v1407 = vsub.f32 %v1375, %v1385
      %v1408 = vsub.f32 %v1376, %v1388
      %v1409 = vsub.f32 %v1377, %v1391
      %v1410 = vsub.f32 %v1378, %v1394
      %v1411 = vsub.f32 %v1379, %v1397
      %v1412 = vsub.f32 %v1380, %v1400
      %v1413 = vsub.f32 %v1381, %v1403
      %v1414 = vsub.f32 %v1382, %v1406
      %v1415 = vmul.f32 %v1407, 1.442695
      %v1416 = vpow.pop %v1415
      %v1417 = vmul.f32 %v1408, 1.442695
      %v1418 = vpow.pop %v1417
      %v1419 = vmul.f32 %v1409, 1.442695
      %v1420 = vpow.pop %v1419
      %v1421 = vmul.f32 %v1410, 1.442695
      %v1422 = vpow.pop %v1421
      %v1423 = vmul.f32 %v1411, 1.442695
      %v1424 = vpow.pop %v1423
      %v1425 = vmul.f32 %v1412, 1.442695
      %v1426 = vpow.pop %v1425
      %v1427 = vmul.f32 %v1413, 1.442695
      %v1428 = vpow.pop %v1427
      %v1429 = vmul.f32 %v1414, 1.442695
      %v1430 = vpow.pop %v1429
      %v1431 = vsel %vm495, %v1416, 0.0
      %1432 = vadd.xlane.f32.xlu0 %v1431
      %v1433 = vpop.xlane.xlu0 %1432
      %v1434 = vsel %vm495, %v1418, 0.0
      %1435 = vadd.xlane.f32.xlu0 %v1434
      %v1436 = vpop.xlane.xlu0 %1435
      %v1437 = vsel %vm495, %v1420, 0.0
      %1438 = vadd.xlane.f32.xlu0 %v1437
      %v1439 = vpop.xlane.xlu0 %1438
      %v1440 = vsel %vm495, %v1422, 0.0
      %1441 = vadd.xlane.f32.xlu0 %v1440
      %v1442 = vpop.xlane.xlu0 %1441
      %v1443 = vsel %vm495, %v1424, 0.0
      %1444 = vadd.xlane.f32.xlu0 %v1443
      %v1445 = vpop.xlane.xlu0 %1444
      %v1446 = vsel %vm495, %v1426, 0.0
      %1447 = vadd.xlane.f32.xlu0 %v1446
      %v1448 = vpop.xlane.xlu0 %1447
      %v1449 = vsel %vm495, %v1428, 0.0
      %1450 = vadd.xlane.f32.xlu0 %v1449
      %v1451 = vpop.xlane.xlu0 %1450
      %v1452 = vsel %vm495, %v1430, 0.0
      %1453 = vadd.xlane.f32.xlu0 %v1452
      %v1454 = vpop.xlane.xlu0 %1453
      %v1455 = vrcp.pop %v1433
      %v1456 = vmul.f32 %v1416, %v1455
      %v1457 = vrcp.pop %v1436
      %v1458 = vmul.f32 %v1418, %v1457
      %v1459 = vrcp.pop %v1439
      %v1460 = vmul.f32 %v1420, %v1459
      %v1461 = vrcp.pop %v1442
      %v1462 = vmul.f32 %v1422, %v1461
      %v1463 = vrcp.pop %v1445
      %v1464 = vmul.f32 %v1424, %v1463
      %v1465 = vrcp.pop %v1448
      %v1466 = vmul.f32 %v1426, %v1465
      %v1467 = vrcp.pop %v1451
      %v1468 = vmul.f32 %v1428, %v1467
      %v1469 = vrcp.pop %v1454
      %v1470 = vmul.f32 %v1430, %v1469
      %1471 = vrot.lane.b32.xlu0 %v301, 112
      %v1472 = vpop.permute.xlu0 %1471
      %1473 = vrot.lane.b32.xlu0 %v302, 112
      %v1474 = vpop.permute.xlu0 %1473
      %1475 = vrot.lane.b32.xlu0 %v303, 112
      %v1476 = vpop.permute.xlu0 %1475
      %1477 = vrot.lane.b32.xlu0 %v304, 112
      %v1478 = vpop.permute.xlu0 %1477
      %1479 = vrot.lane.b32.xlu0 %v305, 112
      %v1480 = vpop.permute.xlu0 %1479
      %1481 = vrot.lane.b32.xlu0 %v306, 112
      %v1482 = vpop.permute.xlu0 %1481
      %1483 = vrot.lane.b32.xlu0 %v307, 112
      %v1484 = vpop.permute.xlu0 %1483
      %1485 = vrot.lane.b32.xlu0 %v308, 112
      %v1486 = vpop.permute.xlu0 %1485
      %v1496 = vsel %vm495, %v1456, 0
      %v1499 = vsel %vm495, %v1458, 0
      %v1502 = vsel %vm495, %v1460, 0
      %v1505 = vsel %vm495, %v1462, 0
      %v1508 = vsel %vm495, %v1464, 0
      %v1511 = vsel %vm495, %v1466, 0
      %v1514 = vsel %vm495, %v1468, 0
      %v1517 = vsel %vm495, %v1470, 0
      %1519 = vmatprep.subr.mxu0 0.0
      %1520 = vmatpush1.msra.mxu0 %v1472
      %1521 = vmatprep.subr.mxu0 0.0
      %1522 = vmatpush1.msra.mxu0 %v1474
      %1523 = vmatprep.subr.mxu0 0.0
      %1524 = vmatpush1.msra.mxu0 %v1476
      %1525 = vmatprep.subr.mxu0 0.0
      %1526 = vmatpush1.msra.mxu0 %v1478
      %1527 = vmatprep.subr.mxu0 0.0
      %1528 = vmatpush1.msra.mxu0 %v1480
      %1529 = vmatprep.subr.mxu0 0.0
      %1530 = vmatpush1.msra.mxu0 %v1482
      %1531 = vmatprep.subr.mxu0 0.0
      %1532 = vmatpush1.msra.mxu0 %v1484
      %1533 = vmatprep.subr.mxu0 0.0
      %1534 = vmatpush1.msra.mxu0 %v1486
      %1535 = vmatprep.subr.mxu0 0.0
      %1536 = vmatpush1.msra.mxu0 0.0
      %1537 = vmatprep.subr.mxu0 0.0
      %1538 = vmatpush1.msra.mxu0 0.0
      %1539 = vmatprep.subr.mxu0 0.0
      %1540 = vmatpush1.msra.mxu0 0.0
      %1541 = vmatprep.subr.mxu0 0.0
      %1542 = vmatpush1.msra.mxu0 0.0
      %1543 = vmatprep.subr.mxu0 0.0
      %1544 = vmatpush1.msra.mxu0 0.0
      %1545 = vmatprep.subr.mxu0 0.0
      %1546 = vmatpush1.msra.mxu0 0.0
      %1547 = vmatprep.subr.mxu0 0.0
      %1548 = vmatpush1.msra.mxu0 0.0
      %1549 = vmatprep.subr.mxu0 0.0
      %1550 = vmatpush1.msra.mxu0 0.0
      %1551 = vmatprep.subr.mxu0 0.0
      %1552 = vmatpush1.msra.mxu0 0.0
      %1553 = vmatprep.subr.mxu0 0.0
      %1554 = vmatpush1.msra.mxu0 0.0
      %1555 = vmatprep.subr.mxu0 0.0
      %1556 = vmatpush1.msra.mxu0 0.0
      %1557 = vmatprep.subr.mxu0 0.0
      %1558 = vmatpush1.msra.mxu0 0.0
      %1559 = vmatprep.subr.mxu0 0.0
      %1560 = vmatpush1.msra.mxu0 0.0
      %1561 = vmatprep.subr.mxu0 0.0
      %1562 = vmatpush1.msra.mxu0 0.0
      %1563 = vmatprep.subr.mxu0 0.0
      %1564 = vmatpush1.msra.mxu0 0.0
      %1565 = vmatprep.subr.mxu0 0.0
      %1566 = vmatpush1.msra.mxu0 0.0
      %1567 = vmatprep.subr.mxu0 0.0
      %1568 = vmatpush1.msra.mxu0 0.0
      %1569 = vmatprep.subr.mxu0 0.0
      %1570 = vmatpush1.msra.mxu0 0.0
      %1571 = vmatprep.subr.mxu0 0.0
      %1572 = vmatpush1.msra.mxu0 0.0
      %1573 = vmatprep.subr.mxu0 0.0
      %1574 = vmatpush1.msra.mxu0 0.0
      %1575 = vmatprep.subr.mxu0 0.0
      %1576 = vmatpush1.msra.mxu0 0.0
      %1577 = vmatprep.subr.mxu0 0.0
      %1578 = vmatpush1.msra.mxu0 0.0
      %1579 = vmatprep.subr.mxu0 0.0
      %1580 = vmatpush1.msra.mxu0 0.0
      %1581 = vmatprep.subr.mxu0 0.0
      %1582 = vmatpush1.msra.mxu0 0.0
      %1583 = vmatprep.mubr.f32.mxu0 0.0
      %1584 = vmatmul.mubr.f32.gmra.mrb[0].mxu0 %v1496
      %v1585 = vpop.f32.mrb[0].mxu0
      %v1586 = vadd.f32 0.0, %v1585
      %v1587 = vpop.f32.mrb[0].mxu0
      %1588 = vmatprep.mubr.f32.mxu0 0.0
      %1589 = vmatmul.mubr.f32.gmra.mrb[0].mxu0 %v1499
      %v1590 = vpop.f32.mrb[0].mxu0
      %v1591 = vadd.f32 0.0, %v1590
      %v1592 = vpop.f32.mrb[0].mxu0
      %1593 = vmatprep.mubr.f32.mxu0 0.0
      %1594 = vmatmul.mubr.f32.gmra.mrb[0].mxu0 %v1502
      %v1595 = vpop.f32.mrb[0].mxu0
      %v1596 = vadd.f32 0.0, %v1595
      %v1597 = vpop.f32.mrb[0].mxu0
      %1598 = vmatprep.mubr.f32.mxu0 0.0
      %1599 = vmatmul.mubr.f32.gmra.mrb[0].mxu0 %v1505
      %v1600 = vpop.f32.mrb[0].mxu0
      %v1601 = vadd.f32 0.0, %v1600
      %v1602 = vpop.f32.mrb[0].mxu0
      %1603 = vmatprep.mubr.f32.mxu0 0.0
      %1604 = vmatmul.mubr.f32.gmra.mrb[0].mxu0 %v1508
      %v1605 = vpop.f32.mrb[0].mxu0
      %v1606 = vadd.f32 0.0, %v1605
      %v1607 = vpop.f32.mrb[0].mxu0
      %1608 = vmatprep.mubr.f32.mxu0 0.0
      %1609 = vmatmul.mubr.f32.gmra.mrb[0].mxu0 %v1511
      %v1610 = vpop.f32.mrb[0].mxu0
      %v1611 = vadd.f32 0.0, %v1610
      %v1612 = vpop.f32.mrb[0].mxu0
      %1613 = vmatprep.mubr.f32.mxu0 0.0
      %1614 = vmatmul.mubr.f32.gmra.mrb[0].mxu0 %v1514
      %v1615 = vpop.f32.mrb[0].mxu0
      %v1616 = vadd.f32 0.0, %v1615
      %v1617 = vpop.f32.mrb[0].mxu0
      %1618 = vmatprep.mubr.f32.mxu0 0.0
      %1619 = vmatmul.mubr.f32.gmra.mrb[0].mxu0 %v1517
      %v1620 = vpop.f32.mrb[0].mxu0
      %v1621 = vadd.f32 0.0, %v1620
      %v1622 = vpop.f32.mrb[0].mxu0
      %1623 = vdwg.mxu0
      %1632 = vrot.lane.b32.xlu0 %v1586, 16
      %v1633 = vpop.permute.xlu0 %1632
      %1634 = vrot.lane.b32.xlu0 %v1591, 16
      %v1635 = vpop.permute.xlu0 %1634
      %1636 = vrot.lane.b32.xlu0 %v1596, 16
      %v1637 = vpop.permute.xlu0 %1636
      %1638 = vrot.lane.b32.xlu0 %v1601, 16
      %v1639 = vpop.permute.xlu0 %1638
      %1640 = vrot.lane.b32.xlu0 %v1606, 16
      %v1641 = vpop.permute.xlu0 %1640
      %1642 = vrot.lane.b32.xlu0 %v1611, 16
      %v1643 = vpop.permute.xlu0 %1642
      %1644 = vrot.lane.b32.xlu0 %v1616, 16
      %v1645 = vpop.permute.xlu0 %1644
      %1646 = vrot.lane.b32.xlu0 %v1621, 16
      %v1647 = vpop.permute.xlu0 %1646
      %vm1656 = vcmask 195712
      %1657 = vst.msk [vmem:[%s284] sm:$0xff] %vm1656, %v1633
      %1658 = vst.msk [vmem:[%s284 + $0x8] sm:$0xff] %vm1656, %v1635
      %1659 = vst.msk [vmem:[%s284 + $0x10] sm:$0xff] %vm1656, %v1637
      %1660 = vst.msk [vmem:[%s284 + $0x18] sm:$0xff] %vm1656, %v1639
      %1661 = vst.msk [vmem:[%s284 + $0x20] sm:$0xff] %vm1656, %v1641
      %1662 = vst.msk [vmem:[%s284 + $0x28] sm:$0xff] %vm1656, %v1643
      %1663 = vst.msk [vmem:[%s284 + $0x30] sm:$0xff] %vm1656, %v1645
      %1664 = vst.msk [vmem:[%s284 + $0x38] sm:$0xff] %vm1656, %v1647
      %s1665 = scalar_lea.vmem %s3, 192
      %v1666 = vld [vmem:[%s1665] sm:$0xff]
      %v1667 = vld [vmem:[%s1665 + $0x8] sm:$0xff]
      %v1668 = vld [vmem:[%s1665 + $0x10] sm:$0xff]
      %v1669 = vld [vmem:[%s1665 + $0x18] sm:$0xff]
      %v1670 = vld [vmem:[%s1665 + $0x20] sm:$0xff]
      %v1671 = vld [vmem:[%s1665 + $0x28] sm:$0xff]
      %v1672 = vld [vmem:[%s1665 + $0x30] sm:$0xff]
      %v1673 = vld [vmem:[%s1665 + $0x38] sm:$0xff]
      %1674 = vrot.lane.b32.xlu0 %v317, 104
      %v1675 = vpop.permute.xlu0 %1674
      %1676 = vrot.lane.b32.xlu0 %v318, 104
      %v1677 = vpop.permute.xlu0 %1676
      %1678 = vrot.lane.b32.xlu0 %v319, 104
      %v1679 = vpop.permute.xlu0 %1678
      %1680 = vrot.lane.b32.xlu0 %v320, 104
      %v1681 = vpop.permute.xlu0 %1680
      %1682 = vrot.lane.b32.xlu0 %v321, 104
      %v1683 = vpop.permute.xlu0 %1682
      %1684 = vrot.lane.b32.xlu0 %v322, 104
      %v1685 = vpop.permute.xlu0 %1684
      %1686 = vrot.lane.b32.xlu0 %v323, 104
      %v1687 = vpop.permute.xlu0 %1686
      %1688 = vrot.lane.b32.xlu0 %v324, 104
      %v1689 = vpop.permute.xlu0 %1688
      %1690 = vrot.lane.b32.xlu0 %v293, 104
      %v1691 = vpop.permute.xlu0 %1690
      %1692 = vrot.lane.b32.xlu0 %v294, 104
      %v1693 = vpop.permute.xlu0 %1692
      %1694 = vrot.lane.b32.xlu0 %v295, 104
      %v1695 = vpop.permute.xlu0 %1694
      %1696 = vrot.lane.b32.xlu0 %v296, 104
      %v1697 = vpop.permute.xlu0 %1696
      %1698 = vrot.lane.b32.xlu0 %v297, 104
      %v1699 = vpop.permute.xlu0 %1698
      %1700 = vrot.lane.b32.xlu0 %v298, 104
      %v1701 = vpop.permute.xlu0 %1700
      %1702 = vrot.lane.b32.xlu0 %v299, 104
      %v1703 = vpop.permute.xlu0 %1702
      %1704 = vrot.lane.b32.xlu0 %v300, 104
      %v1705 = vpop.permute.xlu0 %1704
      %v1706 = vsel %vm333, %v1675, 0
      %v1708 = vsel %vm333, %v1677, 0
      %v1710 = vsel %vm333, %v1679, 0
      %v1712 = vsel %vm333, %v1681, 0
      %v1714 = vsel %vm333, %v1683, 0
      %v1716 = vsel %vm333, %v1685, 0
      %v1718 = vsel %vm333, %v1687, 0
      %v1720 = vsel %vm333, %v1689, 0
      %v1722 = vsel %vm333, %v1691, 0
      %v1724 = vsel %vm333, %v1693, 0
      %v1726 = vsel %vm333, %v1695, 0
      %v1728 = vsel %vm333, %v1697, 0
      %v1730 = vsel %vm333, %v1699, 0
      %v1732 = vsel %vm333, %v1701, 0
      %v1734 = vsel %vm333, %v1703, 0
      %v1736 = vsel %vm333, %v1705, 0
      %1738 = vmatprep.subr.mxu0 0.0
      %1739 = vmatpush1.xpose.msra.mxu0 %v1722
      %1740 = vmatprep.subr.mxu0 0.0
      %1741 = vmatpush1.xpose.msra.mxu0 %v1724
      %1742 = vmatprep.subr.mxu0 0.0
      %1743 = vmatpush1.xpose.msra.mxu0 %v1726
      %1744 = vmatprep.subr.mxu0 0.0
      %1745 = vmatpush1.xpose.msra.mxu0 %v1728
      %1746 = vmatprep.subr.mxu0 0.0
      %1747 = vmatpush1.xpose.msra.mxu0 %v1730
      %1748 = vmatprep.subr.mxu0 0.0
      %1749 = vmatpush1.xpose.msra.mxu0 %v1732
      %1750 = vmatprep.subr.mxu0 0.0
      %1751 = vmatpush1.xpose.msra.mxu0 %v1734
      %1752 = vmatprep.subr.mxu0 0.0
      %1753 = vmatpush1.xpose.msra.mxu0 %v1736
      %1754 = vmatprep.subr.mxu0 0.0
      %1755 = vmatpush1.xpose.msra.mxu0 0.0
      %1756 = vmatprep.subr.mxu0 0.0
      %1757 = vmatpush1.xpose.msra.mxu0 0.0
      %1758 = vmatprep.subr.mxu0 0.0
      %1759 = vmatpush1.xpose.msra.mxu0 0.0
      %1760 = vmatprep.subr.mxu0 0.0
      %1761 = vmatpush1.xpose.msra.mxu0 0.0
      %1762 = vmatprep.subr.mxu0 0.0
      %1763 = vmatpush1.xpose.msra.mxu0 0.0
      %1764 = vmatprep.subr.mxu0 0.0
      %1765 = vmatpush1.xpose.msra.mxu0 0.0
      %1766 = vmatprep.subr.mxu0 0.0
      %1767 = vmatpush1.xpose.msra.mxu0 0.0
      %1768 = vmatprep.subr.mxu0 0.0
      %1769 = vmatpush1.xpose.msra.mxu0 0.0
      %1770 = vmatprep.subr.mxu0 0.0
      %1771 = vmatpush1.xpose.msra.mxu0 0.0
      %1772 = vmatprep.subr.mxu0 0.0
      %1773 = vmatpush1.xpose.msra.mxu0 0.0
      %1774 = vmatprep.subr.mxu0 0.0
      %1775 = vmatpush1.xpose.msra.mxu0 0.0
      %1776 = vmatprep.subr.mxu0 0.0
      %1777 = vmatpush1.xpose.msra.mxu0 0.0
      %1778 = vmatprep.subr.mxu0 0.0
      %1779 = vmatpush1.xpose.msra.mxu0 0.0
      %1780 = vmatprep.subr.mxu0 0.0
      %1781 = vmatpush1.xpose.msra.mxu0 0.0
      %1782 = vmatprep.subr.mxu0 0.0
      %1783 = vmatpush1.xpose.msra.mxu0 0.0
      %1784 = vmatprep.subr.mxu0 0.0
      %1785 = vmatpush1.xpose.msra.mxu0 0.0
      %1786 = vmatprep.subr.mxu0 0.0
      %1787 = vmatpush1.xpose.msra.mxu0 0.0
      %1788 = vmatprep.subr.mxu0 0.0
      %1789 = vmatpush1.xpose.msra.mxu0 0.0
      %1790 = vmatprep.subr.mxu0 0.0
      %1791 = vmatpush1.xpose.msra.mxu0 0.0
      %1792 = vmatprep.subr.mxu0 0.0
      %1793 = vmatpush1.xpose.msra.mxu0 0.0
      %1794 = vmatprep.subr.mxu0 0.0
      %1795 = vmatpush1.xpose.msra.mxu0 0.0
      %1796 = vmatprep.subr.mxu0 0.0
      %1797 = vmatpush1.xpose.msra.mxu0 0.0
      %1798 = vmatprep.subr.mxu0 0.0
      %1799 = vmatpush1.xpose.msra.mxu0 0.0
      %1800 = vmatprep.subr.mxu0 0.0
      %1801 = vmatpush1.xpose.msra.mxu0 0.0
      %1802 = vmatprep.mubr.f32.mxu0 0.0
      %1803 = vmatmul.mubr.f32.gmra.mrb[0].mxu0 %v1706
      %v1804 = vpop.f32.mrb[0].mxu0
      %v1805 = vadd.f32 %v1666, %v1804
      %v1806 = vpop.f32.mrb[0].mxu0
      %1807 = vmatprep.mubr.f32.mxu0 0.0
      %1808 = vmatmul.mubr.f32.gmra.mrb[0].mxu0 %v1708
      %v1809 = vpop.f32.mrb[0].mxu0
      %v1810 = vadd.f32 %v1667, %v1809
      %v1811 = vpop.f32.mrb[0].mxu0
      %1812 = vmatprep.mubr.f32.mxu0 0.0
      %1813 = vmatmul.mubr.f32.gmra.mrb[0].mxu0 %v1710
      %v1814 = vpop.f32.mrb[0].mxu0
      %v1815 = vadd.f32 %v1668, %v1814
      %v1816 = vpop.f32.mrb[0].mxu0
      %1817 = vmatprep.mubr.f32.mxu0 0.0
      %1818 = vmatmul.mubr.f32.gmra.mrb[0].mxu0 %v1712
      %v1819 = vpop.f32.mrb[0].mxu0
      %v1820 = vadd.f32 %v1669, %v1819
      %v1821 = vpop.f32.mrb[0].mxu0
      %1822 = vmatprep.mubr.f32.mxu0 0.0
      %1823 = vmatmul.mubr.f32.gmra.mrb[0].mxu0 %v1714
      %v1824 = vpop.f32.mrb[0].mxu0
      %v1825 = vadd.f32 %v1670, %v1824
      %v1826 = vpop.f32.mrb[0].mxu0
      %1827 = vmatprep.mubr.f32.mxu0 0.0
      %1828 = vmatmul.mubr.f32.gmra.mrb[0].mxu0 %v1716
      %v1829 = vpop.f32.mrb[0].mxu0
      %v1830 = vadd.f32 %v1671, %v1829
      %v1831 = vpop.f32.mrb[0].mxu0
      %1832 = vmatprep.mubr.f32.mxu0 0.0
      %1833 = vmatmul.mubr.f32.gmra.mrb[0].mxu0 %v1718
      %v1834 = vpop.f32.mrb[0].mxu0
      %v1835 = vadd.f32 %v1672, %v1834
      %v1836 = vpop.f32.mrb[0].mxu0
      %1837 = vmatprep.mubr.f32.mxu0 0.0
      %1838 = vmatmul.mubr.f32.gmra.mrb[0].mxu0 %v1720
      %v1839 = vpop.f32.mrb[0].mxu0
      %v1840 = vadd.f32 %v1673, %v1839
      %v1841 = vpop.f32.mrb[0].mxu0
      %1842 = vdwg.mxu0
      %v1843 = vadd.f32 %v1805, %v309
      %v1844 = vadd.f32 %v1810, %v310
      %v1845 = vadd.f32 %v1815, %v311
      %v1846 = vadd.f32 %v1820, %v312
      %v1847 = vadd.f32 %v1825, %v313
      %v1848 = vadd.f32 %v1830, %v314
      %v1849 = vadd.f32 %v1835, %v315
      %v1850 = vadd.f32 %v1840, %v316
      %v1851 = vsel %vm495, %v1843, -inf
      %1852 = vmax.xlane.f32.xlu0 %v1851
      %v1853 = vpop.xlane.xlu0 %1852
      %v1854 = vsel %vm495, %v1844, -inf
      %1855 = vmax.xlane.f32.xlu0 %v1854
      %v1856 = vpop.xlane.xlu0 %1855
      %v1857 = vsel %vm495, %v1845, -inf
      %1858 = vmax.xlane.f32.xlu0 %v1857
      %v1859 = vpop.xlane.xlu0 %1858
      %v1860 = vsel %vm495, %v1846, -inf
      %1861 = vmax.xlane.f32.xlu0 %v1860
      %v1862 = vpop.xlane.xlu0 %1861
      %v1863 = vsel %vm495, %v1847, -inf
      %1864 = vmax.xlane.f32.xlu0 %v1863
      %v1865 = vpop.xlane.xlu0 %1864
      %v1866 = vsel %vm495, %v1848, -inf
      %1867 = vmax.xlane.f32.xlu0 %v1866
      %v1868 = vpop.xlane.xlu0 %1867
      %v1869 = vsel %vm495, %v1849, -inf
      %1870 = vmax.xlane.f32.xlu0 %v1869
      %v1871 = vpop.xlane.xlu0 %1870
      %v1872 = vsel %vm495, %v1850, -inf
      %1873 = vmax.xlane.f32.xlu0 %v1872
      %v1874 = vpop.xlane.xlu0 %1873
      %v1875 = vsub.f32 %v1843, %v1853
      %v1876 = vsub.f32 %v1844, %v1856
      %v1877 = vsub.f32 %v1845, %v1859
      %v1878 = vsub.f32 %v1846, %v1862
      %v1879 = vsub.f32 %v1847, %v1865
      %v1880 = vsub.f32 %v1848, %v1868
      %v1881 = vsub.f32 %v1849, %v1871
      %v1882 = vsub.f32 %v1850, %v1874
      %v1883 = vmul.f32 %v1875, 1.442695
      %v1884 = vpow.pop %v1883
      %v1885 = vmul.f32 %v1876, 1.442695
      %v1886 = vpow.pop %v1885
      %v1887 = vmul.f32 %v1877, 1.442695
      %v1888 = vpow.pop %v1887
      %v1889 = vmul.f32 %v1878, 1.442695
      %v1890 = vpow.pop %v1889
      %v1891 = vmul.f32 %v1879, 1.442695
      %v1892 = vpow.pop %v1891
      %v1893 = vmul.f32 %v1880, 1.442695
      %v1894 = vpow.pop %v1893
      %v1895 = vmul.f32 %v1881, 1.442695
      %v1896 = vpow.pop %v1895
      %v1897 = vmul.f32 %v1882, 1.442695
      %v1898 = vpow.pop %v1897
      %v1899 = vsel %vm495, %v1884, 0.0
      %1900 = vadd.xlane.f32.xlu0 %v1899
      %v1901 = vpop.xlane.xlu0 %1900
      %v1902 = vsel %vm495, %v1886, 0.0
      %1903 = vadd.xlane.f32.xlu0 %v1902
      %v1904 = vpop.xlane.xlu0 %1903
      %v1905 = vsel %vm495, %v1888, 0.0
      %1906 = vadd.xlane.f32.xlu0 %v1905
      %v1907 = vpop.xlane.xlu0 %1906
      %v1908 = vsel %vm495, %v1890, 0.0
      %1909 = vadd.xlane.f32.xlu0 %v1908
      %v1910 = vpop.xlane.xlu0 %1909
      %v1911 = vsel %vm495, %v1892, 0.0
      %1912 = vadd.xlane.f32.xlu0 %v1911
      %v1913 = vpop.xlane.xlu0 %1912
      %v1914 = vsel %vm495, %v1894, 0.0
      %1915 = vadd.xlane.f32.xlu0 %v1914
      %v1916 = vpop.xlane.xlu0 %1915
      %v1917 = vsel %vm495, %v1896, 0.0
      %1918 = vadd.xlane.f32.xlu0 %v1917
      %v1919 = vpop.xlane.xlu0 %1918
      %v1920 = vsel %vm495, %v1898, 0.0
      %1921 = vadd.xlane.f32.xlu0 %v1920
      %v1922 = vpop.xlane.xlu0 %1921
      %v1923 = vrcp.pop %v1901
      %v1924 = vmul.f32 %v1884, %v1923
      %v1925 = vrcp.pop %v1904
      %v1926 = vmul.f32 %v1886, %v1925
      %v1927 = vrcp.pop %v1907
      %v1928 = vmul.f32 %v1888, %v1927
      %v1929 = vrcp.pop %v1910
      %v1930 = vmul.f32 %v1890, %v1929
      %v1931 = vrcp.pop %v1913
      %v1932 = vmul.f32 %v1892, %v1931
      %v1933 = vrcp.pop %v1916
      %v1934 = vmul.f32 %v1894, %v1933
      %v1935 = vrcp.pop %v1919
      %v1936 = vmul.f32 %v1896, %v1935
      %v1937 = vrcp.pop %v1922
      %v1938 = vmul.f32 %v1898, %v1937
      %1939 = vrot.lane.b32.xlu0 %v301, 104
      %v1940 = vpop.permute.xlu0 %1939
      %1941 = vrot.lane.b32.xlu0 %v302, 104
      %v1942 = vpop.permute.xlu0 %1941
      %1943 = vrot.lane.b32.xlu0 %v303, 104
      %v1944 = vpop.permute.xlu0 %1943
      %1945 = vrot.lane.b32.xlu0 %v304, 104
      %v1946 = vpop.permute.xlu0 %1945
      %1947 = vrot.lane.b32.xlu0 %v305, 104
      %v1948 = vpop.permute.xlu0 %1947
      %1949 = vrot.lane.b32.xlu0 %v306, 104
      %v1950 = vpop.permute.xlu0 %1949
      %1951 = vrot.lane.b32.xlu0 %v307, 104
      %v1952 = vpop.permute.xlu0 %1951
      %1953 = vrot.lane.b32.xlu0 %v308, 104
      %v1954 = vpop.permute.xlu0 %1953
      %v1964 = vsel %vm495, %v1924, 0
      %v1967 = vsel %vm495, %v1926, 0
      %v1970 = vsel %vm495, %v1928, 0
      %v1973 = vsel %vm495, %v1930, 0
      %v1976 = vsel %vm495, %v1932, 0
      %v1979 = vsel %vm495, %v1934, 0
      %v1982 = vsel %vm495, %v1936, 0
      %v1985 = vsel %vm495, %v1938, 0
      %1987 = vmatprep.subr.mxu0 0.0
      %1988 = vmatpush1.msra.mxu0 %v1940
      %1989 = vmatprep.subr.mxu0 0.0
      %1990 = vmatpush1.msra.mxu0 %v1942
      %1991 = vmatprep.subr.mxu0 0.0
      %1992 = vmatpush1.msra.mxu0 %v1944
      %1993 = vmatprep.subr.mxu0 0.0
      %1994 = vmatpush1.msra.mxu0 %v1946
      %1995 = vmatprep.subr.mxu0 0.0
      %1996 = vmatpush1.msra.mxu0 %v1948
      %1997 = vmatprep.subr.mxu0 0.0
      %1998 = vmatpush1.msra.mxu0 %v1950
      %1999 = vmatprep.subr.mxu0 0.0
      %2000 = vmatpush1.msra.mxu0 %v1952
      %2001 = vmatprep.subr.mxu0 0.0
      %2002 = vmatpush1.msra.mxu0 %v1954
      %2003 = vmatprep.subr.mxu0 0.0
      %2004 = vmatpush1.msra.mxu0 0.0
      %2005 = vmatprep.subr.mxu0 0.0
      %2006 = vmatpush1.msra.mxu0 0.0
      %2007 = vmatprep.subr.mxu0 0.0
      %2008 = vmatpush1.msra.mxu0 0.0
      %2009 = vmatprep.subr.mxu0 0.0
      %2010 = vmatpush1.msra.mxu0 0.0
      %2011 = vmatprep.subr.mxu0 0.0
      %2012 = vmatpush1.msra.mxu0 0.0
      %2013 = vmatprep.subr.mxu0 0.0
      %2014 = vmatpush1.msra.mxu0 0.0
      %2015 = vmatprep.subr.mxu0 0.0
      %2016 = vmatpush1.msra.mxu0 0.0
      %2017 = vmatprep.subr.mxu0 0.0
      %2018 = vmatpush1.msra.mxu0 0.0
      %2019 = vmatprep.subr.mxu0 0.0
      %2020 = vmatpush1.msra.mxu0 0.0
      %2021 = vmatprep.subr.mxu0 0.0
      %2022 = vmatpush1.msra.mxu0 0.0
      %2023 = vmatprep.subr.mxu0 0.0
      %2024 = vmatpush1.msra.mxu0 0.0
      %2025 = vmatprep.subr.mxu0 0.0
      %2026 = vmatpush1.msra.mxu0 0.0
      %2027 = vmatprep.subr.mxu0 0.0
      %2028 = vmatpush1.msra.mxu0 0.0
      %2029 = vmatprep.subr.mxu0 0.0
      %2030 = vmatpush1.msra.mxu0 0.0
      %2031 = vmatprep.subr.mxu0 0.0
      %2032 = vmatpush1.msra.mxu0 0.0
      %2033 = vmatprep.subr.mxu0 0.0
      %2034 = vmatpush1.msra.mxu0 0.0
      %2035 = vmatprep.subr.mxu0 0.0
      %2036 = vmatpush1.msra.mxu0 0.0
      %2037 = vmatprep.subr.mxu0 0.0
      %2038 = vmatpush1.msra.mxu0 0.0
      %2039 = vmatprep.subr.mxu0 0.0
      %2040 = vmatpush1.msra.mxu0 0.0
      %2041 = vmatprep.subr.mxu0 0.0
      %2042 = vmatpush1.msra.mxu0 0.0
      %2043 = vmatprep.subr.mxu0 0.0
      %2044 = vmatpush1.msra.mxu0 0.0
      %2045 = vmatprep.subr.mxu0 0.0
      %2046 = vmatpush1.msra.mxu0 0.0
      %2047 = vmatprep.subr.mxu0 0.0
      %2048 = vmatpush1.msra.mxu0 0.0
      %2049 = vmatprep.subr.mxu0 0.0
      %2050 = vmatpush1.msra.mxu0 0.0
      %2051 = vmatprep.mubr.f32.mxu0 0.0
      %2052 = vmatmul.mubr.f32.gmra.mrb[0].mxu0 %v1964
      %v2053 = vpop.f32.mrb[0].mxu0
      %v2054 = vadd.f32 0.0, %v2053
      %v2055 = vpop.f32.mrb[0].mxu0
      %2056 = vmatprep.mubr.f32.mxu0 0.0
      %2057 = vmatmul.mubr.f32.gmra.mrb[0].mxu0 %v1967
      %v2058 = vpop.f32.mrb[0].mxu0
      %v2059 = vadd.f32 0.0, %v2058
      %v2060 = vpop.f32.mrb[0].mxu0
      %2061 = vmatprep.mubr.f32.mxu0 0.0
      %2062 = vmatmul.mubr.f32.gmra.mrb[0].mxu0 %v1970
      %v2063 = vpop.f32.mrb[0].mxu0
      %v2064 = vadd.f32 0.0, %v2063
      %v2065 = vpop.f32.mrb[0].mxu0
      %2066 = vmatprep.mubr.f32.mxu0 0.0
      %2067 = vmatmul.mubr.f32.gmra.mrb[0].mxu0 %v1973
      %v2068 = vpop.f32.mrb[0].mxu0
      %v2069 = vadd.f32 0.0, %v2068
      %v2070 = vpop.f32.mrb[0].mxu0
      %2071 = vmatprep.mubr.f32.mxu0 0.0
      %2072 = vmatmul.mubr.f32.gmra.mrb[0].mxu0 %v1976
      %v2073 = vpop.f32.mrb[0].mxu0
      %v2074 = vadd.f32 0.0, %v2073
      %v2075 = vpop.f32.mrb[0].mxu0
      %2076 = vmatprep.mubr.f32.mxu0 0.0
      %2077 = vmatmul.mubr.f32.gmra.mrb[0].mxu0 %v1979
      %v2078 = vpop.f32.mrb[0].mxu0
      %v2079 = vadd.f32 0.0, %v2078
      %v2080 = vpop.f32.mrb[0].mxu0
      %2081 = vmatprep.mubr.f32.mxu0 0.0
      %2082 = vmatmul.mubr.f32.gmra.mrb[0].mxu0 %v1982
      %v2083 = vpop.f32.mrb[0].mxu0
      %v2084 = vadd.f32 0.0, %v2083
      %v2085 = vpop.f32.mrb[0].mxu0
      %2086 = vmatprep.mubr.f32.mxu0 0.0
      %2087 = vmatmul.mubr.f32.gmra.mrb[0].mxu0 %v1985
      %v2088 = vpop.f32.mrb[0].mxu0
      %v2089 = vadd.f32 0.0, %v2088
      %v2090 = vpop.f32.mrb[0].mxu0
      %2091 = vdwg.mxu0
      %2100 = vrot.lane.b32.xlu0 %v2054, 24
      %v2101 = vpop.permute.xlu0 %2100
      %2102 = vrot.lane.b32.xlu0 %v2059, 24
      %v2103 = vpop.permute.xlu0 %2102
      %2104 = vrot.lane.b32.xlu0 %v2064, 24
      %v2105 = vpop.permute.xlu0 %2104
      %2106 = vrot.lane.b32.xlu0 %v2069, 24
      %v2107 = vpop.permute.xlu0 %2106
      %2108 = vrot.lane.b32.xlu0 %v2074, 24
      %v2109 = vpop.permute.xlu0 %2108
      %2110 = vrot.lane.b32.xlu0 %v2079, 24
      %v2111 = vpop.permute.xlu0 %2110
      %2112 = vrot.lane.b32.xlu0 %v2084, 24
      %v2113 = vpop.permute.xlu0 %2112
      %2114 = vrot.lane.b32.xlu0 %v2089, 24
      %v2115 = vpop.permute.xlu0 %2114
      %vm2124 = vcmask 261312
      %2125 = vst.msk [vmem:[%s284] sm:$0xff] %vm2124, %v2101
      %2126 = vst.msk [vmem:[%s284 + $0x8] sm:$0xff] %vm2124, %v2103
      %2127 = vst.msk [vmem:[%s284 + $0x10] sm:$0xff] %vm2124, %v2105
      %2128 = vst.msk [vmem:[%s284 + $0x18] sm:$0xff] %vm2124, %v2107
      %2129 = vst.msk [vmem:[%s284 + $0x20] sm:$0xff] %vm2124, %v2109
      %2130 = vst.msk [vmem:[%s284 + $0x28] sm:$0xff] %vm2124, %v2111
      %2131 = vst.msk [vmem:[%s284 + $0x30] sm:$0xff] %vm2124, %v2113
      %2132 = vst.msk [vmem:[%s284 + $0x38] sm:$0xff] %vm2124, %v2115
      %p2133 = scmp.lt.s32.totalorder %s16, 7
      %s2134 = scalar_select %p2133, %s16, 7
      %s2135 = smul.addr %s2134, 8
      %s2136 = smul.addr %s2135, 8
      %s2137 = scalar_lea.vmem %s5, %s2136
      // Predicated region
      $region41: #{_lambda_.4} parent=39 // pred_check
        %p2138 = pneg %p159
      $region42: #{_lambda_.4} parent=39 // pred_check_branch
        %2140 = sbr.rel (%p2138) target = $region44
      $region43: #{_lambda_.4} parent=39 // pred_region
        _
      $region44: #{_lambda_.4} parent=39 // pred_fallthru
        _
    $region40: #{_lambda_.4} parent=5 // pred_fallthru
      _
    %p2141 = scmp.le.s32.totalorder 2, %s11
    // Predicated region
    $region45: #{_lambda_.4} parent=5 // pred_check
      %p2142 = pneg %p2141
    $region46: #{_lambda_.4} parent=5 // pred_check_branch
      %2144 = sbr.rel (%p2142) target = $region48
    $region47: #{_lambda_.4} parent=5 // pred_region
      %s2145 = ssub.s32 %s11, 2
      // Predicated region
      $region49: #{_lambda_.4} parent=47 // pred_check
        %p2146 = pneg %p165
      $region50: #{_lambda_.4} parent=47 // pred_check_branch
        %2148 = sbr.rel (%p2146) target = $region52
      $region51: #{_lambda_.4} parent=47 // pred_region
        %p2149 = scmp.lt.s32.totalorder %s17, 7
        %s2150 = scalar_select %p2149, %s17, 7
        %s2151 = smul.addr %s2150, 8
        %s2152 = smul.addr %s2151, 8
        %s2153 = scalar_lea.vmem %s5, %s2152
      $region52: #{_lambda_.4} parent=47 // pred_fallthru
        _
    $region48: #{_lambda_.4} parent=5 // pred_fallthru
      _
  $region6: #{_lambda_.4} parent=0 // loop_footer
    %s15 = sadd.s32 1, %s11
  $region7: #{_lambda_.4} parent=0 // loop_footer_branch
    %10 = sbr.rel target = $region3
  $region8: #{_lambda_.4} parent=0 // loop_exit
    _

// kernel: _lambda_.5
$region0: #{_lambda_.5}
  #allocation0 [shape = 'u32[]', space=smem, size = 0x4, offset = 0x4, fixed_abs, tag = 'smem constant byte address 0x4 - core index']
  #allocation1 [shape = 'u32[144,128]{1,0:T(1,128)}', space=vmem, size = 0x12000, scoped, tag = 'internal scratch']
  #allocation2 [shape = 'f32[256,128]{1,0:T(8,128)}', space=vmem, size = 0x20000, scoped, tag = 'scratch operand']
  %s0 = inlined_call_operand.hbm [shape: f32[512,128], index: 0, kind: input, shape index: {}]
  %s1 = inlined_call_operand.hbm [shape: f32[128,128], index: 1, kind: input, shape index: {}]
  %s2 = inlined_call_operand.hbm [shape: f32[1,128], index: 2, kind: input, shape index: {}]
  %s3 = inlined_call_operand.hbm [shape: f32[128,128], index: 3, kind: input, shape index: {}]
  %s4 = inlined_call_operand.hbm [shape: f32[1,128], index: 4, kind: input, shape index: {}]
  %s5 = inlined_call_operand.hbm [shape: f32[512,128], index: 5, kind: output, shape index: {}]
  %s6 = sld [smem:[#allocation0]]
  $region81: #{_lambda_.5} parent=0
    _
  %s8 = ssub.s32 1, %s6
  %s9 = scalar_select 0, %s8, %s6
  $region1: #{_lambda_.5} parent=0
    #allocation3 [shape = 'u8[262144]{0}', space=vmem, size = 0x40000, scoped, tag = 'input window, operand 0']
    #allocation4 [shape = 's32[2]{0}', space=sflag, size = 0x8, scoped, tag = 'scoped memory for _lambda_.5']
    #allocation5 [shape = 's32[2]{0}', space=sflag, size = 0x8, scoped, tag = 'scoped memory for _lambda_.5']
    #allocation6 [shape = 'u8[65536]{0}', space=vmem, size = 0x10000, scoped, tag = 'input window, operand 1, single buffered']
    #allocation7 [shape = 's32[1]{0}', space=sflag, size = 0x4, scoped, tag = 'scoped memory for _lambda_.5']
    #allocation8 [shape = 'u8[512]{0}', space=vmem, size = 0x400, scoped, tag = 'input window, operand 2, single buffered']
    #allocation9 [shape = 'u8[65536]{0}', space=vmem, size = 0x10000, scoped, tag = 'input window, operand 3, single buffered']
    #allocation10 [shape = 's32[1]{0}', space=sflag, size = 0x4, scoped, tag = 'scoped memory for _lambda_.5']
    #allocation11 [shape = 'u8[512]{0}', space=vmem, size = 0x400, scoped, tag = 'input window, operand 4, single buffered']
    #allocation12 [shape = 'u8[262144]{0}', space=vmem, size = 0x40000, scoped, tag = 'output window, operand 0']
    %10 = vsyncpa [#allocation4], 0
    %s11 = scalar_lea.sflag [#allocation4], 1
    %12 = vsyncpa %s11, 0
    %13 = vsyncpa [#allocation7], 0
    %14 = vsyncpa [#allocation10], 0
    %15 = vsyncpa [#allocation5], 0
    %s16 = scalar_lea.sflag [#allocation5], 1
    %17 = vsyncpa %s16, 0
    loop: start=0, step=1, limit=4
    $region2: #{_lambda_.5} parent=1 // loop_pre_header
      _
    $region3: #{_lambda_.5} parent=1 // loop_header
      %s19 = sphi 0, %s23
      %p20 = scmp.ge.s32.totalorder %s19, 4
      %s26 = sphi 0, %s38
      %s27 = sphi 0, %s34
      %s28 = sphi 0, %s26
      %s29 = sphi 0, %s27
      %s30 = sphi 0, %s28
      %s31 = sphi 0, %s29
      %s41 = sphi 0, %s43
      %s44 = sphi 0, %s41
      %s45 = sphi 0, %s44
      %s61 = sphi 0, %s45
      %s67 = sphi 0, %s69
      %s70 = sphi 0, %s67
      %s71 = sphi 0, %s70
      %s87 = sphi 0, %s71
      %s93 = sphi 0, %s95
      %s96 = sphi 0, %s93
      %s97 = sphi 0, %s96
      %s113 = sphi 0, %s97
      %s119 = sphi 0, %s121
      %s122 = sphi 0, %s119
      %s123 = sphi 0, %s122
      %s139 = sphi 0, %s123
      %s143 = sphi 0, %s143
      %s145 = sphi 0, %s143
      %s146 = sphi 0, %s145
      %s160 = sphi 0, %s146
      %s166 = sphi 0, %s168
      %s169 = sphi 0, %s166
      %s170 = sphi 0, %s169
      %s186 = sphi 0, %s170
    $region4: #{_lambda_.5} parent=1 // loop_header_branch
      %22 = sbr.rel (%p20) target = $region8
    $region5: #{_lambda_.5} parent=1 // loop_body
      %s24 = ssub.s32 %s19, 1
      %s25 = ssub.s32 %s19, 2
      %s32 = sadd.s32 1, %s27
      %p33 = scmp.ge.s32.totalorder %s32, 1
      %s34 = scalar_select %p33, 0, %s32
      %s35 = sadd.s32 1, %s26
      %s36 = scalar_select %p33, %s35, %s26
      %p37 = scmp.ge.s32.totalorder %s36, 2
      %s38 = scalar_select %p37, 0, %s36
      %s39 = ssub.s32 %s26, %s38
      %p40 = scmp.eq.s32.totalorder %s39, 0
      %s42 = sadd.s32 %s41, 1
      %s43 = scalar_select %p40, %s41, %s42
      %p46 = pneg %p40
      %p47 = scmp.eq.s32.totalorder %s19, 1
      %p48 = por %p46, %p47
      %p49 = scmp.ne.s32.totalorder %s41, %s44
      %p50 = scmp.eq.s32.totalorder %s19, 0
      %p51 = por %p49, %p50
      %p52 = scmp.ne.s32.totalorder %s41, %s44
      %p53 = scmp.eq.s32.totalorder %s24, 1
      %p54 = por %p52, %p53
      %p55 = scmp.ne.s32.totalorder %s44, %s45
      %p56 = scmp.eq.s32.totalorder %s24, 0
      %p57 = por %p55, %p56
      %p58 = scmp.ne.s32.totalorder %s44, %s45
      %p59 = scmp.eq.s32.totalorder %s25, 1
      %p60 = por %p58, %p59
      %p62 = scmp.ne.s32.totalorder %s45, %s61
      %p63 = scmp.eq.s32.totalorder %s25, 0
      %p64 = por %p62, %p63
      %s65 = ssub.s32 %s27, %s34
      %p66 = scmp.eq.s32.totalorder %s65, 0
      %s68 = sadd.s32 %s67, 1
      %s69 = scalar_select %p66, %s67, %s68
      %p72 = pneg %p66
      %p73 = scmp.eq.s32.totalorder %s19, 1
      %p74 = por %p72, %p73
      %p75 = scmp.ne.s32.totalorder %s67, %s70
      %p76 = scmp.eq.s32.totalorder %s19, 0
      %p77 = por %p75, %p76
      %p78 = scmp.ne.s32.totalorder %s67, %s70
      %p79 = scmp.eq.s32.totalorder %s24, 1
      %p80 = por %p78, %p79
      %p81 = scmp.ne.s32.totalorder %s70, %s71
      %p82 = scmp.eq.s32.totalorder %s24, 0
      %p83 = por %p81, %p82
      %p84 = scmp.ne.s32.totalorder %s70, %s71
      %p85 = scmp.eq.s32.totalorder %s25, 1
      %p86 = por %p84, %p85
      %p88 = scmp.ne.s32.totalorder %s71, %s87
      %p89 = scmp.eq.s32.totalorder %s25, 0
      %p90 = por %p88, %p89
      %s91 = ssub.s32 %s27, %s34
      %p92 = scmp.eq.s32.totalorder %s91, 0
      %s94 = sadd.s32 %s93, 1
      %s95 = scalar_select %p92, %s93, %s94
      %p98 = pneg %p92
      %p99 = scmp.eq.s32.totalorder %s19, 1
      %p100 = por %p98, %p99
      %p101 = scmp.ne.s32.totalorder %s93, %s96
      %p102 = scmp.eq.s32.totalorder %s19, 0
      %p103 = por %p101, %p102
      %p104 = scmp.ne.s32.totalorder %s93, %s96
      %p105 = scmp.eq.s32.totalorder %s24, 1
      %p106 = por %p104, %p105
      %p107 = scmp.ne.s32.totalorder %s96, %s97
      %p108 = scmp.eq.s32.totalorder %s24, 0
      %p109 = por %p107, %p108
      %p110 = scmp.ne.s32.totalorder %s96, %s97
      %p111 = scmp.eq.s32.totalorder %s25, 1
      %p112 = por %p110, %p111
      %p114 = scmp.ne.s32.totalorder %s97, %s113
      %p115 = scmp.eq.s32.totalorder %s25, 0
      %p116 = por %p114, %p115
      %s117 = ssub.s32 %s27, %s34
      %p118 = scmp.eq.s32.totalorder %s117, 0
      %s120 = sadd.s32 %s119, 1
      %s121 = scalar_select %p118, %s119, %s120
      %p124 = pneg %p118
      %p125 = scmp.eq.s32.totalorder %s19, 1
      %p126 = por %p124, %p125
      %p127 = scmp.ne.s32.totalorder %s119, %s122
      %p128 = scmp.eq.s32.totalorder %s19, 0
      %p129 = por %p127, %p128
      %p130 = scmp.ne.s32.totalorder %s119, %s122
      %p131 = scmp.eq.s32.totalorder %s24, 1
      %p132 = por %p130, %p131
      %p133 = scmp.ne.s32.totalorder %s122, %s123
      %p134 = scmp.eq.s32.totalorder %s24, 0
      %p135 = por %p133, %p134
      %p136 = scmp.ne.s32.totalorder %s122, %s123
      %p137 = scmp.eq.s32.totalorder %s25, 1
      %p138 = por %p136, %p137
      %p140 = scmp.ne.s32.totalorder %s123, %s139
      %p141 = scmp.eq.s32.totalorder %s25, 0
      %p142 = por %p140, %p141
      %s144 = sadd.s32 %s143, 1
      %p147 = scmp.eq.s32.totalorder %s19, 1
      %p148 = scmp.ne.s32.totalorder %s143, %s145
      %p149 = scmp.eq.s32.totalorder %s19, 0
      %p150 = por %p148, %p149
      %p151 = scmp.ne.s32.totalorder %s143, %s145
      %p152 = scmp.eq.s32.totalorder %s24, 1
      %p153 = por %p151, %p152
      %p154 = scmp.ne.s32.totalorder %s145, %s146
      %p155 = scmp.eq.s32.totalorder %s24, 0
      %p156 = por %p154, %p155
      %p157 = scmp.ne.s32.totalorder %s145, %s146
      %p158 = scmp.eq.s32.totalorder %s25, 1
      %p159 = por %p157, %p158
      %p161 = scmp.ne.s32.totalorder %s146, %s160
      %p162 = scmp.eq.s32.totalorder %s25, 0
      %p163 = por %p161, %p162
      %s164 = ssub.s32 %s26, %s38
      %p165 = scmp.eq.s32.totalorder %s164, 0
      %s167 = sadd.s32 %s166, 1
      %s168 = scalar_select %p165, %s166, %s167
      %p171 = pneg %p165
      %p172 = scmp.eq.s32.totalorder %s19, 1
      %p173 = por %p171, %p172
      %p174 = scmp.ne.s32.totalorder %s166, %s169
      %p175 = scmp.eq.s32.totalorder %s19, 0
      %p176 = por %p174, %p175
      %p177 = scmp.ne.s32.totalorder %s166, %s169
      %p178 = scmp.eq.s32.totalorder %s24, 1
      %p179 = por %p177, %p178
      %p180 = scmp.ne.s32.totalorder %s169, %s170
      %p181 = scmp.eq.s32.totalorder %s24, 0
      %p182 = por %p180, %p181
      %p183 = scmp.ne.s32.totalorder %s169, %s170
      %p184 = scmp.eq.s32.totalorder %s25, 1
      %p185 = por %p183, %p184
      %p187 = scmp.ne.s32.totalorder %s170, %s186
      %p188 = scmp.eq.s32.totalorder %s25, 0
      %p189 = por %p187, %p188
      %p190 = scmp.le.s32.totalorder 1, %s19
      %p191 = scmp.lt.s32.totalorder %s19, 3
      %p192 = pnand %p190, %p191
      %p193 = pneg %p192
      // Predicated region
      $region9: #{_lambda_.5} parent=5 // pred_check
        _
      $region10: #{_lambda_.5} parent=5 // pred_check_branch
        %195 = sbr.rel (%p192) target = $region12
      $region11: #{_lambda_.5} parent=5 // pred_region
        %s196 = ssub.s32 %s19, 1
        // Predicated region
        $region13: #{_lambda_.5} parent=11 // pred_check
          %p197 = pneg %p83
        $region14: #{_lambda_.5} parent=11 // pred_check_branch
          %199 = sbr.rel (%p197) target = $region16
        $region15: #{_lambda_.5} parent=11 // pred_region
          %s201 = ssub.s32 2048, 2048
          %202 = vsyncadd [#allocation7], %s201
          %s203 = smul.addr %s29, 128
          %s204 = scalar_lea.hbm %s1, %s203
          %s205 = sshll.u32 [#allocation6], 4
          %s206 = int_to_ptr.vmem [resolvable:$true] %s205
          %211 = dma.hbm_to_vmem [thread:$0]  %s204, 2048, %s206, [#allocation7], 128, 128, 8
        $region16: #{_lambda_.5} parent=11 // pred_fallthru
          _
        // Predicated region
        $region17: #{_lambda_.5} parent=11 // pred_check
          %p212 = pneg %p109
        $region18: #{_lambda_.5} parent=11 // pred_check_branch
          %214 = sbr.rel (%p212) target = $region20
        $region19: #{_lambda_.5} parent=11 // pred_region
          %s216 = ssub.s32 16, 16
          %217 = vsyncadd [#allocation7], %s216
          %s218 = smul.addr %s29, 16
          %s219 = scalar_lea.hbm %s2, %s218
          %s221 = sshll.u32 [#allocation8], 4
          %s222 = int_to_ptr.vmem [resolvable:$true] %s221
          %224 = dma.hbm_to_vmem [thread:$0]  %s219, 16, %s222, [#allocation7]
        $region20: #{_lambda_.5} parent=11 // pred_fallthru
          _
        // Predicated region
        $region21: #{_lambda_.5} parent=11 // pred_check
          %p225 = pneg %p135
        $region22: #{_lambda_.5} parent=11 // pred_check_branch
          %227 = sbr.rel (%p225) target = $region24
        $region23: #{_lambda_.5} parent=11 // pred_region
          %s228 = smul.u32 16, %s29
          %s230 = ssub.s32 2048, 2048
          %231 = vsyncadd [#allocation10], %s230
          %s232 = smul.addr %s228, 128
          %s233 = scalar_lea.hbm %s3, %s232
          %s234 = sshll.u32 [#allocation9], 4
          %s235 = int_to_ptr.vmem [resolvable:$true] %s234
          %240 = dma.hbm_to_vmem [thread:$0]  %s233, 2048, %s235, [#allocation10], 128, 128, 8
        $region24: #{_lambda_.5} parent=11 // pred_fallthru
          _
        // Predicated region
        $region25: #{_lambda_.5} parent=11 // pred_check
          %p241 = pneg %p156
        $region26: #{_lambda_.5} parent=11 // pred_check_branch
          %243 = sbr.rel (%p241) target = $region28
        $region27: #{_lambda_.5} parent=11 // pred_region
          %s245 = ssub.s32 16, 16
          %246 = vsyncadd [#allocation10], %s245
          %s248 = sshll.u32 [#allocation11], 4
          %s249 = int_to_ptr.vmem [resolvable:$true] %s248
          %251 = dma.hbm_to_vmem [thread:$0]  %s4, 16, %s249, [#allocation10]
        $region28: #{_lambda_.5} parent=11 // pred_fallthru
          _
      $region12: #{_lambda_.5} parent=5 // pred_fallthru
        _
      %p252 = scmp.lt.s32.totalorder %s19, 2
      // Predicated region
      $region29: #{_lambda_.5} parent=5 // pred_check
        %p253 = pneg %p252
      $region30: #{_lambda_.5} parent=5 // pred_check_branch
        %255 = sbr.rel (%p253) target = $region32
      $region31: #{_lambda_.5} parent=5 // pred_region
        // Predicated region
        $region33: #{_lambda_.5} parent=31 // pred_check
          %p256 = pneg %p51
        $region34: #{_lambda_.5} parent=31 // pred_check_branch
          %258 = sbr.rel (%p256) target = $region36
        $region35: #{_lambda_.5} parent=31 // pred_region
          %s259 = sand.u32 %s41, 1
          %s260 = scalar_lea.sflag [#allocation4], %s259
          %s261 = sand.u32 %s41, 1
          %s262 = smul.addr %s261, 256
          %s263 = scalar_lea.vmem [#allocation3], %s262
          %s264 = smul.u32 32, %s26
          %s266 = ssub.s32 4096, 4096
          %267 = vsyncadd %s260, %s266
          %s268 = smul.addr %s264, 128
          %s269 = scalar_lea.hbm %s0, %s268
          %s270 = sshll.u32 %s263, 4
          %s271 = int_to_ptr.vmem [resolvable:$true] %s270
          %276 = dma.hbm_to_vmem [thread:$0]  %s269, 4096, %s271, %s260, 128, 128, 8
        $region36: #{_lambda_.5} parent=31 // pred_fallthru
          _
      $region32: #{_lambda_.5} parent=5 // pred_fallthru
        _
      %p277 = scmp.le.s32.totalorder 1, %s19
      %p278 = scmp.lt.s32.totalorder %s19, 3
      %p279 = pnand %p277, %p278
      %p280 = pneg %p279
      // Predicated region
      $region37: #{_lambda_.5} parent=5 // pred_check
        _
      $region38: #{_lambda_.5} parent=5 // pred_check_branch
        %282 = sbr.rel (%p279) target = $region40
      $region39: #{_lambda_.5} parent=5 // pred_region
        %s283 = ssub.s32 %s19, 1
        %s284 = sand.u32 %s44, 1
        %s285 = scalar_lea.sflag [#allocation4], %s284
        %s286 = sand.u32 %s44, 1
        %s287 = smul.addr %s286, 256
        %s288 = scalar_lea.vmem [#allocation3], %s287
        // Predicated region
        $region41: #{_lambda_.5} parent=39 // pred_check
          %p289 = pneg %p57
        $region42: #{_lambda_.5} parent=39 // pred_check_branch
          %291 = sbr.rel (%p289) target = $region44
        $region43: #{_lambda_.5} parent=39 // pred_region
          %292 = dma.done %s285, 4096
        $region44: #{_lambda_.5} parent=39 // pred_fallthru
          _
        // Predicated region
        $region45: #{_lambda_.5} parent=39 // pred_check
          %p293 = pneg %p83
        $region46: #{_lambda_.5} parent=39 // pred_check_branch
          %295 = sbr.rel (%p293) target = $region48
        $region47: #{_lambda_.5} parent=39 // pred_region
          %296 = dma.done [#allocation7], 2048
        $region48: #{_lambda_.5} parent=39 // pred_fallthru
          _
        // Predicated region
        $region49: #{_lambda_.5} parent=39 // pred_check
          %p297 = pneg %p109
        $region50: #{_lambda_.5} parent=39 // pred_check_branch
          %299 = sbr.rel (%p297) target = $region52
        $region51: #{_lambda_.5} parent=39 // pred_region
          %300 = dma.done [#allocation7], 16
        $region52: #{_lambda_.5} parent=39 // pred_fallthru
          _
        // Predicated region
        $region53: #{_lambda_.5} parent=39 // pred_check
          %p301 = pneg %p135
        $region54: #{_lambda_.5} parent=39 // pred_check_branch
          %303 = sbr.rel (%p301) target = $region56
        $region55: #{_lambda_.5} parent=39 // pred_region
          %304 = dma.done [#allocation10], 2048
        $region56: #{_lambda_.5} parent=39 // pred_fallthru
          _
        // Predicated region
        $region57: #{_lambda_.5} parent=39 // pred_check
          %p305 = pneg %p156
        $region58: #{_lambda_.5} parent=39 // pred_check_branch
          %307 = sbr.rel (%p305) target = $region60
        $region59: #{_lambda_.5} parent=39 // pred_region
          %308 = dma.done [#allocation10], 16
        $region60: #{_lambda_.5} parent=39 // pred_fallthru
          _
        %s309 = sand.u32 %s44, 1
        %s310 = scalar_lea.sflag [#allocation4], %s309
        %s311 = sand.u32 %s44, 1
        %s312 = smul.addr %s311, 256
        %s313 = scalar_lea.vmem [#allocation3], %s312
        %p314 = pneg %p57
        %p315 = pneg %p54
        %p316 = pneg %p83
        %p317 = pneg %p80
        %p318 = pneg %p109
        %p319 = pneg %p106
        %p320 = pneg %p135
        %p321 = pneg %p132
        %p322 = pneg %p156
        %p323 = pneg %p153
        %p324 = pneg %p182
        %p325 = pneg %p179
        %s326 = sand.u32 %s169, 1
        %s327 = scalar_lea.sflag [#allocation5], %s326
        %s328 = sand.u32 %s169, 1
        %s329 = smul.addr %s328, 256
        %s330 = scalar_lea.vmem [#allocation12], %s329
        %s331 = smul.u32 32, %s28
        %s332 = smul.u32 16, %s29
        %s333 = smul.u32 32, %s28
        %p334 = scmp.eq.s32.totalorder %s29, 0
        // Predicated region
        $region61: #{_lambda_.5} parent=39 // pred_check
          %p335 = pneg %p334
        $region62: #{_lambda_.5} parent=39 // pred_check_branch
          %337 = sbr.rel (%p335) target = $region64
        $region63: #{_lambda_.5} parent=39 // pred_region
          %338 = vst [vmem:[#allocation2] sm:$0xff] 0.0
          %339 = vst [vmem:[#allocation2 + $0x8] sm:$0xff] 0.0
          %340 = vst [vmem:[#allocation2 + $0x10] sm:$0xff] 0.0
          %341 = vst [vmem:[#allocation2 + $0x18] sm:$0xff] 0.0
          %342 = vst [vmem:[#allocation2 + $0x20] sm:$0xff] 0.0
          %343 = vst [vmem:[#allocation2 + $0x28] sm:$0xff] 0.0
          %344 = vst [vmem:[#allocation2 + $0x30] sm:$0xff] 0.0
          %345 = vst [vmem:[#allocation2 + $0x38] sm:$0xff] 0.0
          %346 = vst [vmem:[#allocation2 + $0x40] sm:$0xff] 0.0
          %347 = vst [vmem:[#allocation2 + $0x48] sm:$0xff] 0.0
          %348 = vst [vmem:[#allocation2 + $0x50] sm:$0xff] 0.0
          %349 = vst [vmem:[#allocation2 + $0x58] sm:$0xff] 0.0
          %350 = vst [vmem:[#allocation2 + $0x60] sm:$0xff] 0.0
          %351 = vst [vmem:[#allocation2 + $0x68] sm:$0xff] 0.0
          %352 = vst [vmem:[#allocation2 + $0x70] sm:$0xff] 0.0
          %353 = vst [vmem:[#allocation2 + $0x78] sm:$0xff] 0.0
          %354 = vst [vmem:[#allocation2 + $0x80] sm:$0xff] 0.0
          %355 = vst [vmem:[#allocation2 + $0x88] sm:$0xff] 0.0
          %356 = vst [vmem:[#allocation2 + $0x90] sm:$0xff] 0.0
          %357 = vst [vmem:[#allocation2 + $0x98] sm:$0xff] 0.0
          %358 = vst [vmem:[#allocation2 + $0xa0] sm:$0xff] 0.0
          %359 = vst [vmem:[#allocation2 + $0xa8] sm:$0xff] 0.0
          %360 = vst [vmem:[#allocation2 + $0xb0] sm:$0xff] 0.0
          %361 = vst [vmem:[#allocation2 + $0xb8] sm:$0xff] 0.0
          %362 = vst [vmem:[#allocation2 + $0xc0] sm:$0xff] 0.0
          %363 = vst [vmem:[#allocation2 + $0xc8] sm:$0xff] 0.0
          %364 = vst [vmem:[#allocation2 + $0xd0] sm:$0xff] 0.0
          %365 = vst [vmem:[#allocation2 + $0xd8] sm:$0xff] 0.0
          %366 = vst [vmem:[#allocation2 + $0xe0] sm:$0xff] 0.0
          %367 = vst [vmem:[#allocation2 + $0xe8] sm:$0xff] 0.0
          %368 = vst [vmem:[#allocation2 + $0xf0] sm:$0xff] 0.0
          %369 = vst [vmem:[#allocation2 + $0xf8] sm:$0xff] 0.0
        $region64: #{_lambda_.5} parent=39 // pred_fallthru
          _
        %v370 = vld [vmem:[%s288] sm:$0xff]
        %v371 = vld [vmem:[%s288 + $0x8] sm:$0xff]
        %v372 = vld [vmem:[%s288 + $0x10] sm:$0xff]
        %v373 = vld [vmem:[%s288 + $0x18] sm:$0xff]
        %v374 = vld [vmem:[%s288 + $0x20] sm:$0xff]
        %v375 = vld [vmem:[%s288 + $0x28] sm:$0xff]
        %v376 = vld [vmem:[%s288 + $0x30] sm:$0xff]
        %v377 = vld [vmem:[%s288 + $0x38] sm:$0xff]
        %v378 = vld [vmem:[%s288 + $0x40] sm:$0xff]
        %v379 = vld [vmem:[%s288 + $0x48] sm:$0xff]
        %v380 = vld [vmem:[%s288 + $0x50] sm:$0xff]
        %v381 = vld [vmem:[%s288 + $0x58] sm:$0xff]
        %v382 = vld [vmem:[%s288 + $0x60] sm:$0xff]
        %v383 = vld [vmem:[%s288 + $0x68] sm:$0xff]
        %v384 = vld [vmem:[%s288 + $0x70] sm:$0xff]
        %v385 = vld [vmem:[%s288 + $0x78] sm:$0xff]
        %v386 = vld [vmem:[%s288 + $0x80] sm:$0xff]
        %v387 = vld [vmem:[%s288 + $0x88] sm:$0xff]
        %v388 = vld [vmem:[%s288 + $0x90] sm:$0xff]
        %v389 = vld [vmem:[%s288 + $0x98] sm:$0xff]
        %v390 = vld [vmem:[%s288 + $0xa0] sm:$0xff]
        %v391 = vld [vmem:[%s288 + $0xa8] sm:$0xff]
        %v392 = vld [vmem:[%s288 + $0xb0] sm:$0xff]
        %v393 = vld [vmem:[%s288 + $0xb8] sm:$0xff]
        %v394 = vld [vmem:[%s288 + $0xc0] sm:$0xff]
        %v395 = vld [vmem:[%s288 + $0xc8] sm:$0xff]
        %v396 = vld [vmem:[%s288 + $0xd0] sm:$0xff]
        %v397 = vld [vmem:[%s288 + $0xd8] sm:$0xff]
        %v398 = vld [vmem:[%s288 + $0xe0] sm:$0xff]
        %v399 = vld [vmem:[%s288 + $0xe8] sm:$0xff]
        %v400 = vld [vmem:[%s288 + $0xf0] sm:$0xff]
        %v401 = vld [vmem:[%s288 + $0xf8] sm:$0xff]
        %v402 = vld [vmem:[#allocation6] sm:$0xff]
        %v403 = vld [vmem:[#allocation6 + $0x8] sm:$0xff]
        %v404 = vld [vmem:[#allocation6 + $0x10] sm:$0xff]
        %v405 = vld [vmem:[#allocation6 + $0x18] sm:$0xff]
        %v406 = vld [vmem:[#allocation6 + $0x20] sm:$0xff]
        %v407 = vld [vmem:[#allocation6 + $0x28] sm:$0xff]
        %v408 = vld [vmem:[#allocation6 + $0x30] sm:$0xff]
        %v409 = vld [vmem:[#allocation6 + $0x38] sm:$0xff]
        %v410 = vld [vmem:[#allocation6 + $0x40] sm:$0xff]
        %v411 = vld [vmem:[#allocation6 + $0x48] sm:$0xff]
        %v412 = vld [vmem:[#allocation6 + $0x50] sm:$0xff]
        %v413 = vld [vmem:[#allocation6 + $0x58] sm:$0xff]
        %v414 = vld [vmem:[#allocation6 + $0x60] sm:$0xff]
        %v415 = vld [vmem:[#allocation6 + $0x68] sm:$0xff]
        %v416 = vld [vmem:[#allocation6 + $0x70] sm:$0xff]
        %v417 = vld [vmem:[#allocation6 + $0x78] sm:$0xff]
        %v418 = vld [vmem:[#allocation8] sm:$0x1]
        %v420 = vlaneseq
        %v421 = vshrl.u32 %v420, 7
        %v422 = vsub.s32 0, %v421
        %v423 = vrot.slane %v418, %v422
        %425 = vmatprep.subr.mxu0 0.0
        %426 = vmatpush1.msra.mxu0 %v402
        %427 = vmatprep.subr.mxu0 0.0
        %428 = vmatpush1.msra.mxu0 %v403
        %429 = vmatprep.subr.mxu0 0.0
        %430 = vmatpush1.msra.mxu0 %v404
        %431 = vmatprep.subr.mxu0 0.0
        %432 = vmatpush1.msra.mxu0 %v405
        %433 = vmatprep.subr.mxu0 0.0
        %434 = vmatpush1.msra.mxu0 %v406
        %435 = vmatprep.subr.mxu0 0.0
        %436 = vmatpush1.msra.mxu0 %v407
        %437 = vmatprep.subr.mxu0 0.0
        %438 = vmatpush1.msra.mxu0 %v408
        %439 = vmatprep.subr.mxu0 0.0
        %440 = vmatpush1.msra.mxu0 %v409
        %441 = vmatprep.subr.mxu0 0.0
        %442 = vmatpush1.msra.mxu0 %v410
        %443 = vmatprep.subr.mxu0 0.0
        %444 = vmatpush1.msra.mxu0 %v411
        %445 = vmatprep.subr.mxu0 0.0
        %446 = vmatpush1.msra.mxu0 %v412
        %447 = vmatprep.subr.mxu0 0.0
        %448 = vmatpush1.msra.mxu0 %v413
        %449 = vmatprep.subr.mxu0 0.0
        %450 = vmatpush1.msra.mxu0 %v414
        %451 = vmatprep.subr.mxu0 0.0
        %452 = vmatpush1.msra.mxu0 %v415
        %453 = vmatprep.subr.mxu0 0.0
        %454 = vmatpush1.msra.mxu0 %v416
        %455 = vmatprep.subr.mxu0 0.0
        %456 = vmatpush1.msra.mxu0 %v417
        %457 = vmatprep.subr.mxu0 0.0
        %458 = vmatpush1.msra.mxu0 0.0
        %459 = vmatprep.subr.mxu0 0.0
        %460 = vmatpush1.msra.mxu0 0.0
        %461 = vmatprep.subr.mxu0 0.0
        %462 = vmatpush1.msra.mxu0 0.0
        %463 = vmatprep.subr.mxu0 0.0
        %464 = vmatpush1.msra.mxu0 0.0
        %465 = vmatprep.subr.mxu0 0.0
        %466 = vmatpush1.msra.mxu0 0.0
        %467 = vmatprep.subr.mxu0 0.0
        %468 = vmatpush1.msra.mxu0 0.0
        %469 = vmatprep.subr.mxu0 0.0
        %470 = vmatpush1.msra.mxu0 0.0
        %471 = vmatprep.subr.mxu0 0.0
        %472 = vmatpush1.msra.mxu0 0.0
        %473 = vmatprep.subr.mxu0 0.0
        %474 = vmatpush1.msra.mxu0 0.0
        %475 = vmatprep.subr.mxu0 0.0
        %476 = vmatpush1.msra.mxu0 0.0
        %477 = vmatprep.subr.mxu0 0.0
        %478 = vmatpush1.msra.mxu0 0.0
        %479 = vmatprep.subr.mxu0 0.0
        %480 = vmatpush1.msra.mxu0 0.0
        %481 = vmatprep.subr.mxu0 0.0
        %482 = vmatpush1.msra.mxu0 0.0
        %483 = vmatprep.subr.mxu0 0.0
        %484 = vmatpush1.msra.mxu0 0.0
        %485 = vmatprep.subr.mxu0 0.0
        %486 = vmatpush1.msra.mxu0 0.0
        %487 = vmatprep.subr.mxu0 0.0
        %488 = vmatpush1.msra.mxu0 0.0
        %489 = vmatprep.mubr.f32.mxu0 0.0
        %490 = vmatmul.mubr.f32.gmra.mrb[0].mxu0 %v370
        %v491 = vpop.f32.mrb[0].mxu0
        %v492 = vadd.f32 %v423, %v491
        %v493 = vpop.f32.mrb[0].mxu0
        %494 = vmatprep.mubr.f32.mxu0 0.0
        %495 = vmatmul.mubr.f32.gmra.mrb[0].mxu0 %v371
        %v496 = vpop.f32.mrb[0].mxu0
        %v497 = vadd.f32 %v423, %v496
        %v498 = vpop.f32.mrb[0].mxu0
        %499 = vmatprep.mubr.f32.mxu0 0.0
        %500 = vmatmul.mubr.f32.gmra.mrb[0].mxu0 %v372
        %v501 = vpop.f32.mrb[0].mxu0
        %v502 = vadd.f32 %v423, %v501
        %v503 = vpop.f32.mrb[0].mxu0
        %504 = vmatprep.mubr.f32.mxu0 0.0
        %505 = vmatmul.mubr.f32.gmra.mrb[0].mxu0 %v373
        %v506 = vpop.f32.mrb[0].mxu0
        %v507 = vadd.f32 %v423, %v506
        %v508 = vpop.f32.mrb[0].mxu0
        %509 = vmatprep.mubr.f32.mxu0 0.0
        %510 = vmatmul.mubr.f32.gmra.mrb[0].mxu0 %v374
        %v511 = vpop.f32.mrb[0].mxu0
        %v512 = vadd.f32 %v423, %v511
        %v513 = vpop.f32.mrb[0].mxu0
        %514 = vmatprep.mubr.f32.mxu0 0.0
        %515 = vmatmul.mubr.f32.gmra.mrb[0].mxu0 %v375
        %v516 = vpop.f32.mrb[0].mxu0
        %v517 = vadd.f32 %v423, %v516
        %v518 = vpop.f32.mrb[0].mxu0
        %519 = vmatprep.mubr.f32.mxu0 0.0
        %520 = vmatmul.mubr.f32.gmra.mrb[0].mxu0 %v376
        %v521 = vpop.f32.mrb[0].mxu0
        %v522 = vadd.f32 %v423, %v521
        %v523 = vpop.f32.mrb[0].mxu0
        %524 = vmatprep.mubr.f32.mxu0 0.0
        %525 = vmatmul.mubr.f32.gmra.mrb[0].mxu0 %v377
        %v526 = vpop.f32.mrb[0].mxu0
        %v527 = vadd.f32 %v423, %v526
        %v528 = vpop.f32.mrb[0].mxu0
        %529 = vmatprep.mubr.f32.mxu0 0.0
        %530 = vmatmul.mubr.f32.gmra.mrb[0].mxu0 %v378
        %v531 = vpop.f32.mrb[0].mxu0
        %v532 = vadd.f32 %v423, %v531
        %v533 = vpop.f32.mrb[0].mxu0
        %534 = vmatprep.mubr.f32.mxu0 0.0
        %535 = vmatmul.mubr.f32.gmra.mrb[0].mxu0 %v379
        %v536 = vpop.f32.mrb[0].mxu0
        %v537 = vadd.f32 %v423, %v536
        %v538 = vpop.f32.mrb[0].mxu0
        %539 = vmatprep.mubr.f32.mxu0 0.0
        %540 = vmatmul.mubr.f32.gmra.mrb[0].mxu0 %v380
        %v541 = vpop.f32.mrb[0].mxu0
        %v542 = vadd.f32 %v423, %v541
        %v543 = vpop.f32.mrb[0].mxu0
        %544 = vmatprep.mubr.f32.mxu0 0.0
        %545 = vmatmul.mubr.f32.gmra.mrb[0].mxu0 %v381
        %v546 = vpop.f32.mrb[0].mxu0
        %v547 = vadd.f32 %v423, %v546
        %v548 = vpop.f32.mrb[0].mxu0
        %549 = vmatprep.mubr.f32.mxu0 0.0
        %550 = vmatmul.mubr.f32.gmra.mrb[0].mxu0 %v382
        %v551 = vpop.f32.mrb[0].mxu0
        %v552 = vadd.f32 %v423, %v551
        %v553 = vpop.f32.mrb[0].mxu0
        %554 = vmatprep.mubr.f32.mxu0 0.0
        %555 = vmatmul.mubr.f32.gmra.mrb[0].mxu0 %v383
        %v556 = vpop.f32.mrb[0].mxu0
        %v557 = vadd.f32 %v423, %v556
        %v558 = vpop.f32.mrb[0].mxu0
        %559 = vmatprep.mubr.f32.mxu0 0.0
        %560 = vmatmul.mubr.f32.gmra.mrb[0].mxu0 %v384
        %v561 = vpop.f32.mrb[0].mxu0
        %v562 = vadd.f32 %v423, %v561
        %v563 = vpop.f32.mrb[0].mxu0
        %564 = vmatprep.mubr.f32.mxu0 0.0
        %565 = vmatmul.mubr.f32.gmra.mrb[0].mxu0 %v385
        %v566 = vpop.f32.mrb[0].mxu0
        %v567 = vadd.f32 %v423, %v566
        %v568 = vpop.f32.mrb[0].mxu0
        %569 = vmatprep.mubr.f32.mxu0 0.0
        %570 = vmatmul.mubr.f32.gmra.mrb[0].mxu0 %v386
        %v571 = vpop.f32.mrb[0].mxu0
        %v572 = vadd.f32 %v423, %v571
        %v573 = vpop.f32.mrb[0].mxu0
        %574 = vmatprep.mubr.f32.mxu0 0.0
        %575 = vmatmul.mubr.f32.gmra.mrb[0].mxu0 %v387
        %v576 = vpop.f32.mrb[0].mxu0
        %v577 = vadd.f32 %v423, %v576
        %v578 = vpop.f32.mrb[0].mxu0
        %579 = vmatprep.mubr.f32.mxu0 0.0
        %580 = vmatmul.mubr.f32.gmra.mrb[0].mxu0 %v388
        %v581 = vpop.f32.mrb[0].mxu0
        %v582 = vadd.f32 %v423, %v581
        %v583 = vpop.f32.mrb[0].mxu0
        %584 = vmatprep.mubr.f32.mxu0 0.0
        %585 = vmatmul.mubr.f32.gmra.mrb[0].mxu0 %v389
        %v586 = vpop.f32.mrb[0].mxu0
        %v587 = vadd.f32 %v423, %v586
        %v588 = vpop.f32.mrb[0].mxu0
        %589 = vmatprep.mubr.f32.mxu0 0.0
        %590 = vmatmul.mubr.f32.gmra.mrb[0].mxu0 %v390
        %v591 = vpop.f32.mrb[0].mxu0
        %v592 = vadd.f32 %v423, %v591
        %v593 = vpop.f32.mrb[0].mxu0
        %594 = vmatprep.mubr.f32.mxu0 0.0
        %595 = vmatmul.mubr.f32.gmra.mrb[0].mxu0 %v391
        %v596 = vpop.f32.mrb[0].mxu0
        %v597 = vadd.f32 %v423, %v596
        %v598 = vpop.f32.mrb[0].mxu0
        %599 = vmatprep.mubr.f32.mxu0 0.0
        %600 = vmatmul.mubr.f32.gmra.mrb[0].mxu0 %v392
        %v601 = vpop.f32.mrb[0].mxu0
        %v602 = vadd.f32 %v423, %v601
        %v603 = vpop.f32.mrb[0].mxu0
        %604 = vmatprep.mubr.f32.mxu0 0.0
        %605 = vmatmul.mubr.f32.gmra.mrb[0].mxu0 %v393
        %v606 = vpop.f32.mrb[0].mxu0
        %v607 = vadd.f32 %v423, %v606
        %v608 = vpop.f32.mrb[0].mxu0
        %609 = vmatprep.mubr.f32.mxu0 0.0
        %610 = vmatmul.mubr.f32.gmra.mrb[0].mxu0 %v394
        %v611 = vpop.f32.mrb[0].mxu0
        %v612 = vadd.f32 %v423, %v611
        %v613 = vpop.f32.mrb[0].mxu0
        %614 = vmatprep.mubr.f32.mxu0 0.0
        %615 = vmatmul.mubr.f32.gmra.mrb[0].mxu0 %v395
        %v616 = vpop.f32.mrb[0].mxu0
        %v617 = vadd.f32 %v423, %v616
        %v618 = vpop.f32.mrb[0].mxu0
        %619 = vmatprep.mubr.f32.mxu0 0.0
        %620 = vmatmul.mubr.f32.gmra.mrb[0].mxu0 %v396
        %v621 = vpop.f32.mrb[0].mxu0
        %v622 = vadd.f32 %v423, %v621
        %v623 = vpop.f32.mrb[0].mxu0
        %624 = vmatprep.mubr.f32.mxu0 0.0
        %625 = vmatmul.mubr.f32.gmra.mrb[0].mxu0 %v397
        %v626 = vpop.f32.mrb[0].mxu0
        %v627 = vadd.f32 %v423, %v626
        %v628 = vpop.f32.mrb[0].mxu0
        %629 = vmatprep.mubr.f32.mxu0 0.0
        %630 = vmatmul.mubr.f32.gmra.mrb[0].mxu0 %v398
        %v631 = vpop.f32.mrb[0].mxu0
        %v632 = vadd.f32 %v423, %v631
        %v633 = vpop.f32.mrb[0].mxu0
        %634 = vmatprep.mubr.f32.mxu0 0.0
        %635 = vmatmul.mubr.f32.gmra.mrb[0].mxu0 %v399
        %v636 = vpop.f32.mrb[0].mxu0
        %v637 = vadd.f32 %v423, %v636
        %v638 = vpop.f32.mrb[0].mxu0
        %639 = vmatprep.mubr.f32.mxu0 0.0
        %640 = vmatmul.mubr.f32.gmra.mrb[0].mxu0 %v400
        %v641 = vpop.f32.mrb[0].mxu0
        %v642 = vadd.f32 %v423, %v641
        %v643 = vpop.f32.mrb[0].mxu0
        %644 = vmatprep.mubr.f32.mxu0 0.0
        %645 = vmatmul.mubr.f32.gmra.mrb[0].mxu0 %v401
        %v646 = vpop.f32.mrb[0].mxu0
        %v647 = vadd.f32 %v423, %v646
        %v648 = vpop.f32.mrb[0].mxu0
        %649 = vdwg.mxu0
        %v650 = vmul.f32 %v492, 0.5
        %v651 = vmul.f32 %v497, 0.5
        %v652 = vmul.f32 %v502, 0.5
        %v653 = vmul.f32 %v507, 0.5
        %v654 = vmul.f32 %v512, 0.5
        %v655 = vmul.f32 %v517, 0.5
        %v656 = vmul.f32 %v522, 0.5
        %v657 = vmul.f32 %v527, 0.5
        %v658 = vmul.f32 %v532, 0.5
        %v659 = vmul.f32 %v537, 0.5
        %v660 = vmul.f32 %v542, 0.5
        %v661 = vmul.f32 %v547, 0.5
        %v662 = vmul.f32 %v552, 0.5
        %v663 = vmul.f32 %v557, 0.5
        %v664 = vmul.f32 %v562, 0.5
        %v665 = vmul.f32 %v567, 0.5
        %v666 = vmul.f32 %v572, 0.5
        %v667 = vmul.f32 %v577, 0.5
        %v668 = vmul.f32 %v582, 0.5
        %v669 = vmul.f32 %v587, 0.5
        %v670 = vmul.f32 %v592, 0.5
        %v671 = vmul.f32 %v597, 0.5
        %v672 = vmul.f32 %v602, 0.5
        %v673 = vmul.f32 %v607, 0.5
        %v674 = vmul.f32 %v612, 0.5
        %v675 = vmul.f32 %v617, 0.5
        %v676 = vmul.f32 %v622, 0.5
        %v677 = vmul.f32 %v627, 0.5
        %v678 = vmul.f32 %v632, 0.5
        %v679 = vmul.f32 %v637, 0.5
        %v680 = vmul.f32 %v642, 0.5
        %v681 = vmul.f32 %v647, 0.5
        %v682 = vmul.f32 %v492, 0.70710677
        %v683 = vmul.f32 %v497, 0.70710677
        %v684 = vmul.f32 %v502, 0.70710677
        %v685 = vmul.f32 %v507, 0.70710677
        %v686 = vmul.f32 %v512, 0.70710677
        %v687 = vmul.f32 %v517, 0.70710677
        %v688 = vmul.f32 %v522, 0.70710677
        %v689 = vmul.f32 %v527, 0.70710677
        %v690 = vmul.f32 %v532, 0.70710677
        %v691 = vmul.f32 %v537, 0.70710677
        %v692 = vmul.f32 %v542, 0.70710677
        %v693 = vmul.f32 %v547, 0.70710677
        %v694 = vmul.f32 %v552, 0.70710677
        %v695 = vmul.f32 %v557, 0.70710677
        %v696 = vmul.f32 %v562, 0.70710677
        %v697 = vmul.f32 %v567, 0.70710677
        %v698 = vmul.f32 %v572, 0.70710677
        %v699 = vmul.f32 %v577, 0.70710677
        %v700 = vmul.f32 %v582, 0.70710677
        %v701 = vmul.f32 %v587, 0.70710677
        %v702 = vmul.f32 %v592, 0.70710677
        %v703 = vmul.f32 %v597, 0.70710677
        %v704 = vmul.f32 %v602, 0.70710677
        %v705 = vmul.f32 %v607, 0.70710677
        %v706 = vmul.f32 %v612, 0.70710677
        %v707 = vmul.f32 %v617, 0.70710677
        %v708 = vmul.f32 %v622, 0.70710677
        %v709 = vmul.f32 %v627, 0.70710677
        %v710 = vmul.f32 %v632, 0.70710677
        %v711 = vmul.f32 %v637, 0.70710677
        %v712 = vmul.f32 %v642, 0.70710677
        %v713 = vmul.f32 %v647, 0.70710677
        %v714 = verf.f32.pop %v682
        %v715 = verf.f32.pop %v683
        %v716 = verf.f32.pop %v684
        %v717 = verf.f32.pop %v685
        %v718 = verf.f32.pop %v686
        %v719 = verf.f32.pop %v687
        %v720 = verf.f32.pop %v688
        %v721 = verf.f32.pop %v689
        %v722 = verf.f32.pop %v690
        %v723 = verf.f32.pop %v691
        %v724 = verf.f32.pop %v692
        %v725 = verf.f32.pop %v693
        %v726 = verf.f32.pop %v694
        %v727 = verf.f32.pop %v695
        %v728 = verf.f32.pop %v696
        %v729 = verf.f32.pop %v697
        %v730 = verf.f32.pop %v698
        %v731 = verf.f32.pop %v699
        %v732 = verf.f32.pop %v700
        %v733 = verf.f32.pop %v701
        %v734 = verf.f32.pop %v702
        %v735 = verf.f32.pop %v703
        %v736 = verf.f32.pop %v704
        %v737 = verf.f32.pop %v705
        %v738 = verf.f32.pop %v706
        %v739 = verf.f32.pop %v707
        %v740 = verf.f32.pop %v708
        %v741 = verf.f32.pop %v709
        %v742 = verf.f32.pop %v710
        %v743 = verf.f32.pop %v711
        %v744 = verf.f32.pop %v712
        %v745 = verf.f32.pop %v713
        %v746 = vadd.f32 %v714, 1.0
        %v747 = vadd.f32 %v715, 1.0
        %v748 = vadd.f32 %v716, 1.0
        %v749 = vadd.f32 %v717, 1.0
        %v750 = vadd.f32 %v718, 1.0
        %v751 = vadd.f32 %v719, 1.0
        %v752 = vadd.f32 %v720, 1.0
        %v753 = vadd.f32 %v721, 1.0
        %v754 = vadd.f32 %v722, 1.0
        %v755 = vadd.f32 %v723, 1.0
        %v756 = vadd.f32 %v724, 1.0
        %v757 = vadd.f32 %v725, 1.0
        %v758 = vadd.f32 %v726, 1.0
        %v759 = vadd.f32 %v727, 1.0
        %v760 = vadd.f32 %v728, 1.0
        %v761 = vadd.f32 %v729, 1.0
        %v762 = vadd.f32 %v730, 1.0
        %v763 = vadd.f32 %v731, 1.0
        %v764 = vadd.f32 %v732, 1.0
        %v765 = vadd.f32 %v733, 1.0
        %v766 = vadd.f32 %v734, 1.0
        %v767 = vadd.f32 %v735, 1.0
        %v768 = vadd.f32 %v736, 1.0
        %v769 = vadd.f32 %v737, 1.0
        %v770 = vadd.f32 %v738, 1.0
        %v771 = vadd.f32 %v739, 1.0
        %v772 = vadd.f32 %v740, 1.0
        %v773 = vadd.f32 %v741, 1.0
        %v774 = vadd.f32 %v742, 1.0
        %v775 = vadd.f32 %v743, 1.0
        %v776 = vadd.f32 %v744, 1.0
        %v777 = vadd.f32 %v745, 1.0
        %v778 = vmul.f32 %v650, %v746
        %v779 = vmul.f32 %v651, %v747
        %v780 = vmul.f32 %v652, %v748
        %v781 = vmul.f32 %v653, %v749
        %v782 = vmul.f32 %v654, %v750
        %v783 = vmul.f32 %v655, %v751
        %v784 = vmul.f32 %v656, %v752
        %v785 = vmul.f32 %v657, %v753
        %v786 = vmul.f32 %v658, %v754
        %v787 = vmul.f32 %v659, %v755
        %v788 = vmul.f32 %v660, %v756
        %v789 = vmul.f32 %v661, %v757
        %v790 = vmul.f32 %v662, %v758
        %v791 = vmul.f32 %v663, %v759
        %v792 = vmul.f32 %v664, %v760
        %v793 = vmul.f32 %v665, %v761
        %v794 = vmul.f32 %v666, %v762
        %v795 = vmul.f32 %v667, %v763
        %v796 = vmul.f32 %v668, %v764
        %v797 = vmul.f32 %v669, %v765
        %v798 = vmul.f32 %v670, %v766
        %v799 = vmul.f32 %v671, %v767
        %v800 = vmul.f32 %v672, %v768
        %v801 = vmul.f32 %v673, %v769
        %v802 = vmul.f32 %v674, %v770
        %v803 = vmul.f32 %v675, %v771
        %v804 = vmul.f32 %v676, %v772
        %v805 = vmul.f32 %v677, %v773
        %v806 = vmul.f32 %v678, %v774
        %v807 = vmul.f32 %v679, %v775
        %v808 = vmul.f32 %v680, %v776
        %v809 = vmul.f32 %v681, %v777
        %v810 = vld [vmem:[#allocation2] sm:$0xff]
        %v811 = vld [vmem:[#allocation2 + $0x8] sm:$0xff]
        %v812 = vld [vmem:[#allocation2 + $0x10] sm:$0xff]
        %v813 = vld [vmem:[#allocation2 + $0x18] sm:$0xff]
        %v814 = vld [vmem:[#allocation2 + $0x20] sm:$0xff]
        %v815 = vld [vmem:[#allocation2 + $0x28] sm:$0xff]
        %v816 = vld [vmem:[#allocation2 + $0x30] sm:$0xff]
        %v817 = vld [vmem:[#allocation2 + $0x38] sm:$0xff]
        %v818 = vld [vmem:[#allocation2 + $0x40] sm:$0xff]
        %v819 = vld [vmem:[#allocation2 + $0x48] sm:$0xff]
        %v820 = vld [vmem:[#allocation2 + $0x50] sm:$0xff]
        %v821 = vld [vmem:[#allocation2 + $0x58] sm:$0xff]
        %v822 = vld [vmem:[#allocation2 + $0x60] sm:$0xff]
        %v823 = vld [vmem:[#allocation2 + $0x68] sm:$0xff]
        %v824 = vld [vmem:[#allocation2 + $0x70] sm:$0xff]
        %v825 = vld [vmem:[#allocation2 + $0x78] sm:$0xff]
        %v826 = vld [vmem:[#allocation2 + $0x80] sm:$0xff]
        %v827 = vld [vmem:[#allocation2 + $0x88] sm:$0xff]
        %v828 = vld [vmem:[#allocation2 + $0x90] sm:$0xff]
        %v829 = vld [vmem:[#allocation2 + $0x98] sm:$0xff]
        %v830 = vld [vmem:[#allocation2 + $0xa0] sm:$0xff]
        %v831 = vld [vmem:[#allocation2 + $0xa8] sm:$0xff]
        %v832 = vld [vmem:[#allocation2 + $0xb0] sm:$0xff]
        %v833 = vld [vmem:[#allocation2 + $0xb8] sm:$0xff]
        %v834 = vld [vmem:[#allocation2 + $0xc0] sm:$0xff]
        %v835 = vld [vmem:[#allocation2 + $0xc8] sm:$0xff]
        %v836 = vld [vmem:[#allocation2 + $0xd0] sm:$0xff]
        %v837 = vld [vmem:[#allocation2 + $0xd8] sm:$0xff]
        %v838 = vld [vmem:[#allocation2 + $0xe0] sm:$0xff]
        %v839 = vld [vmem:[#allocation2 + $0xe8] sm:$0xff]
        %v840 = vld [vmem:[#allocation2 + $0xf0] sm:$0xff]
        %v841 = vld [vmem:[#allocation2 + $0xf8] sm:$0xff]
        %v842 = vld [vmem:[#allocation9] sm:$0xff]
        %v843 = vld [vmem:[#allocation9 + $0x8] sm:$0xff]
        %v844 = vld [vmem:[#allocation9 + $0x10] sm:$0xff]
        %v845 = vld [vmem:[#allocation9 + $0x18] sm:$0xff]
        %v846 = vld [vmem:[#allocation9 + $0x20] sm:$0xff]
        %v847 = vld [vmem:[#allocation9 + $0x28] sm:$0xff]
        %v848 = vld [vmem:[#allocation9 + $0x30] sm:$0xff]
        %v849 = vld [vmem:[#allocation9 + $0x38] sm:$0xff]
        %v850 = vld [vmem:[#allocation9 + $0x40] sm:$0xff]
        %v851 = vld [vmem:[#allocation9 + $0x48] sm:$0xff]
        %v852 = vld [vmem:[#allocation9 + $0x50] sm:$0xff]
        %v853 = vld [vmem:[#allocation9 + $0x58] sm:$0xff]
        %v854 = vld [vmem:[#allocation9 + $0x60] sm:$0xff]
        %v855 = vld [vmem:[#allocation9 + $0x68] sm:$0xff]
        %v856 = vld [vmem:[#allocation9 + $0x70] sm:$0xff]
        %v857 = vld [vmem:[#allocation9 + $0x78] sm:$0xff]
        %858 = vmatprep.subr.mxu0 0.0
        %859 = vmatpush1.msra.mxu0 %v842
        %860 = vmatprep.subr.mxu0 0.0
        %861 = vmatpush1.msra.mxu0 %v843
        %862 = vmatprep.subr.mxu0 0.0
        %863 = vmatpush1.msra.mxu0 %v844
        %864 = vmatprep.subr.mxu0 0.0
        %865 = vmatpush1.msra.mxu0 %v845
        %866 = vmatprep.subr.mxu0 0.0
        %867 = vmatpush1.msra.mxu0 %v846
        %868 = vmatprep.subr.mxu0 0.0
        %869 = vmatpush1.msra.mxu0 %v847
        %870 = vmatprep.subr.mxu0 0.0
        %871 = vmatpush1.msra.mxu0 %v848
        %872 = vmatprep.subr.mxu0 0.0
        %873 = vmatpush1.msra.mxu0 %v849
        %874 = vmatprep.subr.mxu0 0.0
        %875 = vmatpush1.msra.mxu0 %v850
        %876 = vmatprep.subr.mxu0 0.0
        %877 = vmatpush1.msra.mxu0 %v851
        %878 = vmatprep.subr.mxu0 0.0
        %879 = vmatpush1.msra.mxu0 %v852
        %880 = vmatprep.subr.mxu0 0.0
        %881 = vmatpush1.msra.mxu0 %v853
        %882 = vmatprep.subr.mxu0 0.0
        %883 = vmatpush1.msra.mxu0 %v854
        %884 = vmatprep.subr.mxu0 0.0
        %885 = vmatpush1.msra.mxu0 %v855
        %886 = vmatprep.subr.mxu0 0.0
        %887 = vmatpush1.msra.mxu0 %v856
        %888 = vmatprep.subr.mxu0 0.0
        %889 = vmatpush1.msra.mxu0 %v857
        %890 = vmatprep.subr.mxu0 0.0
        %891 = vmatpush1.msra.mxu0 0.0
        %892 = vmatprep.subr.mxu0 0.0
        %893 = vmatpush1.msra.mxu0 0.0
        %894 = vmatprep.subr.mxu0 0.0
        %895 = vmatpush1.msra.mxu0 0.0
        %896 = vmatprep.subr.mxu0 0.0
        %897 = vmatpush1.msra.mxu0 0.0
        %898 = vmatprep.subr.mxu0 0.0
        %899 = vmatpush1.msra.mxu0 0.0
        %900 = vmatprep.subr.mxu0 0.0
        %901 = vmatpush1.msra.mxu0 0.0
        %902 = vmatprep.subr.mxu0 0.0
        %903 = vmatpush1.msra.mxu0 0.0
        %904 = vmatprep.subr.mxu0 0.0
        %905 = vmatpush1.msra.mxu0 0.0
        %906 = vmatprep.subr.mxu0 0.0
        %907 = vmatpush1.msra.mxu0 0.0
        %908 = vmatprep.subr.mxu0 0.0
        %909 = vmatpush1.msra.mxu0 0.0
        %910 = vmatprep.subr.mxu0 0.0
        %911 = vmatpush1.msra.mxu0 0.0
        %912 = vmatprep.subr.mxu0 0.0
        %913 = vmatpush1.msra.mxu0 0.0
        %914 = vmatprep.subr.mxu0 0.0
        %915 = vmatpush1.msra.mxu0 0.0
        %916 = vmatprep.subr.mxu0 0.0
        %917 = vmatpush1.msra.mxu0 0.0
        %918 = vmatprep.subr.mxu0 0.0
        %919 = vmatpush1.msra.mxu0 0.0
        %920 = vmatprep.subr.mxu0 0.0
        %921 = vmatpush1.msra.mxu0 0.0
        %922 = vmatprep.mubr.f32.mxu0 0.0
        %923 = vmatmul.mubr.f32.gmra.mrb[0].mxu0 %v778
        %v924 = vpop.f32.mrb[0].mxu0
        %v925 = vadd.f32 0.0, %v924
        %v926 = vpop.f32.mrb[0].mxu0
        %927 = vmatprep.mubr.f32.mxu0 0.0
        %928 = vmatmul.mubr.f32.gmra.mrb[0].mxu0 %v779
        %v929 = vpop.f32.mrb[0].mxu0
        %v930 = vadd.f32 0.0, %v929
        %v931 = vpop.f32.mrb[0].mxu0
        %932 = vmatprep.mubr.f32.mxu0 0.0
        %933 = vmatmul.mubr.f32.gmra.mrb[0].mxu0 %v780
        %v934 = vpop.f32.mrb[0].mxu0
        %v935 = vadd.f32 0.0, %v934
        %v936 = vpop.f32.mrb[0].mxu0
        %937 = vmatprep.mubr.f32.mxu0 0.0
        %938 = vmatmul.mubr.f32.gmra.mrb[0].mxu0 %v781
        %v939 = vpop.f32.mrb[0].mxu0
        %v940 = vadd.f32 0.0, %v939
        %v941 = vpop.f32.mrb[0].mxu0
        %942 = vmatprep.mubr.f32.mxu0 0.0
        %943 = vmatmul.mubr.f32.gmra.mrb[0].mxu0 %v782
        %v944 = vpop.f32.mrb[0].mxu0
        %v945 = vadd.f32 0.0, %v944
        %v946 = vpop.f32.mrb[0].mxu0
        %947 = vmatprep.mubr.f32.mxu0 0.0
        %948 = vmatmul.mubr.f32.gmra.mrb[0].mxu0 %v783
        %v949 = vpop.f32.mrb[0].mxu0
        %v950 = vadd.f32 0.0, %v949
        %v951 = vpop.f32.mrb[0].mxu0
        %952 = vmatprep.mubr.f32.mxu0 0.0
        %953 = vmatmul.mubr.f32.gmra.mrb[0].mxu0 %v784
        %v954 = vpop.f32.mrb[0].mxu0
        %v955 = vadd.f32 0.0, %v954
        %v956 = vpop.f32.mrb[0].mxu0
        %957 = vmatprep.mubr.f32.mxu0 0.0
        %958 = vmatmul.mubr.f32.gmra.mrb[0].mxu0 %v785
        %v959 = vpop.f32.mrb[0].mxu0
        %v960 = vadd.f32 0.0, %v959
        %v961 = vpop.f32.mrb[0].mxu0
        %962 = vmatprep.mubr.f32.mxu0 0.0
        %963 = vmatmul.mubr.f32.gmra.mrb[0].mxu0 %v786
        %v964 = vpop.f32.mrb[0].mxu0
        %v965 = vadd.f32 0.0, %v964
        %v966 = vpop.f32.mrb[0].mxu0
        %967 = vmatprep.mubr.f32.mxu0 0.0
        %968 = vmatmul.mubr.f32.gmra.mrb[0].mxu0 %v787
        %v969 = vpop.f32.mrb[0].mxu0
        %v970 = vadd.f32 0.0, %v969
        %v971 = vpop.f32.mrb[0].mxu0
        %972 = vmatprep.mubr.f32.mxu0 0.0
        %973 = vmatmul.mubr.f32.gmra.mrb[0].mxu0 %v788
        %v974 = vpop.f32.mrb[0].mxu0
        %v975 = vadd.f32 0.0, %v974
        %v976 = vpop.f32.mrb[0].mxu0
        %977 = vmatprep.mubr.f32.mxu0 0.0
        %978 = vmatmul.mubr.f32.gmra.mrb[0].mxu0 %v789
        %v979 = vpop.f32.mrb[0].mxu0
        %v980 = vadd.f32 0.0, %v979
        %v981 = vpop.f32.mrb[0].mxu0
        %982 = vmatprep.mubr.f32.mxu0 0.0
        %983 = vmatmul.mubr.f32.gmra.mrb[0].mxu0 %v790
        %v984 = vpop.f32.mrb[0].mxu0
        %v985 = vadd.f32 0.0, %v984
        %v986 = vpop.f32.mrb[0].mxu0
        %987 = vmatprep.mubr.f32.mxu0 0.0
        %988 = vmatmul.mubr.f32.gmra.mrb[0].mxu0 %v791
        %v989 = vpop.f32.mrb[0].mxu0
        %v990 = vadd.f32 0.0, %v989
        %v991 = vpop.f32.mrb[0].mxu0
        %992 = vmatprep.mubr.f32.mxu0 0.0
        %993 = vmatmul.mubr.f32.gmra.mrb[0].mxu0 %v792
        %v994 = vpop.f32.mrb[0].mxu0
        %v995 = vadd.f32 0.0, %v994
        %v996 = vpop.f32.mrb[0].mxu0
        %997 = vmatprep.mubr.f32.mxu0 0.0
        %998 = vmatmul.mubr.f32.gmra.mrb[0].mxu0 %v793
        %v999 = vpop.f32.mrb[0].mxu0
        %v1000 = vadd.f32 0.0, %v999
        %v1001 = vpop.f32.mrb[0].mxu0
        %1002 = vmatprep.mubr.f32.mxu0 0.0
        %1003 = vmatmul.mubr.f32.gmra.mrb[0].mxu0 %v794
        %v1004 = vpop.f32.mrb[0].mxu0
        %v1005 = vadd.f32 0.0, %v1004
        %v1006 = vpop.f32.mrb[0].mxu0
        %1007 = vmatprep.mubr.f32.mxu0 0.0
        %1008 = vmatmul.mubr.f32.gmra.mrb[0].mxu0 %v795
        %v1009 = vpop.f32.mrb[0].mxu0
        %v1010 = vadd.f32 0.0, %v1009
        %v1011 = vpop.f32.mrb[0].mxu0
        %1012 = vmatprep.mubr.f32.mxu0 0.0
        %1013 = vmatmul.mubr.f32.gmra.mrb[0].mxu0 %v796
        %v1014 = vpop.f32.mrb[0].mxu0
        %v1015 = vadd.f32 0.0, %v1014
        %v1016 = vpop.f32.mrb[0].mxu0
        %1017 = vmatprep.mubr.f32.mxu0 0.0
        %1018 = vmatmul.mubr.f32.gmra.mrb[0].mxu0 %v797
        %v1019 = vpop.f32.mrb[0].mxu0
        %v1020 = vadd.f32 0.0, %v1019
        %v1021 = vpop.f32.mrb[0].mxu0
        %1022 = vmatprep.mubr.f32.mxu0 0.0
        %1023 = vmatmul.mubr.f32.gmra.mrb[0].mxu0 %v798
        %v1024 = vpop.f32.mrb[0].mxu0
        %v1025 = vadd.f32 0.0, %v1024
        %v1026 = vpop.f32.mrb[0].mxu0
        %1027 = vmatprep.mubr.f32.mxu0 0.0
        %1028 = vmatmul.mubr.f32.gmra.mrb[0].mxu0 %v799
        %v1029 = vpop.f32.mrb[0].mxu0
        %v1030 = vadd.f32 0.0, %v1029
        %v1031 = vpop.f32.mrb[0].mxu0
        %1032 = vmatprep.mubr.f32.mxu0 0.0
        %1033 = vmatmul.mubr.f32.gmra.mrb[0].mxu0 %v800
        %v1034 = vpop.f32.mrb[0].mxu0
        %v1035 = vadd.f32 0.0, %v1034
        %v1036 = vpop.f32.mrb[0].mxu0
        %1037 = vmatprep.mubr.f32.mxu0 0.0
        %1038 = vmatmul.mubr.f32.gmra.mrb[0].mxu0 %v801
        %v1039 = vpop.f32.mrb[0].mxu0
        %v1040 = vadd.f32 0.0, %v1039
        %v1041 = vpop.f32.mrb[0].mxu0
        %1042 = vmatprep.mubr.f32.mxu0 0.0
        %1043 = vmatmul.mubr.f32.gmra.mrb[0].mxu0 %v802
        %v1044 = vpop.f32.mrb[0].mxu0
        %v1045 = vadd.f32 0.0, %v1044
        %v1046 = vpop.f32.mrb[0].mxu0
        %1047 = vmatprep.mubr.f32.mxu0 0.0
        %1048 = vmatmul.mubr.f32.gmra.mrb[0].mxu0 %v803
        %v1049 = vpop.f32.mrb[0].mxu0
        %v1050 = vadd.f32 0.0, %v1049
        %v1051 = vpop.f32.mrb[0].mxu0
        %1052 = vmatprep.mubr.f32.mxu0 0.0
        %1053 = vmatmul.mubr.f32.gmra.mrb[0].mxu0 %v804
        %v1054 = vpop.f32.mrb[0].mxu0
        %v1055 = vadd.f32 0.0, %v1054
        %v1056 = vpop.f32.mrb[0].mxu0
        %1057 = vmatprep.mubr.f32.mxu0 0.0
        %1058 = vmatmul.mubr.f32.gmra.mrb[0].mxu0 %v805
        %v1059 = vpop.f32.mrb[0].mxu0
        %v1060 = vadd.f32 0.0, %v1059
        %v1061 = vpop.f32.mrb[0].mxu0
        %1062 = vmatprep.mubr.f32.mxu0 0.0
        %1063 = vmatmul.mubr.f32.gmra.mrb[0].mxu0 %v806
        %v1064 = vpop.f32.mrb[0].mxu0
        %v1065 = vadd.f32 0.0, %v1064
        %v1066 = vpop.f32.mrb[0].mxu0
        %1067 = vmatprep.mubr.f32.mxu0 0.0
        %1068 = vmatmul.mubr.f32.gmra.mrb[0].mxu0 %v807
        %v1069 = vpop.f32.mrb[0].mxu0
        %v1070 = vadd.f32 0.0, %v1069
        %v1071 = vpop.f32.mrb[0].mxu0
        %1072 = vmatprep.mubr.f32.mxu0 0.0
        %1073 = vmatmul.mubr.f32.gmra.mrb[0].mxu0 %v808
        %v1074 = vpop.f32.mrb[0].mxu0
        %v1075 = vadd.f32 0.0, %v1074
        %v1076 = vpop.f32.mrb[0].mxu0
        %1077 = vmatprep.mubr.f32.mxu0 0.0
        %1078 = vmatmul.mubr.f32.gmra.mrb[0].mxu0 %v809
        %v1079 = vpop.f32.mrb[0].mxu0
        %v1080 = vadd.f32 0.0, %v1079
        %v1081 = vpop.f32.mrb[0].mxu0
        %1082 = vdwg.mxu0
        %v1083 = vadd.f32 %v810, %v925
        %v1084 = vadd.f32 %v811, %v930
        %v1085 = vadd.f32 %v812, %v935
        %v1086 = vadd.f32 %v813, %v940
        %v1087 = vadd.f32 %v814, %v945
        %v1088 = vadd.f32 %v815, %v950
        %v1089 = vadd.f32 %v816, %v955
        %v1090 = vadd.f32 %v817, %v960
        %v1091 = vadd.f32 %v818, %v965
        %v1092 = vadd.f32 %v819, %v970
        %v1093 = vadd.f32 %v820, %v975
        %v1094 = vadd.f32 %v821, %v980
        %v1095 = vadd.f32 %v822, %v985
        %v1096 = vadd.f32 %v823, %v990
        %v1097 = vadd.f32 %v824, %v995
        %v1098 = vadd.f32 %v825, %v1000
        %v1099 = vadd.f32 %v826, %v1005
        %v1100 = vadd.f32 %v827, %v1010
        %v1101 = vadd.f32 %v828, %v1015
        %v1102 = vadd.f32 %v829, %v1020
        %v1103 = vadd.f32 %v830, %v1025
        %v1104 = vadd.f32 %v831, %v1030
        %v1105 = vadd.f32 %v832, %v1035
        %v1106 = vadd.f32 %v833, %v1040
        %v1107 = vadd.f32 %v834, %v1045
        %v1108 = vadd.f32 %v835, %v1050
        %v1109 = vadd.f32 %v836, %v1055
        %v1110 = vadd.f32 %v837, %v1060
        %v1111 = vadd.f32 %v838, %v1065
        %v1112 = vadd.f32 %v839, %v1070
        %v1113 = vadd.f32 %v840, %v1075
        %v1114 = vadd.f32 %v841, %v1080
        %1115 = vst [vmem:[#allocation2] sm:$0xff] %v1083
        %1116 = vst [vmem:[#allocation2 + $0x8] sm:$0xff] %v1084
        %1117 = vst [vmem:[#allocation2 + $0x10] sm:$0xff] %v1085
        %1118 = vst [vmem:[#allocation2 + $0x18] sm:$0xff] %v1086
        %1119 = vst [vmem:[#allocation2 + $0x20] sm:$0xff] %v1087
        %1120 = vst [vmem:[#allocation2 + $0x28] sm:$0xff] %v1088
        %1121 = vst [vmem:[#allocation2 + $0x30] sm:$0xff] %v1089
        %1122 = vst [vmem:[#allocation2 + $0x38] sm:$0xff] %v1090
        %1123 = vst [vmem:[#allocation2 + $0x40] sm:$0xff] %v1091
        %1124 = vst [vmem:[#allocation2 + $0x48] sm:$0xff] %v1092
        %1125 = vst [vmem:[#allocation2 + $0x50] sm:$0xff] %v1093
        %1126 = vst [vmem:[#allocation2 + $0x58] sm:$0xff] %v1094
        %1127 = vst [vmem:[#allocation2 + $0x60] sm:$0xff] %v1095
        %1128 = vst [vmem:[#allocation2 + $0x68] sm:$0xff] %v1096
        %1129 = vst [vmem:[#allocation2 + $0x70] sm:$0xff] %v1097
        %1130 = vst [vmem:[#allocation2 + $0x78] sm:$0xff] %v1098
        %1131 = vst [vmem:[#allocation2 + $0x80] sm:$0xff] %v1099
        %1132 = vst [vmem:[#allocation2 + $0x88] sm:$0xff] %v1100
        %1133 = vst [vmem:[#allocation2 + $0x90] sm:$0xff] %v1101
        %1134 = vst [vmem:[#allocation2 + $0x98] sm:$0xff] %v1102
        %1135 = vst [vmem:[#allocation2 + $0xa0] sm:$0xff] %v1103
        %1136 = vst [vmem:[#allocation2 + $0xa8] sm:$0xff] %v1104
        %1137 = vst [vmem:[#allocation2 + $0xb0] sm:$0xff] %v1105
        %1138 = vst [vmem:[#allocation2 + $0xb8] sm:$0xff] %v1106
        %1139 = vst [vmem:[#allocation2 + $0xc0] sm:$0xff] %v1107
        %1140 = vst [vmem:[#allocation2 + $0xc8] sm:$0xff] %v1108
        %1141 = vst [vmem:[#allocation2 + $0xd0] sm:$0xff] %v1109
        %1142 = vst [vmem:[#allocation2 + $0xd8] sm:$0xff] %v1110
        %1143 = vst [vmem:[#allocation2 + $0xe0] sm:$0xff] %v1111
        %1144 = vst [vmem:[#allocation2 + $0xe8] sm:$0xff] %v1112
        %1145 = vst [vmem:[#allocation2 + $0xf0] sm:$0xff] %v1113
        %1146 = vst [vmem:[#allocation2 + $0xf8] sm:$0xff] %v1114
        // Predicated region
        $region65: #{_lambda_.5} parent=39 // pred_check
          %p1147 = pneg %p334
        $region66: #{_lambda_.5} parent=39 // pred_check_branch
          %1149 = sbr.rel (%p1147) target = $region68
        $region67: #{_lambda_.5} parent=39 // pred_region
          %v1150 = vld [vmem:[#allocation2] sm:$0xff]
          %v1151 = vld [vmem:[#allocation2 + $0x8] sm:$0xff]
          %v1152 = vld [vmem:[#allocation2 + $0x10] sm:$0xff]
          %v1153 = vld [vmem:[#allocation2 + $0x18] sm:$0xff]
          %v1154 = vld [vmem:[#allocation2 + $0x20] sm:$0xff]
          %v1155 = vld [vmem:[#allocation2 + $0x28] sm:$0xff]
          %v1156 = vld [vmem:[#allocation2 + $0x30] sm:$0xff]
          %v1157 = vld [vmem:[#allocation2 + $0x38] sm:$0xff]
          %v1158 = vld [vmem:[#allocation2 + $0x40] sm:$0xff]
          %v1159 = vld [vmem:[#allocation2 + $0x48] sm:$0xff]
          %v1160 = vld [vmem:[#allocation2 + $0x50] sm:$0xff]
          %v1161 = vld [vmem:[#allocation2 + $0x58] sm:$0xff]
          %v1162 = vld [vmem:[#allocation2 + $0x60] sm:$0xff]
          %v1163 = vld [vmem:[#allocation2 + $0x68] sm:$0xff]
          %v1164 = vld [vmem:[#allocation2 + $0x70] sm:$0xff]
          %v1165 = vld [vmem:[#allocation2 + $0x78] sm:$0xff]
          %v1166 = vld [vmem:[#allocation2 + $0x80] sm:$0xff]
          %v1167 = vld [vmem:[#allocation2 + $0x88] sm:$0xff]
          %v1168 = vld [vmem:[#allocation2 + $0x90] sm:$0xff]
          %v1169 = vld [vmem:[#allocation2 + $0x98] sm:$0xff]
          %v1170 = vld [vmem:[#allocation2 + $0xa0] sm:$0xff]
          %v1171 = vld [vmem:[#allocation2 + $0xa8] sm:$0xff]
          %v1172 = vld [vmem:[#allocation2 + $0xb0] sm:$0xff]
          %v1173 = vld [vmem:[#allocation2 + $0xb8] sm:$0xff]
          %v1174 = vld [vmem:[#allocation2 + $0xc0] sm:$0xff]
          %v1175 = vld [vmem:[#allocation2 + $0xc8] sm:$0xff]
          %v1176 = vld [vmem:[#allocation2 + $0xd0] sm:$0xff]
          %v1177 = vld [vmem:[#allocation2 + $0xd8] sm:$0xff]
          %v1178 = vld [vmem:[#allocation2 + $0xe0] sm:$0xff]
          %v1179 = vld [vmem:[#allocation2 + $0xe8] sm:$0xff]
          %v1180 = vld [vmem:[#allocation2 + $0xf0] sm:$0xff]
          %v1181 = vld [vmem:[#allocation2 + $0xf8] sm:$0xff]
          %v1182 = vld [vmem:[#allocation11] sm:$0x1]
          %v1184 = vlaneseq
          %v1185 = vshrl.u32 %v1184, 7
          %v1186 = vsub.s32 0, %v1185
          %v1187 = vrot.slane %v1182, %v1186
          %v1189 = vadd.f32 %v1150, %v1187
          %v1190 = vadd.f32 %v1151, %v1187
          %v1191 = vadd.f32 %v1152, %v1187
          %v1192 = vadd.f32 %v1153, %v1187
          %v1193 = vadd.f32 %v1154, %v1187
          %v1194 = vadd.f32 %v1155, %v1187
          %v1195 = vadd.f32 %v1156, %v1187
          %v1196 = vadd.f32 %v1157, %v1187
          %v1197 = vadd.f32 %v1158, %v1187
          %v1198 = vadd.f32 %v1159, %v1187
          %v1199 = vadd.f32 %v1160, %v1187
          %v1200 = vadd.f32 %v1161, %v1187
          %v1201 = vadd.f32 %v1162, %v1187
          %v1202 = vadd.f32 %v1163, %v1187
          %v1203 = vadd.f32 %v1164, %v1187
          %v1204 = vadd.f32 %v1165, %v1187
          %v1205 = vadd.f32 %v1166, %v1187
          %v1206 = vadd.f32 %v1167, %v1187
          %v1207 = vadd.f32 %v1168, %v1187
          %v1208 = vadd.f32 %v1169, %v1187
          %v1209 = vadd.f32 %v1170, %v1187
          %v1210 = vadd.f32 %v1171, %v1187
          %v1211 = vadd.f32 %v1172, %v1187
          %v1212 = vadd.f32 %v1173, %v1187
          %v1213 = vadd.f32 %v1174, %v1187
          %v1214 = vadd.f32 %v1175, %v1187
          %v1215 = vadd.f32 %v1176, %v1187
          %v1216 = vadd.f32 %v1177, %v1187
          %v1217 = vadd.f32 %v1178, %v1187
          %v1218 = vadd.f32 %v1179, %v1187
          %v1219 = vadd.f32 %v1180, %v1187
          %v1220 = vadd.f32 %v1181, %v1187
          %1221 = vst [vmem:[%s330] sm:$0xff] %v1189
          %1222 = vst [vmem:[%s330 + $0x8] sm:$0xff] %v1190
          %1223 = vst [vmem:[%s330 + $0x10] sm:$0xff] %v1191
          %1224 = vst [vmem:[%s330 + $0x18] sm:$0xff] %v1192
          %1225 = vst [vmem:[%s330 + $0x20] sm:$0xff] %v1193
          %1226 = vst [vmem:[%s330 + $0x28] sm:$0xff] %v1194
          %1227 = vst [vmem:[%s330 + $0x30] sm:$0xff] %v1195
          %1228 = vst [vmem:[%s330 + $0x38] sm:$0xff] %v1196
          %1229 = vst [vmem:[%s330 + $0x40] sm:$0xff] %v1197
          %1230 = vst [vmem:[%s330 + $0x48] sm:$0xff] %v1198
          %1231 = vst [vmem:[%s330 + $0x50] sm:$0xff] %v1199
          %1232 = vst [vmem:[%s330 + $0x58] sm:$0xff] %v1200
          %1233 = vst [vmem:[%s330 + $0x60] sm:$0xff] %v1201
          %1234 = vst [vmem:[%s330 + $0x68] sm:$0xff] %v1202
          %1235 = vst [vmem:[%s330 + $0x70] sm:$0xff] %v1203
          %1236 = vst [vmem:[%s330 + $0x78] sm:$0xff] %v1204
          %1237 = vst [vmem:[%s330 + $0x80] sm:$0xff] %v1205
          %1238 = vst [vmem:[%s330 + $0x88] sm:$0xff] %v1206
          %1239 = vst [vmem:[%s330 + $0x90] sm:$0xff] %v1207
          %1240 = vst [vmem:[%s330 + $0x98] sm:$0xff] %v1208
          %1241 = vst [vmem:[%s330 + $0xa0] sm:$0xff] %v1209
          %1242 = vst [vmem:[%s330 + $0xa8] sm:$0xff] %v1210
          %1243 = vst [vmem:[%s330 + $0xb0] sm:$0xff] %v1211
          %1244 = vst [vmem:[%s330 + $0xb8] sm:$0xff] %v1212
          %1245 = vst [vmem:[%s330 + $0xc0] sm:$0xff] %v1213
          %1246 = vst [vmem:[%s330 + $0xc8] sm:$0xff] %v1214
          %1247 = vst [vmem:[%s330 + $0xd0] sm:$0xff] %v1215
          %1248 = vst [vmem:[%s330 + $0xd8] sm:$0xff] %v1216
          %1249 = vst [vmem:[%s330 + $0xe0] sm:$0xff] %v1217
          %1250 = vst [vmem:[%s330 + $0xe8] sm:$0xff] %v1218
          %1251 = vst [vmem:[%s330 + $0xf0] sm:$0xff] %v1219
          %1252 = vst [vmem:[%s330 + $0xf8] sm:$0xff] %v1220
        $region68: #{_lambda_.5} parent=39 // pred_fallthru
          _
        %s1253 = sand.u32 %s169, 1
        %s1254 = scalar_lea.sflag [#allocation5], %s1253
        %s1255 = sand.u32 %s169, 1
        %s1256 = smul.addr %s1255, 256
        %s1257 = scalar_lea.vmem [#allocation12], %s1256
        // Predicated region
        $region69: #{_lambda_.5} parent=39 // pred_check
          %p1258 = pneg %p179
        $region70: #{_lambda_.5} parent=39 // pred_check_branch
          %1260 = sbr.rel (%p1258) target = $region72
        $region71: #{_lambda_.5} parent=39 // pred_region
          %s1261 = smul.u32 32, %s28
          %s1263 = ssub.s32 4096, 4096
          %1264 = vsyncadd %s1254, %s1263
          %s1265 = smul.addr %s1261, 128
          %s1266 = scalar_lea.hbm %s5, %s1265
          %s1267 = sshll.u32 %s1257, 4
          %s1268 = int_to_ptr.vmem [resolvable:$true] %s1267
          %1273 = dma.vmem_to_hbm [thread:$0]  %s1268, 4096, %s1266, %s1254, 128, 128, 8
        $region72: #{_lambda_.5} parent=39 // pred_fallthru
          _
      $region40: #{_lambda_.5} parent=5 // pred_fallthru
        _
      %p1274 = scmp.le.s32.totalorder 2, %s19
      // Predicated region
      $region73: #{_lambda_.5} parent=5 // pred_check
        %p1275 = pneg %p1274
      $region74: #{_lambda_.5} parent=5 // pred_check_branch
        %1277 = sbr.rel (%p1275) target = $region76
      $region75: #{_lambda_.5} parent=5 // pred_region
        %s1278 = ssub.s32 %s19, 2
        // Predicated region
        $region77: #{_lambda_.5} parent=75 // pred_check
          %p1279 = pneg %p185
        $region78: #{_lambda_.5} parent=75 // pred_check_branch
          %1281 = sbr.rel (%p1279) target = $region80
        $region79: #{_lambda_.5} parent=75 // pred_region
          %s1282 = sand.u32 %s170, 1
          %s1283 = scalar_lea.sflag [#allocation5], %s1282
          %s1284 = sand.u32 %s170, 1
          %s1285 = smul.addr %s1284, 256
          %s1286 = scalar_lea.vmem [#allocation12], %s1285
          %1287 = dma.done %s1283, 4096
        $region80: #{_lambda_.5} parent=75 // pred_fallthru
          _
      $region76: #{_lambda_.5} parent=5 // pred_fallthru
        _
    $region6: #{_lambda_.5} parent=1 // loop_footer
      %s23 = sadd.s32 1, %s19
    $region7: #{_lambda_.5} parent=1 // loop_footer_branch
      %18 = sbr.rel target = $region3
    $region8: #{_lambda_.5} parent=1 // loop_exit
      _
    %1288 = vsyncpa [#allocation4], 1
    %s1289 = scalar_lea.sflag [#allocation4], 1
    %1290 = vsyncpa %s1289, 1
    %1291 = vsyncpa [#allocation7], 1
    %1292 = vsyncpa [#allocation10], 1
    %1293 = vsyncpa [#allocation5], 1
    %s1294 = scalar_lea.sflag [#allocation5], 1
    %1295 = vsyncpa %s1294, 1

</llo_original>
